<compile_context>
chip_gen: v6e
topology: v6e:2x2x1
jax: 0.10.0
libtpu: 0.0.40
codegen_flags: <defaults>
</compile_context>

<pallas_src>
import jax
import jax.numpy as jnp
from jax import lax
from jax.experimental import pallas as pl
from jax.experimental.pallas import tpu as pltpu


_LANES = 128  # channel-chunk width for the lanes->sublanes gate relayout


def se_gate_kernel(se_ref, w_ref, b_ref, x_ref, o_ref, gate_col_ref):
    """One C_out block.

    se_ref:       [1, C_in]        squeeze-excite vector
    w_ref:        [CB, C_in]       1x1-conv weights for this block
    b_ref:        [1, CB]          bias (lane-dense)
    x_ref:        [CB, HW]         feature map block (channels on sublanes)
    o_ref:        [CB, HW]         output block
    gate_col_ref: [CB, 1] (VMEM)   scratch: gate in column (sublane) layout
    """
    cb = o_ref.shape[0]

    # ---- gate, computed entirely lane-dense --------------------------------
    # z = se @ W^T : [1, CB]  (trans-B contraction; MXU-native, no W transpose
    # materialized in HBM)
    z = lax.dot_general(
        se_ref[...], w_ref[...],
        dimension_numbers=(((1,), (1,)), ((), ())),
        preferred_element_type=jnp.float32,
    )
    # bias add + sigmoid on the lane-dense [1, CB] view: ~CB/128 vregs of
    # EUP work instead of CB sparse pushes.
    gate_row = jax.nn.sigmoid(z + b_ref[...])                 # [1, CB], f32

    # ---- relayout lanes -> sublanes -----------------------------------------
    # gate_col[c, 0] = gate_row[0, c].  Done 128 channels at a time with an
    # identity matvec on the (otherwise idle) MXU: exact (adds only 0 terms),
    # tiny (6 KB total), and uses only guaranteed-to-lower ops.
    rows = lax.broadcasted_iota(jnp.int32, (_LANES, _LANES), 0)
    cols = lax.broadcasted_iota(jnp.int32, (_LANES, _LANES), 1)
    ident = (rows == cols).astype(jnp.float32)                # [128, 128]
    for i in range(cb // _LANES):                             # static, unrolled
        chunk = gate_row[:, i * _LANES:(i + 1) * _LANES]      # [1, 128]
        gate_col_ref[pl.ds(i * _LANES, _LANES), :] = lax.dot_general(
            ident, chunk,
            dimension_numbers=(((1,), (1,)), ((), ())),
            preferred_element_type=jnp.float32,
        )                                                      # [128, 1]

    # ---- per-channel broadcast multiply over the HW lanes -------------------
    o_ref[...] = (x_ref[...] * gate_col_ref[...]).astype(o_ref.dtype)


def _num_cout_blocks(c_out):
    """2 blocks on dual-TensorCore chips (v7x) to use both cores; else 1."""
    try:
        kind = jax.devices()[0].device_kind.lower()
    except Exception:
        return 1
    if ("v7" in kind or "7x" in kind) and c_out % (2 * _LANES) == 0:
        return 2
    return 1


def se_gate(se, w, b, x, *, num_blocks=None):
    """se: [1,C_in], w: [C_out,C_in], b: [1,C_out], x: [C_out,HW] -> [C_out,HW]."""
    c_out, hw = x.shape
    c_in = se.shape[1]
    if num_blocks is None:
        num_blocks = _num_cout_blocks(c_out)
    cb = c_out // num_blocks
    assert cb * num_blocks == c_out and cb % _LANES == 0, (c_out, num_blocks)

    itemsize = jnp.dtype(x.dtype).itemsize
    cost = pl.CostEstimate(
        flops=2 * c_out * c_in + c_out * hw,
        transcendentals=c_out,
        bytes_accessed=(se.size + w.size + b.size + 2 * x.size) * itemsize,
    )

    return pl.pallas_call(
        se_gate_kernel,
        out_shape=jax.ShapeDtypeStruct((c_out, hw), x.dtype),
        grid=(num_blocks,),
        in_specs=[
            pl.BlockSpec((1, c_in), lambda i: (0, 0)),    # se: shared by all blocks
            pl.BlockSpec((cb, c_in), lambda i: (i, 0)),   # W block
            pl.BlockSpec((1, cb), lambda i: (0, i)),      # bias block (lane-dense)
            pl.BlockSpec((cb, hw), lambda i: (i, 0)),     # x block
        ],
        out_specs=pl.BlockSpec((cb, hw), lambda i: (i, 0)),
        scratch_shapes=[pltpu.VMEM((cb, 1), jnp.float32)],
        compiler_params=pltpu.CompilerParams(
            dimension_semantics=("parallel",)),
        cost_estimate=cost,
    )(se, w, b, x)


def forward(x404, x401, conv_w, conv_b):
    """Replicates M.forward in native NCHW layout (all reshapes are free).

    x404:   [N, C_in, 1, 1]
    x401:   [N, C_out, H, W]
    conv_w: [C_out, C_in, 1, 1]
    conv_b: [C_out]
    returns [N, C_out, H, W]
    """
    n, c_in, _, _ = x404.shape
    _, c_out, h, w = x401.shape
    assert n == 1, "this synthetic module uses batch=1"

    se = x404.reshape(1, c_in)             # [1, C_in]
    wmat = conv_w.reshape(c_out, c_in)     # [C_out, C_in]  (no transpose)
    brow = conv_b.reshape(1, c_out)        # [1, C_out]     (lane-dense bias)
    x = x401.reshape(c_out, h * w)         # [C_out, HW]    (free for N=1)

    out = se_gate(se, wmat, brow, x)       # [C_out, HW]
    return out.reshape(1, c_out, h, w)     # back to NCHW, free reshape


if __name__ == "__main__":
    key = jax.random.PRNGKey(0)
    k1, k2, k3, k4 = jax.random.split(key, 4)

    # Shapes fixed by the module: Conv2d(64, 1536, kernel_size=1), 7x7 features.
    C_IN, C_OUT, H, W = 64, 1536, 7, 7

    x404 = jax.random.normal(k1, (1, C_IN, 1, 1), dtype=jnp.float32)
    x401 = jax.random.normal(k2, (1, C_OUT, H, W), dtype=jnp.float32)
    conv_w = jax.random.normal(k3, (C_OUT, C_IN, 1, 1), dtype=jnp.float32) * 0.05
    conv_b = jax.random.normal(k4, (C_OUT,), dtype=jnp.float32) * 0.05

    out = forward(x404, x401, conv_w, conv_b)
    jax.block_until_ready(out)

    # Pure-JAX reference (matches the PyTorch module's forward).
    ref_gate = jax.nn.sigmoid(
        x404.reshape(1, C_IN) @ conv_w.reshape(C_OUT, C_IN).T + conv_b
    ).reshape(1, C_OUT, 1, 1)
    ref = ref_gate * x401

    assert out.shape == (1, C_OUT, H, W)
    assert jnp.allclose(out, ref, atol=1e-5, rtol=1e-5)

    print("KERNEL_OK")
</pallas_src>

<mosaic_0001>
module attributes {stable_mosaic.version = 11 : i64} {
  func.func @se_gate_kernel(%arg0: i32, %arg1: memref<1x64xf32, #tpu.memory_space<vmem>>, %arg2: memref<1536x64xf32, #tpu.memory_space<vmem>>, %arg3: memref<1x1536xf32, #tpu.memory_space<vmem>>, %arg4: memref<1536x49xf32, #tpu.memory_space<vmem>>, %arg5: memref<1536x49xf32, #tpu.memory_space<vmem>>, %arg6: memref<1536x1xf32, #tpu.memory_space<vmem>>) attributes {dimension_semantics = [#tpu.dimension_semantics<parallel>], iteration_bounds = array<i64: 1>, scalar_prefetch = 0 : i64, scratch_operands = 1 : i64, tpu.core_type = #tpu.core_type<tc>, window_params = [{pipeline_mode = #tpu.pipeline_mode<synchronous>, transform_indices = @transform_0, window_bounds = array<i64: 1, 64>}, {transform_indices = @transform_1, window_bounds = array<i64: 1536, 64>}, {transform_indices = @transform_2, window_bounds = array<i64: 1, 1536>}, {transform_indices = @transform_3, window_bounds = array<i64: 1536, 49>}, {transform_indices = @transform_4, window_bounds = array<i64: 1536, 49>}]} {
    %c0 = arith.constant 0 : index
    %c0_0 = arith.constant 0 : index
    %0 = vector.load %arg1[%c0, %c0_0] : memref<1x64xf32, #tpu.memory_space<vmem>>, vector<1x64xf32>
    %c0_1 = arith.constant 0 : index
    %c0_2 = arith.constant 0 : index
    %1 = vector.load %arg2[%c0_1, %c0_2] : memref<1536x64xf32, #tpu.memory_space<vmem>>, vector<1536x64xf32>
    %cst = arith.constant dense<0.000000e+00> : vector<1x1536xf32>
    %2 = tpu.matmul %0, %1, %cst {dimension_numbers = #tpu.dot_dimension_numbers<[1], [1], [0], [0], [0, 0, 1, 0], [], []>} : vector<1x64xf32>, vector<1536x64xf32>, vector<1x1536xf32> -> vector<1x1536xf32>
    %c0_3 = arith.constant 0 : index
    %c0_4 = arith.constant 0 : index
    %3 = vector.load %arg3[%c0_3, %c0_4] : memref<1x1536xf32, #tpu.memory_space<vmem>>, vector<1x1536xf32>
    %4 = arith.addf %2, %3 : vector<1x1536xf32>
    %5 = arith.negf %4 : vector<1x1536xf32>
    %6 = math.exp %5 : vector<1x1536xf32>
    %cst_5 = arith.constant 1.000000e+00 : f32
    %7 = vector.broadcast %cst_5 : f32 to vector<1x1536xf32>
    %8 = arith.addf %7, %6 : vector<1x1536xf32>
    %9 = arith.divf %7, %8 : vector<1x1536xf32>
    %10 = tpu.iota {dimensions = array<i32: 0>} : vector<128x128xi32>
    %11 = tpu.iota {dimensions = array<i32: 1>} : vector<128x128xi32>
    %12 = arith.cmpi eq, %10, %11 : vector<128x128xi32>
    %13 = arith.extui %12 : vector<128x128xi1> to vector<128x128xi32>
    %14 = arith.sitofp %13 : vector<128x128xi32> to vector<128x128xf32>
    %15 = vector.extract_strided_slice %9 {offsets = [0, 0], sizes = [1, 128], strides = [1, 1]} : vector<1x1536xf32> to vector<1x128xf32>
    %cst_6 = arith.constant dense<0.000000e+00> : vector<128x1xf32>
    %16 = tpu.matmul %14, %15, %cst_6 {dimension_numbers = #tpu.dot_dimension_numbers<[1], [1], [0], [0], [0, 0, 1, 0], [], []>} : vector<128x128xf32>, vector<1x128xf32>, vector<128x1xf32> -> vector<128x1xf32>
    %c0_7 = arith.constant 0 : index
    %c0_8 = arith.constant 0 : index
    %17 = vector.load %arg6[%c0_7, %c0_8] : memref<1536x1xf32, #tpu.memory_space<vmem>>, vector<128x1xf32>
    tpu.vector_store %arg6[%c0_7, %c0_8], %16 {strides = array<i32>} : memref<1536x1xf32, #tpu.memory_space<vmem>>, vector<128x1xf32>,
    %18 = vector.extract_strided_slice %9 {offsets = [0, 128], sizes = [1, 128], strides = [1, 1]} : vector<1x1536xf32> to vector<1x128xf32>
    %cst_9 = arith.constant dense<0.000000e+00> : vector<128x1xf32>
    %19 = tpu.matmul %14, %18, %cst_9 {dimension_numbers = #tpu.dot_dimension_numbers<[1], [1], [0], [0], [0, 0, 1, 0], [], []>} : vector<128x128xf32>, vector<1x128xf32>, vector<128x1xf32> -> vector<128x1xf32>
    %c128 = arith.constant 128 : index
    %c0_10 = arith.constant 0 : index
    %20 = vector.load %arg6[%c128, %c0_10] : memref<1536x1xf32, #tpu.memory_space<vmem>>, vector<128x1xf32>
    tpu.vector_store %arg6[%c128, %c0_10], %19 {strides = array<i32>} : memref<1536x1xf32, #tpu.memory_space<vmem>>, vector<128x1xf32>,
    %21 = vector.extract_strided_slice %9 {offsets = [0, 256], sizes = [1, 128], strides = [1, 1]} : vector<1x1536xf32> to vector<1x128xf32>
    %cst_11 = arith.constant dense<0.000000e+00> : vector<128x1xf32>
    %22 = tpu.matmul %14, %21, %cst_11 {dimension_numbers = #tpu.dot_dimension_numbers<[1], [1], [0], [0], [0, 0, 1, 0], [], []>} : vector<128x128xf32>, vector<1x128xf32>, vector<128x1xf32> -> vector<128x1xf32>
    %c256 = arith.constant 256 : index
    %c0_12 = arith.constant 0 : index
    %23 = vector.load %arg6[%c256, %c0_12] : memref<1536x1xf32, #tpu.memory_space<vmem>>, vector<128x1xf32>
    tpu.vector_store %arg6[%c256, %c0_12], %22 {strides = array<i32>} : memref<1536x1xf32, #tpu.memory_space<vmem>>, vector<128x1xf32>,
    %24 = vector.extract_strided_slice %9 {offsets = [0, 384], sizes = [1, 128], strides = [1, 1]} : vector<1x1536xf32> to vector<1x128xf32>
    %cst_13 = arith.constant dense<0.000000e+00> : vector<128x1xf32>
    %25 = tpu.matmul %14, %24, %cst_13 {dimension_numbers = #tpu.dot_dimension_numbers<[1], [1], [0], [0], [0, 0, 1, 0], [], []>} : vector<128x128xf32>, vector<1x128xf32>, vector<128x1xf32> -> vector<128x1xf32>
    %c384 = arith.constant 384 : index
    %c0_14 = arith.constant 0 : index
    %26 = vector.load %arg6[%c384, %c0_14] : memref<1536x1xf32, #tpu.memory_space<vmem>>, vector<128x1xf32>
    tpu.vector_store %arg6[%c384, %c0_14], %25 {strides = array<i32>} : memref<1536x1xf32, #tpu.memory_space<vmem>>, vector<128x1xf32>,
    %27 = vector.extract_strided_slice %9 {offsets = [0, 512], sizes = [1, 128], strides = [1, 1]} : vector<1x1536xf32> to vector<1x128xf32>
    %cst_15 = arith.constant dense<0.000000e+00> : vector<128x1xf32>
    %28 = tpu.matmul %14, %27, %cst_15 {dimension_numbers = #tpu.dot_dimension_numbers<[1], [1], [0], [0], [0, 0, 1, 0], [], []>} : vector<128x128xf32>, vector<1x128xf32>, vector<128x1xf32> -> vector<128x1xf32>
    %c512 = arith.constant 512 : index
    %c0_16 = arith.constant 0 : index
    %29 = vector.load %arg6[%c512, %c0_16] : memref<1536x1xf32, #tpu.memory_space<vmem>>, vector<128x1xf32>
    tpu.vector_store %arg6[%c512, %c0_16], %28 {strides = array<i32>} : memref<1536x1xf32, #tpu.memory_space<vmem>>, vector<128x1xf32>,
    %30 = vector.extract_strided_slice %9 {offsets = [0, 640], sizes = [1, 128], strides = [1, 1]} : vector<1x1536xf32> to vector<1x128xf32>
    %cst_17 = arith.constant dense<0.000000e+00> : vector<128x1xf32>
    %31 = tpu.matmul %14, %30, %cst_17 {dimension_numbers = #tpu.dot_dimension_numbers<[1], [1], [0], [0], [0, 0, 1, 0], [], []>} : vector<128x128xf32>, vector<1x128xf32>, vector<128x1xf32> -> vector<128x1xf32>
    %c640 = arith.constant 640 : index
    %c0_18 = arith.constant 0 : index
    %32 = vector.load %arg6[%c640, %c0_18] : memref<1536x1xf32, #tpu.memory_space<vmem>>, vector<128x1xf32>
    tpu.vector_store %arg6[%c640, %c0_18], %31 {strides = array<i32>} : memref<1536x1xf32, #tpu.memory_space<vmem>>, vector<128x1xf32>,
    %33 = vector.extract_strided_slice %9 {offsets = [0, 768], sizes = [1, 128], strides = [1, 1]} : vector<1x1536xf32> to vector<1x128xf32>
    %cst_19 = arith.constant dense<0.000000e+00> : vector<128x1xf32>
    %34 = tpu.matmul %14, %33, %cst_19 {dimension_numbers = #tpu.dot_dimension_numbers<[1], [1], [0], [0], [0, 0, 1, 0], [], []>} : vector<128x128xf32>, vector<1x128xf32>, vector<128x1xf32> -> vector<128x1xf32>
    %c768 = arith.constant 768 : index
    %c0_20 = arith.constant 0 : index
    %35 = vector.load %arg6[%c768, %c0_20] : memref<1536x1xf32, #tpu.memory_space<vmem>>, vector<128x1xf32>
    tpu.vector_store %arg6[%c768, %c0_20], %34 {strides = array<i32>} : memref<1536x1xf32, #tpu.memory_space<vmem>>, vector<128x1xf32>,
    %36 = vector.extract_strided_slice %9 {offsets = [0, 896], sizes = [1, 128], strides = [1, 1]} : vector<1x1536xf32> to vector<1x128xf32>
    %cst_21 = arith.constant dense<0.000000e+00> : vector<128x1xf32>
    %37 = tpu.matmul %14, %36, %cst_21 {dimension_numbers = #tpu.dot_dimension_numbers<[1], [1], [0], [0], [0, 0, 1, 0], [], []>} : vector<128x128xf32>, vector<1x128xf32>, vector<128x1xf32> -> vector<128x1xf32>
    %c896 = arith.constant 896 : index
    %c0_22 = arith.constant 0 : index
    %38 = vector.load %arg6[%c896, %c0_22] : memref<1536x1xf32, #tpu.memory_space<vmem>>, vector<128x1xf32>
    tpu.vector_store %arg6[%c896, %c0_22], %37 {strides = array<i32>} : memref<1536x1xf32, #tpu.memory_space<vmem>>, vector<128x1xf32>,
    %39 = vector.extract_strided_slice %9 {offsets = [0, 1024], sizes = [1, 128], strides = [1, 1]} : vector<1x1536xf32> to vector<1x128xf32>
    %cst_23 = arith.constant dense<0.000000e+00> : vector<128x1xf32>
    %40 = tpu.matmul %14, %39, %cst_23 {dimension_numbers = #tpu.dot_dimension_numbers<[1], [1], [0], [0], [0, 0, 1, 0], [], []>} : vector<128x128xf32>, vector<1x128xf32>, vector<128x1xf32> -> vector<128x1xf32>
    %c1024 = arith.constant 1024 : index
    %c0_24 = arith.constant 0 : index
    %41 = vector.load %arg6[%c1024, %c0_24] : memref<1536x1xf32, #tpu.memory_space<vmem>>, vector<128x1xf32>
    tpu.vector_store %arg6[%c1024, %c0_24], %40 {strides = array<i32>} : memref<1536x1xf32, #tpu.memory_space<vmem>>, vector<128x1xf32>,
    %42 = vector.extract_strided_slice %9 {offsets = [0, 1152], sizes = [1, 128], strides = [1, 1]} : vector<1x1536xf32> to vector<1x128xf32>
    %cst_25 = arith.constant dense<0.000000e+00> : vector<128x1xf32>
    %43 = tpu.matmul %14, %42, %cst_25 {dimension_numbers = #tpu.dot_dimension_numbers<[1], [1], [0], [0], [0, 0, 1, 0], [], []>} : vector<128x128xf32>, vector<1x128xf32>, vector<128x1xf32> -> vector<128x1xf32>
    %c1152 = arith.constant 1152 : index
    %c0_26 = arith.constant 0 : index
    %44 = vector.load %arg6[%c1152, %c0_26] : memref<1536x1xf32, #tpu.memory_space<vmem>>, vector<128x1xf32>
    tpu.vector_store %arg6[%c1152, %c0_26], %43 {strides = array<i32>} : memref<1536x1xf32, #tpu.memory_space<vmem>>, vector<128x1xf32>,
    %45 = vector.extract_strided_slice %9 {offsets = [0, 1280], sizes = [1, 128], strides = [1, 1]} : vector<1x1536xf32> to vector<1x128xf32>
    %cst_27 = arith.constant dense<0.000000e+00> : vector<128x1xf32>
    %46 = tpu.matmul %14, %45, %cst_27 {dimension_numbers = #tpu.dot_dimension_numbers<[1], [1], [0], [0], [0, 0, 1, 0], [], []>} : vector<128x128xf32>, vector<1x128xf32>, vector<128x1xf32> -> vector<128x1xf32>
    %c1280 = arith.constant 1280 : index
    %c0_28 = arith.constant 0 : index
    %47 = vector.load %arg6[%c1280, %c0_28] : memref<1536x1xf32, #tpu.memory_space<vmem>>, vector<128x1xf32>
    tpu.vector_store %arg6[%c1280, %c0_28], %46 {strides = array<i32>} : memref<1536x1xf32, #tpu.memory_space<vmem>>, vector<128x1xf32>,
    %48 = vector.extract_strided_slice %9 {offsets = [0, 1408], sizes = [1, 128], strides = [1, 1]} : vector<1x1536xf32> to vector<1x128xf32>
    %cst_29 = arith.constant dense<0.000000e+00> : vector<128x1xf32>
    %49 = tpu.matmul %14, %48, %cst_29 {dimension_numbers = #tpu.dot_dimension_numbers<[1], [1], [0], [0], [0, 0, 1, 0], [], []>} : vector<128x128xf32>, vector<1x128xf32>, vector<128x1xf32> -> vector<128x1xf32>
    %c1408 = arith.constant 1408 : index
    %c0_30 = arith.constant 0 : index
    %50 = vector.load %arg6[%c1408, %c0_30] : memref<1536x1xf32, #tpu.memory_space<vmem>>, vector<128x1xf32>
    tpu.vector_store %arg6[%c1408, %c0_30], %49 {strides = array<i32>} : memref<1536x1xf32, #tpu.memory_space<vmem>>, vector<128x1xf32>,
    %c0_31 = arith.constant 0 : index
    %c0_32 = arith.constant 0 : index
    %51 = vector.load %arg4[%c0_31, %c0_32] : memref<1536x49xf32, #tpu.memory_space<vmem>>, vector<1536x49xf32>
    %c0_33 = arith.constant 0 : index
    %c0_34 = arith.constant 0 : index
    %52 = vector.load %arg6[%c0_33, %c0_34] : memref<1536x1xf32, #tpu.memory_space<vmem>>, vector<1536x1xf32>
    %53 = vector.broadcast %52 : vector<1536x1xf32> to vector<1536x49xf32>
    %54 = arith.mulf %51, %53 : vector<1536x49xf32>
    %c0_35 = arith.constant 0 : index
    %c0_36 = arith.constant 0 : index
    %55 = vector.load %arg5[%c0_35, %c0_36] : memref<1536x49xf32, #tpu.memory_space<vmem>>, vector<1536x49xf32>
    tpu.vector_store %arg5[%c0_35, %c0_36], %54 {strides = array<i32>} : memref<1536x49xf32, #tpu.memory_space<vmem>>, vector<1536x49xf32>,
    return
  }
  func.func @transform_0(%arg0: i32) -> (i32, i32) {
    %c0_i32 = arith.constant 0 : i32
    %c0_i32_0 = arith.constant 0 : i32
    %c0_i32_1 = arith.constant 0 : i32
    return %c0_i32, %c0_i32_0 : i32, i32
  }
  func.func @transform_1(%arg0: i32) -> (i32, i32) {
    %c0_i32 = arith.constant 0 : i32
    %c0_i32_0 = arith.constant 0 : i32
    return %arg0, %c0_i32 : i32, i32
  }
  func.func @transform_2(%arg0: i32) -> (i32, i32) {
    %c0_i32 = arith.constant 0 : i32
    %c0_i32_0 = arith.constant 0 : i32
    return %c0_i32, %arg0 : i32, i32
  }
  func.func @transform_3(%arg0: i32) -> (i32, i32) {
    %c0_i32 = arith.constant 0 : i32
    %c0_i32_0 = arith.constant 0 : i32
    return %arg0, %c0_i32 : i32, i32
  }
  func.func @transform_4(%arg0: i32) -> (i32, i32) {
    %c0_i32 = arith.constant 0 : i32
    %c0_i32_0 = arith.constant 0 : i32
    return %arg0, %c0_i32 : i32, i32
  }
}

</mosaic_0001>

<llo_original>
// kernel: tpu_custom_call.1
$region0: #{tpu_custom_call.1}
  #allocation0 [shape = 'u32[]', space=smem, size = 0x4, offset = 0x4, fixed_abs, tag = 'smem constant byte address 0x4 - core index']
  #allocation1 [shape = 'u32[144,128]{1,0:T(1,128)}', space=vmem, size = 0x12000, scoped, tag = 'internal scratch']
  #allocation2 [shape = 'f32[1536,1]{1,0:T(8,128)}', space=vmem, size = 0xc0000, scoped, tag = 'scratch operand']
  %s0 = inlined_call_operand.vmem [shape: f32[1,64], index: 0, kind: input, shape index: {}]
  %s1 = inlined_call_operand.vmem [shape: f32[1536,64], index: 1, kind: input, shape index: {}]
  %s2 = inlined_call_operand.vmem [shape: f32[1,1536], index: 2, kind: input, shape index: {}]
  %s3 = inlined_call_operand.vmem [shape: f32[1536,49], index: 3, kind: input, shape index: {}]
  %s4 = inlined_call_operand.vmem [shape: f32[1536,49], index: 4, kind: output, shape index: {}]
  %s5 = sld [smem:[#allocation0]]
  $region26: #{tpu_custom_call.1} parent=0
    _
  %s7 = ssub.s32 1, %s5
  %s8 = scalar_select 0, %s7, %s5
  // Predicated region
  $region2: #{tpu_custom_call.1} parent=0 // pred_check
    _
  $region3: #{tpu_custom_call.1} parent=0 // pred_check_branch
    %10 = sbr.rel (0) target = $region5
  $region4: #{tpu_custom_call.1} parent=0 // pred_region
    _
  $region5: #{tpu_custom_call.1} parent=0 // pred_fallthru
    _
  // Predicated region
  $region6: #{tpu_custom_call.1} parent=0 // pred_check
    _
  $region7: #{tpu_custom_call.1} parent=0 // pred_check_branch
    %12 = sbr.rel (0) target = $region9
  $region8: #{tpu_custom_call.1} parent=0 // pred_region
    _
  $region9: #{tpu_custom_call.1} parent=0 // pred_fallthru
    _
  // Predicated region
  $region10: #{tpu_custom_call.1} parent=0 // pred_check
    _
  $region11: #{tpu_custom_call.1} parent=0 // pred_check_branch
    %14 = sbr.rel (0) target = $region13
  $region12: #{tpu_custom_call.1} parent=0 // pred_region
    _
  $region13: #{tpu_custom_call.1} parent=0 // pred_fallthru
    _
  // Predicated region
  $region14: #{tpu_custom_call.1} parent=0 // pred_check
    _
  $region15: #{tpu_custom_call.1} parent=0 // pred_check_branch
    %16 = sbr.rel (0) target = $region17
  $region16: #{tpu_custom_call.1} parent=0 // pred_region
    _
  $region17: #{tpu_custom_call.1} parent=0 // pred_fallthru
    _
  %v17 = vld [vmem:[%s0] sm:$0x1]
  %v18 = vld [vmem:[%s1] sm:$0xff]
  %v19 = vld [vmem:[%s1 + $0x8] sm:$0xff]
  %v20 = vld [vmem:[%s1 + $0x10] sm:$0xff]
  %v21 = vld [vmem:[%s1 + $0x18] sm:$0xff]
  %v22 = vld [vmem:[%s1 + $0x20] sm:$0xff]
  %v23 = vld [vmem:[%s1 + $0x28] sm:$0xff]
  %v24 = vld [vmem:[%s1 + $0x30] sm:$0xff]
  %v25 = vld [vmem:[%s1 + $0x38] sm:$0xff]
  %v26 = vld [vmem:[%s1 + $0x40] sm:$0xff]
  %v27 = vld [vmem:[%s1 + $0x48] sm:$0xff]
  %v28 = vld [vmem:[%s1 + $0x50] sm:$0xff]
  %v29 = vld [vmem:[%s1 + $0x58] sm:$0xff]
  %v30 = vld [vmem:[%s1 + $0x60] sm:$0xff]
  %v31 = vld [vmem:[%s1 + $0x68] sm:$0xff]
  %v32 = vld [vmem:[%s1 + $0x70] sm:$0xff]
  %v33 = vld [vmem:[%s1 + $0x78] sm:$0xff]
  %v34 = vld [vmem:[%s1 + $0x80] sm:$0xff]
  %v35 = vld [vmem:[%s1 + $0x88] sm:$0xff]
  %v36 = vld [vmem:[%s1 + $0x90] sm:$0xff]
  %v37 = vld [vmem:[%s1 + $0x98] sm:$0xff]
  %v38 = vld [vmem:[%s1 + $0xa0] sm:$0xff]
  %v39 = vld [vmem:[%s1 + $0xa8] sm:$0xff]
  %v40 = vld [vmem:[%s1 + $0xb0] sm:$0xff]
  %v41 = vld [vmem:[%s1 + $0xb8] sm:$0xff]
  %v42 = vld [vmem:[%s1 + $0xc0] sm:$0xff]
  %v43 = vld [vmem:[%s1 + $0xc8] sm:$0xff]
  %v44 = vld [vmem:[%s1 + $0xd0] sm:$0xff]
  %v45 = vld [vmem:[%s1 + $0xd8] sm:$0xff]
  %v46 = vld [vmem:[%s1 + $0xe0] sm:$0xff]
  %v47 = vld [vmem:[%s1 + $0xe8] sm:$0xff]
  %v48 = vld [vmem:[%s1 + $0xf0] sm:$0xff]
  %v49 = vld [vmem:[%s1 + $0xf8] sm:$0xff]
  %v50 = vld [vmem:[%s1 + $0x100] sm:$0xff]
  %v51 = vld [vmem:[%s1 + $0x108] sm:$0xff]
  %v52 = vld [vmem:[%s1 + $0x110] sm:$0xff]
  %v53 = vld [vmem:[%s1 + $0x118] sm:$0xff]
  %v54 = vld [vmem:[%s1 + $0x120] sm:$0xff]
  %v55 = vld [vmem:[%s1 + $0x128] sm:$0xff]
  %v56 = vld [vmem:[%s1 + $0x130] sm:$0xff]
  %v57 = vld [vmem:[%s1 + $0x138] sm:$0xff]
  %v58 = vld [vmem:[%s1 + $0x140] sm:$0xff]
  %v59 = vld [vmem:[%s1 + $0x148] sm:$0xff]
  %v60 = vld [vmem:[%s1 + $0x150] sm:$0xff]
  %v61 = vld [vmem:[%s1 + $0x158] sm:$0xff]
  %v62 = vld [vmem:[%s1 + $0x160] sm:$0xff]
  %v63 = vld [vmem:[%s1 + $0x168] sm:$0xff]
  %v64 = vld [vmem:[%s1 + $0x170] sm:$0xff]
  %v65 = vld [vmem:[%s1 + $0x178] sm:$0xff]
  %v66 = vld [vmem:[%s1 + $0x180] sm:$0xff]
  %v67 = vld [vmem:[%s1 + $0x188] sm:$0xff]
  %v68 = vld [vmem:[%s1 + $0x190] sm:$0xff]
  %v69 = vld [vmem:[%s1 + $0x198] sm:$0xff]
  %v70 = vld [vmem:[%s1 + $0x1a0] sm:$0xff]
  %v71 = vld [vmem:[%s1 + $0x1a8] sm:$0xff]
  %v72 = vld [vmem:[%s1 + $0x1b0] sm:$0xff]
  %v73 = vld [vmem:[%s1 + $0x1b8] sm:$0xff]
  %v74 = vld [vmem:[%s1 + $0x1c0] sm:$0xff]
  %v75 = vld [vmem:[%s1 + $0x1c8] sm:$0xff]
  %v76 = vld [vmem:[%s1 + $0x1d0] sm:$0xff]
  %v77 = vld [vmem:[%s1 + $0x1d8] sm:$0xff]
  %v78 = vld [vmem:[%s1 + $0x1e0] sm:$0xff]
  %v79 = vld [vmem:[%s1 + $0x1e8] sm:$0xff]
  %v80 = vld [vmem:[%s1 + $0x1f0] sm:$0xff]
  %v81 = vld [vmem:[%s1 + $0x1f8] sm:$0xff]
  %v82 = vld [vmem:[%s1 + $0x200] sm:$0xff]
  %v83 = vld [vmem:[%s1 + $0x208] sm:$0xff]
  %v84 = vld [vmem:[%s1 + $0x210] sm:$0xff]
  %v85 = vld [vmem:[%s1 + $0x218] sm:$0xff]
  %v86 = vld [vmem:[%s1 + $0x220] sm:$0xff]
  %v87 = vld [vmem:[%s1 + $0x228] sm:$0xff]
  %v88 = vld [vmem:[%s1 + $0x230] sm:$0xff]
  %v89 = vld [vmem:[%s1 + $0x238] sm:$0xff]
  %v90 = vld [vmem:[%s1 + $0x240] sm:$0xff]
  %v91 = vld [vmem:[%s1 + $0x248] sm:$0xff]
  %v92 = vld [vmem:[%s1 + $0x250] sm:$0xff]
  %v93 = vld [vmem:[%s1 + $0x258] sm:$0xff]
  %v94 = vld [vmem:[%s1 + $0x260] sm:$0xff]
  %v95 = vld [vmem:[%s1 + $0x268] sm:$0xff]
  %v96 = vld [vmem:[%s1 + $0x270] sm:$0xff]
  %v97 = vld [vmem:[%s1 + $0x278] sm:$0xff]
  %v98 = vld [vmem:[%s1 + $0x280] sm:$0xff]
  %v99 = vld [vmem:[%s1 + $0x288] sm:$0xff]
  %v100 = vld [vmem:[%s1 + $0x290] sm:$0xff]
  %v101 = vld [vmem:[%s1 + $0x298] sm:$0xff]
  %v102 = vld [vmem:[%s1 + $0x2a0] sm:$0xff]
  %v103 = vld [vmem:[%s1 + $0x2a8] sm:$0xff]
  %v104 = vld [vmem:[%s1 + $0x2b0] sm:$0xff]
  %v105 = vld [vmem:[%s1 + $0x2b8] sm:$0xff]
  %v106 = vld [vmem:[%s1 + $0x2c0] sm:$0xff]
  %v107 = vld [vmem:[%s1 + $0x2c8] sm:$0xff]
  %v108 = vld [vmem:[%s1 + $0x2d0] sm:$0xff]
  %v109 = vld [vmem:[%s1 + $0x2d8] sm:$0xff]
  %v110 = vld [vmem:[%s1 + $0x2e0] sm:$0xff]
  %v111 = vld [vmem:[%s1 + $0x2e8] sm:$0xff]
  %v112 = vld [vmem:[%s1 + $0x2f0] sm:$0xff]
  %v113 = vld [vmem:[%s1 + $0x2f8] sm:$0xff]
  %v114 = vld [vmem:[%s1 + $0x300] sm:$0xff]
  %v115 = vld [vmem:[%s1 + $0x308] sm:$0xff]
  %v116 = vld [vmem:[%s1 + $0x310] sm:$0xff]
  %v117 = vld [vmem:[%s1 + $0x318] sm:$0xff]
  %v118 = vld [vmem:[%s1 + $0x320] sm:$0xff]
  %v119 = vld [vmem:[%s1 + $0x328] sm:$0xff]
  %v120 = vld [vmem:[%s1 + $0x330] sm:$0xff]
  %v121 = vld [vmem:[%s1 + $0x338] sm:$0xff]
  %v122 = vld [vmem:[%s1 + $0x340] sm:$0xff]
  %v123 = vld [vmem:[%s1 + $0x348] sm:$0xff]
  %v124 = vld [vmem:[%s1 + $0x350] sm:$0xff]
  %v125 = vld [vmem:[%s1 + $0x358] sm:$0xff]
  %v126 = vld [vmem:[%s1 + $0x360] sm:$0xff]
  %v127 = vld [vmem:[%s1 + $0x368] sm:$0xff]
  %v128 = vld [vmem:[%s1 + $0x370] sm:$0xff]
  %v129 = vld [vmem:[%s1 + $0x378] sm:$0xff]
  %v130 = vld [vmem:[%s1 + $0x380] sm:$0xff]
  %v131 = vld [vmem:[%s1 + $0x388] sm:$0xff]
  %v132 = vld [vmem:[%s1 + $0x390] sm:$0xff]
  %v133 = vld [vmem:[%s1 + $0x398] sm:$0xff]
  %v134 = vld [vmem:[%s1 + $0x3a0] sm:$0xff]
  %v135 = vld [vmem:[%s1 + $0x3a8] sm:$0xff]
  %v136 = vld [vmem:[%s1 + $0x3b0] sm:$0xff]
  %v137 = vld [vmem:[%s1 + $0x3b8] sm:$0xff]
  %v138 = vld [vmem:[%s1 + $0x3c0] sm:$0xff]
  %v139 = vld [vmem:[%s1 + $0x3c8] sm:$0xff]
  %v140 = vld [vmem:[%s1 + $0x3d0] sm:$0xff]
  %v141 = vld [vmem:[%s1 + $0x3d8] sm:$0xff]
  %v142 = vld [vmem:[%s1 + $0x3e0] sm:$0xff]
  %v143 = vld [vmem:[%s1 + $0x3e8] sm:$0xff]
  %v144 = vld [vmem:[%s1 + $0x3f0] sm:$0xff]
  %v145 = vld [vmem:[%s1 + $0x3f8] sm:$0xff]
  %v146 = vld [vmem:[%s1 + $0x400] sm:$0xff]
  %v147 = vld [vmem:[%s1 + $0x408] sm:$0xff]
  %v148 = vld [vmem:[%s1 + $0x410] sm:$0xff]
  %v149 = vld [vmem:[%s1 + $0x418] sm:$0xff]
  %v150 = vld [vmem:[%s1 + $0x420] sm:$0xff]
  %v151 = vld [vmem:[%s1 + $0x428] sm:$0xff]
  %v152 = vld [vmem:[%s1 + $0x430] sm:$0xff]
  %v153 = vld [vmem:[%s1 + $0x438] sm:$0xff]
  %v154 = vld [vmem:[%s1 + $0x440] sm:$0xff]
  %v155 = vld [vmem:[%s1 + $0x448] sm:$0xff]
  %v156 = vld [vmem:[%s1 + $0x450] sm:$0xff]
  %v157 = vld [vmem:[%s1 + $0x458] sm:$0xff]
  %v158 = vld [vmem:[%s1 + $0x460] sm:$0xff]
  %v159 = vld [vmem:[%s1 + $0x468] sm:$0xff]
  %v160 = vld [vmem:[%s1 + $0x470] sm:$0xff]
  %v161 = vld [vmem:[%s1 + $0x478] sm:$0xff]
  %v162 = vld [vmem:[%s1 + $0x480] sm:$0xff]
  %v163 = vld [vmem:[%s1 + $0x488] sm:$0xff]
  %v164 = vld [vmem:[%s1 + $0x490] sm:$0xff]
  %v165 = vld [vmem:[%s1 + $0x498] sm:$0xff]
  %v166 = vld [vmem:[%s1 + $0x4a0] sm:$0xff]
  %v167 = vld [vmem:[%s1 + $0x4a8] sm:$0xff]
  %v168 = vld [vmem:[%s1 + $0x4b0] sm:$0xff]
  %v169 = vld [vmem:[%s1 + $0x4b8] sm:$0xff]
  %v170 = vld [vmem:[%s1 + $0x4c0] sm:$0xff]
  %v171 = vld [vmem:[%s1 + $0x4c8] sm:$0xff]
  %v172 = vld [vmem:[%s1 + $0x4d0] sm:$0xff]
  %v173 = vld [vmem:[%s1 + $0x4d8] sm:$0xff]
  %v174 = vld [vmem:[%s1 + $0x4e0] sm:$0xff]
  %v175 = vld [vmem:[%s1 + $0x4e8] sm:$0xff]
  %v176 = vld [vmem:[%s1 + $0x4f0] sm:$0xff]
  %v177 = vld [vmem:[%s1 + $0x4f8] sm:$0xff]
  %v178 = vld [vmem:[%s1 + $0x500] sm:$0xff]
  %v179 = vld [vmem:[%s1 + $0x508] sm:$0xff]
  %v180 = vld [vmem:[%s1 + $0x510] sm:$0xff]
  %v181 = vld [vmem:[%s1 + $0x518] sm:$0xff]
  %v182 = vld [vmem:[%s1 + $0x520] sm:$0xff]
  %v183 = vld [vmem:[%s1 + $0x528] sm:$0xff]
  %v184 = vld [vmem:[%s1 + $0x530] sm:$0xff]
  %v185 = vld [vmem:[%s1 + $0x538] sm:$0xff]
  %v186 = vld [vmem:[%s1 + $0x540] sm:$0xff]
  %v187 = vld [vmem:[%s1 + $0x548] sm:$0xff]
  %v188 = vld [vmem:[%s1 + $0x550] sm:$0xff]
  %v189 = vld [vmem:[%s1 + $0x558] sm:$0xff]
  %v190 = vld [vmem:[%s1 + $0x560] sm:$0xff]
  %v191 = vld [vmem:[%s1 + $0x568] sm:$0xff]
  %v192 = vld [vmem:[%s1 + $0x570] sm:$0xff]
  %v193 = vld [vmem:[%s1 + $0x578] sm:$0xff]
  %v194 = vld [vmem:[%s1 + $0x580] sm:$0xff]
  %v195 = vld [vmem:[%s1 + $0x588] sm:$0xff]
  %v196 = vld [vmem:[%s1 + $0x590] sm:$0xff]
  %v197 = vld [vmem:[%s1 + $0x598] sm:$0xff]
  %v198 = vld [vmem:[%s1 + $0x5a0] sm:$0xff]
  %v199 = vld [vmem:[%s1 + $0x5a8] sm:$0xff]
  %v200 = vld [vmem:[%s1 + $0x5b0] sm:$0xff]
  %v201 = vld [vmem:[%s1 + $0x5b8] sm:$0xff]
  %v202 = vld [vmem:[%s1 + $0x5c0] sm:$0xff]
  %v203 = vld [vmem:[%s1 + $0x5c8] sm:$0xff]
  %v204 = vld [vmem:[%s1 + $0x5d0] sm:$0xff]
  %v205 = vld [vmem:[%s1 + $0x5d8] sm:$0xff]
  %v206 = vld [vmem:[%s1 + $0x5e0] sm:$0xff]
  %v207 = vld [vmem:[%s1 + $0x5e8] sm:$0xff]
  %v208 = vld [vmem:[%s1 + $0x5f0] sm:$0xff]
  %v209 = vld [vmem:[%s1 + $0x5f8] sm:$0xff]
  %v210 = vld [vmem:[%s2] sm:$0xff]
  %v211 = vld [vmem:[%s2 + $0x8] sm:$0xf]
  %v214 = vlaneseq
  %v215 = vshrl.u32 %v214, 7
  %v216 = vsub.s32 0, %v215
  %v217 = vrot.slane %v210, %v216
  %v218 = vlaneseq
  %v219 = vshrl.u32 %v218, 7
  %v220 = vsub.s32 1, %v219
  %v221 = vrot.slane %v210, %v220
  %v222 = vlaneseq
  %v223 = vshrl.u32 %v222, 7
  %v224 = vsub.s32 2, %v223
  %v225 = vrot.slane %v210, %v224
  %v226 = vlaneseq
  %v227 = vshrl.u32 %v226, 7
  %v228 = vsub.s32 3, %v227
  %v229 = vrot.slane %v210, %v228
  %v230 = vlaneseq
  %v231 = vshrl.u32 %v230, 7
  %v232 = vsub.s32 4, %v231
  %v233 = vrot.slane %v210, %v232
  %v234 = vlaneseq
  %v235 = vshrl.u32 %v234, 7
  %v236 = vsub.s32 5, %v235
  %v237 = vrot.slane %v210, %v236
  %v238 = vlaneseq
  %v239 = vshrl.u32 %v238, 7
  %v240 = vsub.s32 6, %v239
  %v241 = vrot.slane %v210, %v240
  %v242 = vlaneseq
  %v243 = vshrl.u32 %v242, 7
  %v244 = vsub.s32 7, %v243
  %v245 = vrot.slane %v210, %v244
  %v246 = vlaneseq
  %v247 = vshrl.u32 %v246, 7
  %v248 = vsub.s32 0, %v247
  %v249 = vrot.slane %v211, %v248
  %v250 = vlaneseq
  %v251 = vshrl.u32 %v250, 7
  %v252 = vsub.s32 1, %v251
  %v253 = vrot.slane %v211, %v252
  %v254 = vlaneseq
  %v255 = vshrl.u32 %v254, 7
  %v256 = vsub.s32 2, %v255
  %v257 = vrot.slane %v211, %v256
  %v258 = vlaneseq
  %v259 = vshrl.u32 %v258, 7
  %v260 = vsub.s32 3, %v259
  %v261 = vrot.slane %v211, %v260
  %vm274 = vcmask 523264
  %v276 = vsel %vm274, %v17, 0
  %v279 = vsel %vm274, %v18, 0
  %v282 = vsel %vm274, %v19, 0
  %v285 = vsel %vm274, %v20, 0
  %v288 = vsel %vm274, %v21, 0
  %v291 = vsel %vm274, %v22, 0
  %v294 = vsel %vm274, %v23, 0
  %v297 = vsel %vm274, %v24, 0
  %v300 = vsel %vm274, %v25, 0
  %v303 = vsel %vm274, %v26, 0
  %v306 = vsel %vm274, %v27, 0
  %v309 = vsel %vm274, %v28, 0
  %v312 = vsel %vm274, %v29, 0
  %v315 = vsel %vm274, %v30, 0
  %v318 = vsel %vm274, %v31, 0
  %v321 = vsel %vm274, %v32, 0
  %v324 = vsel %vm274, %v33, 0
  %v327 = vsel %vm274, %v34, 0
  %v330 = vsel %vm274, %v35, 0
  %v333 = vsel %vm274, %v36, 0
  %v336 = vsel %vm274, %v37, 0
  %v339 = vsel %vm274, %v38, 0
  %v342 = vsel %vm274, %v39, 0
  %v345 = vsel %vm274, %v40, 0
  %v348 = vsel %vm274, %v41, 0
  %v351 = vsel %vm274, %v42, 0
  %v354 = vsel %vm274, %v43, 0
  %v357 = vsel %vm274, %v44, 0
  %v360 = vsel %vm274, %v45, 0
  %v363 = vsel %vm274, %v46, 0
  %v366 = vsel %vm274, %v47, 0
  %v369 = vsel %vm274, %v48, 0
  %v372 = vsel %vm274, %v49, 0
  %v375 = vsel %vm274, %v50, 0
  %v378 = vsel %vm274, %v51, 0
  %v381 = vsel %vm274, %v52, 0
  %v384 = vsel %vm274, %v53, 0
  %v387 = vsel %vm274, %v54, 0
  %v390 = vsel %vm274, %v55, 0
  %v393 = vsel %vm274, %v56, 0
  %v396 = vsel %vm274, %v57, 0
  %v399 = vsel %vm274, %v58, 0
  %v402 = vsel %vm274, %v59, 0
  %v405 = vsel %vm274, %v60, 0
  %v408 = vsel %vm274, %v61, 0
  %v411 = vsel %vm274, %v62, 0
  %v414 = vsel %vm274, %v63, 0
  %v417 = vsel %vm274, %v64, 0
  %v420 = vsel %vm274, %v65, 0
  %v423 = vsel %vm274, %v66, 0
  %v426 = vsel %vm274, %v67, 0
  %v429 = vsel %vm274, %v68, 0
  %v432 = vsel %vm274, %v69, 0
  %v435 = vsel %vm274, %v70, 0
  %v438 = vsel %vm274, %v71, 0
  %v441 = vsel %vm274, %v72, 0
  %v444 = vsel %vm274, %v73, 0
  %v447 = vsel %vm274, %v74, 0
  %v450 = vsel %vm274, %v75, 0
  %v453 = vsel %vm274, %v76, 0
  %v456 = vsel %vm274, %v77, 0
  %v459 = vsel %vm274, %v78, 0
  %v462 = vsel %vm274, %v79, 0
  %v465 = vsel %vm274, %v80, 0
  %v468 = vsel %vm274, %v81, 0
  %v471 = vsel %vm274, %v82, 0
  %v474 = vsel %vm274, %v83, 0
  %v477 = vsel %vm274, %v84, 0
  %v480 = vsel %vm274, %v85, 0
  %v483 = vsel %vm274, %v86, 0
  %v486 = vsel %vm274, %v87, 0
  %v489 = vsel %vm274, %v88, 0
  %v492 = vsel %vm274, %v89, 0
  %v495 = vsel %vm274, %v90, 0
  %v498 = vsel %vm274, %v91, 0
  %v501 = vsel %vm274, %v92, 0
  %v504 = vsel %vm274, %v93, 0
  %v507 = vsel %vm274, %v94, 0
  %v510 = vsel %vm274, %v95, 0
  %v513 = vsel %vm274, %v96, 0
  %v516 = vsel %vm274, %v97, 0
  %v519 = vsel %vm274, %v98, 0
  %v522 = vsel %vm274, %v99, 0
  %v525 = vsel %vm274, %v100, 0
  %v528 = vsel %vm274, %v101, 0
  %v531 = vsel %vm274, %v102, 0
  %v534 = vsel %vm274, %v103, 0
  %v537 = vsel %vm274, %v104, 0
  %v540 = vsel %vm274, %v105, 0
  %v543 = vsel %vm274, %v106, 0
  %v546 = vsel %vm274, %v107, 0
  %v549 = vsel %vm274, %v108, 0
  %v552 = vsel %vm274, %v109, 0
  %v555 = vsel %vm274, %v110, 0
  %v558 = vsel %vm274, %v111, 0
  %v561 = vsel %vm274, %v112, 0
  %v564 = vsel %vm274, %v113, 0
  %v567 = vsel %vm274, %v114, 0
  %v570 = vsel %vm274, %v115, 0
  %v573 = vsel %vm274, %v116, 0
  %v576 = vsel %vm274, %v117, 0
  %v579 = vsel %vm274, %v118, 0
  %v582 = vsel %vm274, %v119, 0
  %v585 = vsel %vm274, %v120, 0
  %v588 = vsel %vm274, %v121, 0
  %v591 = vsel %vm274, %v122, 0
  %v594 = vsel %vm274, %v123, 0
  %v597 = vsel %vm274, %v124, 0
  %v600 = vsel %vm274, %v125, 0
  %v603 = vsel %vm274, %v126, 0
  %v606 = vsel %vm274, %v127, 0
  %v609 = vsel %vm274, %v128, 0
  %v612 = vsel %vm274, %v129, 0
  %v615 = vsel %vm274, %v130, 0
  %v618 = vsel %vm274, %v131, 0
  %v621 = vsel %vm274, %v132, 0
  %v624 = vsel %vm274, %v133, 0
  %v627 = vsel %vm274, %v134, 0
  %v630 = vsel %vm274, %v135, 0
  %v633 = vsel %vm274, %v136, 0
  %v636 = vsel %vm274, %v137, 0
  %v639 = vsel %vm274, %v138, 0
  %v642 = vsel %vm274, %v139, 0
  %v645 = vsel %vm274, %v140, 0
  %v648 = vsel %vm274, %v141, 0
  %v651 = vsel %vm274, %v142, 0
  %v654 = vsel %vm274, %v143, 0
  %v657 = vsel %vm274, %v144, 0
  %v660 = vsel %vm274, %v145, 0
  %v663 = vsel %vm274, %v146, 0
  %v666 = vsel %vm274, %v147, 0
  %v669 = vsel %vm274, %v148, 0
  %v672 = vsel %vm274, %v149, 0
  %v675 = vsel %vm274, %v150, 0
  %v678 = vsel %vm274, %v151, 0
  %v681 = vsel %vm274, %v152, 0
  %v684 = vsel %vm274, %v153, 0
  %v687 = vsel %vm274, %v154, 0
  %v690 = vsel %vm274, %v155, 0
  %v693 = vsel %vm274, %v156, 0
  %v696 = vsel %vm274, %v157, 0
  %v699 = vsel %vm274, %v158, 0
  %v702 = vsel %vm274, %v159, 0
  %v705 = vsel %vm274, %v160, 0
  %v708 = vsel %vm274, %v161, 0
  %v711 = vsel %vm274, %v162, 0
  %v714 = vsel %vm274, %v163, 0
  %v717 = vsel %vm274, %v164, 0
  %v720 = vsel %vm274, %v165, 0
  %v723 = vsel %vm274, %v166, 0
  %v726 = vsel %vm274, %v167, 0
  %v729 = vsel %vm274, %v168, 0
  %v732 = vsel %vm274, %v169, 0
  %v735 = vsel %vm274, %v170, 0
  %v738 = vsel %vm274, %v171, 0
  %v741 = vsel %vm274, %v172, 0
  %v744 = vsel %vm274, %v173, 0
  %v747 = vsel %vm274, %v174, 0
  %v750 = vsel %vm274, %v175, 0
  %v753 = vsel %vm274, %v176, 0
  %v756 = vsel %vm274, %v177, 0
  %v759 = vsel %vm274, %v178, 0
  %v762 = vsel %vm274, %v179, 0
  %v765 = vsel %vm274, %v180, 0
  %v768 = vsel %vm274, %v181, 0
  %v771 = vsel %vm274, %v182, 0
  %v774 = vsel %vm274, %v183, 0
  %v777 = vsel %vm274, %v184, 0
  %v780 = vsel %vm274, %v185, 0
  %v783 = vsel %vm274, %v186, 0
  %v786 = vsel %vm274, %v187, 0
  %v789 = vsel %vm274, %v188, 0
  %v792 = vsel %vm274, %v189, 0
  %v795 = vsel %vm274, %v190, 0
  %v798 = vsel %vm274, %v191, 0
  %v801 = vsel %vm274, %v192, 0
  %v804 = vsel %vm274, %v193, 0
  %v807 = vsel %vm274, %v194, 0
  %v810 = vsel %vm274, %v195, 0
  %v813 = vsel %vm274, %v196, 0
  %v816 = vsel %vm274, %v197, 0
  %v819 = vsel %vm274, %v198, 0
  %v822 = vsel %vm274, %v199, 0
  %v825 = vsel %vm274, %v200, 0
  %v828 = vsel %vm274, %v201, 0
  %v831 = vsel %vm274, %v202, 0
  %v834 = vsel %vm274, %v203, 0
  %v837 = vsel %vm274, %v204, 0
  %v840 = vsel %vm274, %v205, 0
  %v843 = vsel %vm274, %v206, 0
  %v846 = vsel %vm274, %v207, 0
  %v849 = vsel %vm274, %v208, 0
  %v852 = vsel %vm274, %v209, 0
  %854 = vmatprep.subr.mxu0 0.0
  %855 = vmatpush1.xpose.msra.mxu0 %v324
  %856 = vmatprep.subr.mxu0 0.0
  %857 = vmatpush1.xpose.msra.mxu0 %v321
  %858 = vmatprep.subr.mxu0 0.0
  %859 = vmatpush1.xpose.msra.mxu0 %v318
  %860 = vmatprep.subr.mxu0 0.0
  %861 = vmatpush1.xpose.msra.mxu0 %v315
  %862 = vmatprep.subr.mxu0 0.0
  %863 = vmatpush1.xpose.msra.mxu0 %v312
  %864 = vmatprep.subr.mxu0 0.0
  %865 = vmatpush1.xpose.msra.mxu0 %v309
  %866 = vmatprep.subr.mxu0 0.0
  %867 = vmatpush1.xpose.msra.mxu0 %v306
  %868 = vmatprep.subr.mxu0 0.0
  %869 = vmatpush1.xpose.msra.mxu0 %v303
  %870 = vmatprep.subr.mxu0 0.0
  %871 = vmatpush1.xpose.msra.mxu0 %v300
  %872 = vmatprep.subr.mxu0 0.0
  %873 = vmatpush1.xpose.msra.mxu0 %v297
  %874 = vmatprep.subr.mxu0 0.0
  %875 = vmatpush1.xpose.msra.mxu0 %v294
  %876 = vmatprep.subr.mxu0 0.0
  %877 = vmatpush1.xpose.msra.mxu0 %v291
  %878 = vmatprep.subr.mxu0 0.0
  %879 = vmatpush1.xpose.msra.mxu0 %v288
  %880 = vmatprep.subr.mxu0 0.0
  %881 = vmatpush1.xpose.msra.mxu0 %v285
  %882 = vmatprep.subr.mxu0 0.0
  %883 = vmatpush1.xpose.msra.mxu0 %v282
  %884 = vmatprep.subr.mxu0 0.0
  %885 = vmatpush1.xpose.msra.mxu0 %v279
  %886 = vmatprep.subr.mxu0 0.0
  %887 = vmatpush2.xpose.msra.mxu0 %v372
  %888 = vmatprep.subr.mxu0 0.0
  %889 = vmatpush2.xpose.msra.mxu0 %v369
  %890 = vmatprep.subr.mxu0 0.0
  %891 = vmatpush2.xpose.msra.mxu0 %v366
  %892 = vmatprep.subr.mxu0 0.0
  %893 = vmatpush2.xpose.msra.mxu0 %v363
  %894 = vmatprep.subr.mxu0 0.0
  %895 = vmatpush2.xpose.msra.mxu0 %v360
  %896 = vmatprep.subr.mxu0 0.0
  %897 = vmatpush2.xpose.msra.mxu0 %v357
  %898 = vmatprep.subr.mxu0 0.0
  %899 = vmatpush2.xpose.msra.mxu0 %v354
  %900 = vmatprep.subr.mxu0 0.0
  %901 = vmatpush2.xpose.msra.mxu0 %v351
  %902 = vmatprep.subr.mxu0 0.0
  %903 = vmatpush2.xpose.msra.mxu0 %v348
  %904 = vmatprep.subr.mxu0 0.0
  %905 = vmatpush2.xpose.msra.mxu0 %v345
  %906 = vmatprep.subr.mxu0 0.0
  %907 = vmatpush2.xpose.msra.mxu0 %v342
  %908 = vmatprep.subr.mxu0 0.0
  %909 = vmatpush2.xpose.msra.mxu0 %v339
  %910 = vmatprep.subr.mxu0 0.0
  %911 = vmatpush2.xpose.msra.mxu0 %v336
  %912 = vmatprep.subr.mxu0 0.0
  %913 = vmatpush2.xpose.msra.mxu0 %v333
  %914 = vmatprep.subr.mxu0 0.0
  %915 = vmatpush2.xpose.msra.mxu0 %v330
  %916 = vmatprep.subr.mxu0 0.0
  %917 = vmatpush2.xpose.msra.mxu0 %v327
  %918 = vmatprep.mubr.f32.mxu0 0.0
  %919 = vmatmul.mubr.f32.gmra.mxu0 %v276
  %v920 = vpop.f32.mrf.mxu0
  %v921 = vadd.f32 %v217, %v920
  %v922 = vpop.f32.mrf.mxu0
  %v923 = vadd.f32 %v221, %v922
  %924 = vdwg.mxu0
  %925 = vmatprep.subr.mxu0 0.0
  %926 = vmatpush1.xpose.msra.mxu0 %v420
  %927 = vmatprep.subr.mxu0 0.0
  %928 = vmatpush1.xpose.msra.mxu0 %v417
  %929 = vmatprep.subr.mxu0 0.0
  %930 = vmatpush1.xpose.msra.mxu0 %v414
  %931 = vmatprep.subr.mxu0 0.0
  %932 = vmatpush1.xpose.msra.mxu0 %v411
  %933 = vmatprep.subr.mxu0 0.0
  %934 = vmatpush1.xpose.msra.mxu0 %v408
  %935 = vmatprep.subr.mxu0 0.0
  %936 = vmatpush1.xpose.msra.mxu0 %v405
  %937 = vmatprep.subr.mxu0 0.0
  %938 = vmatpush1.xpose.msra.mxu0 %v402
  %939 = vmatprep.subr.mxu0 0.0
  %940 = vmatpush1.xpose.msra.mxu0 %v399
  %941 = vmatprep.subr.mxu0 0.0
  %942 = vmatpush1.xpose.msra.mxu0 %v396
  %943 = vmatprep.subr.mxu0 0.0
  %944 = vmatpush1.xpose.msra.mxu0 %v393
  %945 = vmatprep.subr.mxu0 0.0
  %946 = vmatpush1.xpose.msra.mxu0 %v390
  %947 = vmatprep.subr.mxu0 0.0
  %948 = vmatpush1.xpose.msra.mxu0 %v387
  %949 = vmatprep.subr.mxu0 0.0
  %950 = vmatpush1.xpose.msra.mxu0 %v384
  %951 = vmatprep.subr.mxu0 0.0
  %952 = vmatpush1.xpose.msra.mxu0 %v381
  %953 = vmatprep.subr.mxu0 0.0
  %954 = vmatpush1.xpose.msra.mxu0 %v378
  %955 = vmatprep.subr.mxu0 0.0
  %956 = vmatpush1.xpose.msra.mxu0 %v375
  %957 = vmatprep.subr.mxu0 0.0
  %958 = vmatpush2.xpose.msra.mxu0 %v468
  %959 = vmatprep.subr.mxu0 0.0
  %960 = vmatpush2.xpose.msra.mxu0 %v465
  %961 = vmatprep.subr.mxu0 0.0
  %962 = vmatpush2.xpose.msra.mxu0 %v462
  %963 = vmatprep.subr.mxu0 0.0
  %964 = vmatpush2.xpose.msra.mxu0 %v459
  %965 = vmatprep.subr.mxu0 0.0
  %966 = vmatpush2.xpose.msra.mxu0 %v456
  %967 = vmatprep.subr.mxu0 0.0
  %968 = vmatpush2.xpose.msra.mxu0 %v453
  %969 = vmatprep.subr.mxu0 0.0
  %970 = vmatpush2.xpose.msra.mxu0 %v450
  %971 = vmatprep.subr.mxu0 0.0
  %972 = vmatpush2.xpose.msra.mxu0 %v447
  %973 = vmatprep.subr.mxu0 0.0
  %974 = vmatpush2.xpose.msra.mxu0 %v444
  %975 = vmatprep.subr.mxu0 0.0
  %976 = vmatpush2.xpose.msra.mxu0 %v441
  %977 = vmatprep.subr.mxu0 0.0
  %978 = vmatpush2.xpose.msra.mxu0 %v438
  %979 = vmatprep.subr.mxu0 0.0
  %980 = vmatpush2.xpose.msra.mxu0 %v435
  %981 = vmatprep.subr.mxu0 0.0
  %982 = vmatpush2.xpose.msra.mxu0 %v432
  %983 = vmatprep.subr.mxu0 0.0
  %984 = vmatpush2.xpose.msra.mxu0 %v429
  %985 = vmatprep.subr.mxu0 0.0
  %986 = vmatpush2.xpose.msra.mxu0 %v426
  %987 = vmatprep.subr.mxu0 0.0
  %988 = vmatpush2.xpose.msra.mxu0 %v423
  %989 = vmatprep.mubr.f32.mxu0 0.0
  %990 = vmatmul.mubr.f32.gmra.mxu0 %v276
  %v991 = vpop.f32.mrf.mxu0
  %v992 = vadd.f32 %v225, %v991
  %v993 = vpop.f32.mrf.mxu0
  %v994 = vadd.f32 %v229, %v993
  %995 = vdwg.mxu0
  %996 = vmatprep.subr.mxu0 0.0
  %997 = vmatpush1.xpose.msra.mxu0 %v516
  %998 = vmatprep.subr.mxu0 0.0
  %999 = vmatpush1.xpose.msra.mxu0 %v513
  %1000 = vmatprep.subr.mxu0 0.0
  %1001 = vmatpush1.xpose.msra.mxu0 %v510
  %1002 = vmatprep.subr.mxu0 0.0
  %1003 = vmatpush1.xpose.msra.mxu0 %v507
  %1004 = vmatprep.subr.mxu0 0.0
  %1005 = vmatpush1.xpose.msra.mxu0 %v504
  %1006 = vmatprep.subr.mxu0 0.0
  %1007 = vmatpush1.xpose.msra.mxu0 %v501
  %1008 = vmatprep.subr.mxu0 0.0
  %1009 = vmatpush1.xpose.msra.mxu0 %v498
  %1010 = vmatprep.subr.mxu0 0.0
  %1011 = vmatpush1.xpose.msra.mxu0 %v495
  %1012 = vmatprep.subr.mxu0 0.0
  %1013 = vmatpush1.xpose.msra.mxu0 %v492
  %1014 = vmatprep.subr.mxu0 0.0
  %1015 = vmatpush1.xpose.msra.mxu0 %v489
  %1016 = vmatprep.subr.mxu0 0.0
  %1017 = vmatpush1.xpose.msra.mxu0 %v486
  %1018 = vmatprep.subr.mxu0 0.0
  %1019 = vmatpush1.xpose.msra.mxu0 %v483
  %1020 = vmatprep.subr.mxu0 0.0
  %1021 = vmatpush1.xpose.msra.mxu0 %v480
  %1022 = vmatprep.subr.mxu0 0.0
  %1023 = vmatpush1.xpose.msra.mxu0 %v477
  %1024 = vmatprep.subr.mxu0 0.0
  %1025 = vmatpush1.xpose.msra.mxu0 %v474
  %1026 = vmatprep.subr.mxu0 0.0
  %1027 = vmatpush1.xpose.msra.mxu0 %v471
  %1028 = vmatprep.subr.mxu0 0.0
  %1029 = vmatpush2.xpose.msra.mxu0 %v564
  %1030 = vmatprep.subr.mxu0 0.0
  %1031 = vmatpush2.xpose.msra.mxu0 %v561
  %1032 = vmatprep.subr.mxu0 0.0
  %1033 = vmatpush2.xpose.msra.mxu0 %v558
  %1034 = vmatprep.subr.mxu0 0.0
  %1035 = vmatpush2.xpose.msra.mxu0 %v555
  %1036 = vmatprep.subr.mxu0 0.0
  %1037 = vmatpush2.xpose.msra.mxu0 %v552
  %1038 = vmatprep.subr.mxu0 0.0
  %1039 = vmatpush2.xpose.msra.mxu0 %v549
  %1040 = vmatprep.subr.mxu0 0.0
  %1041 = vmatpush2.xpose.msra.mxu0 %v546
  %1042 = vmatprep.subr.mxu0 0.0
  %1043 = vmatpush2.xpose.msra.mxu0 %v543
  %1044 = vmatprep.subr.mxu0 0.0
  %1045 = vmatpush2.xpose.msra.mxu0 %v540
  %1046 = vmatprep.subr.mxu0 0.0
  %1047 = vmatpush2.xpose.msra.mxu0 %v537
  %1048 = vmatprep.subr.mxu0 0.0
  %1049 = vmatpush2.xpose.msra.mxu0 %v534
  %1050 = vmatprep.subr.mxu0 0.0
  %1051 = vmatpush2.xpose.msra.mxu0 %v531
  %1052 = vmatprep.subr.mxu0 0.0
  %1053 = vmatpush2.xpose.msra.mxu0 %v528
  %1054 = vmatprep.subr.mxu0 0.0
  %1055 = vmatpush2.xpose.msra.mxu0 %v525
  %1056 = vmatprep.subr.mxu0 0.0
  %1057 = vmatpush2.xpose.msra.mxu0 %v522
  %1058 = vmatprep.subr.mxu0 0.0
  %1059 = vmatpush2.xpose.msra.mxu0 %v519
  %1060 = vmatprep.mubr.f32.mxu0 0.0
  %1061 = vmatmul.mubr.f32.gmra.mxu0 %v276
  %v1062 = vpop.f32.mrf.mxu0
  %v1063 = vadd.f32 %v233, %v1062
  %v1064 = vpop.f32.mrf.mxu0
  %v1065 = vadd.f32 %v237, %v1064
  %1066 = vdwg.mxu0
  %1067 = vmatprep.subr.mxu0 0.0
  %1068 = vmatpush1.xpose.msra.mxu0 %v612
  %1069 = vmatprep.subr.mxu0 0.0
  %1070 = vmatpush1.xpose.msra.mxu0 %v609
  %1071 = vmatprep.subr.mxu0 0.0
  %1072 = vmatpush1.xpose.msra.mxu0 %v606
  %1073 = vmatprep.subr.mxu0 0.0
  %1074 = vmatpush1.xpose.msra.mxu0 %v603
  %1075 = vmatprep.subr.mxu0 0.0
  %1076 = vmatpush1.xpose.msra.mxu0 %v600
  %1077 = vmatprep.subr.mxu0 0.0
  %1078 = vmatpush1.xpose.msra.mxu0 %v597
  %1079 = vmatprep.subr.mxu0 0.0
  %1080 = vmatpush1.xpose.msra.mxu0 %v594
  %1081 = vmatprep.subr.mxu0 0.0
  %1082 = vmatpush1.xpose.msra.mxu0 %v591
  %1083 = vmatprep.subr.mxu0 0.0
  %1084 = vmatpush1.xpose.msra.mxu0 %v588
  %1085 = vmatprep.subr.mxu0 0.0
  %1086 = vmatpush1.xpose.msra.mxu0 %v585
  %1087 = vmatprep.subr.mxu0 0.0
  %1088 = vmatpush1.xpose.msra.mxu0 %v582
  %1089 = vmatprep.subr.mxu0 0.0
  %1090 = vmatpush1.xpose.msra.mxu0 %v579
  %1091 = vmatprep.subr.mxu0 0.0
  %1092 = vmatpush1.xpose.msra.mxu0 %v576
  %1093 = vmatprep.subr.mxu0 0.0
  %1094 = vmatpush1.xpose.msra.mxu0 %v573
  %1095 = vmatprep.subr.mxu0 0.0
  %1096 = vmatpush1.xpose.msra.mxu0 %v570
  %1097 = vmatprep.subr.mxu0 0.0
  %1098 = vmatpush1.xpose.msra.mxu0 %v567
  %1099 = vmatprep.subr.mxu0 0.0
  %1100 = vmatpush2.xpose.msra.mxu0 %v660
  %1101 = vmatprep.subr.mxu0 0.0
  %1102 = vmatpush2.xpose.msra.mxu0 %v657
  %1103 = vmatprep.subr.mxu0 0.0
  %1104 = vmatpush2.xpose.msra.mxu0 %v654
  %1105 = vmatprep.subr.mxu0 0.0
  %1106 = vmatpush2.xpose.msra.mxu0 %v651
  %1107 = vmatprep.subr.mxu0 0.0
  %1108 = vmatpush2.xpose.msra.mxu0 %v648
  %1109 = vmatprep.subr.mxu0 0.0
  %1110 = vmatpush2.xpose.msra.mxu0 %v645
  %1111 = vmatprep.subr.mxu0 0.0
  %1112 = vmatpush2.xpose.msra.mxu0 %v642
  %1113 = vmatprep.subr.mxu0 0.0
  %1114 = vmatpush2.xpose.msra.mxu0 %v639
  %1115 = vmatprep.subr.mxu0 0.0
  %1116 = vmatpush2.xpose.msra.mxu0 %v636
  %1117 = vmatprep.subr.mxu0 0.0
  %1118 = vmatpush2.xpose.msra.mxu0 %v633
  %1119 = vmatprep.subr.mxu0 0.0
  %1120 = vmatpush2.xpose.msra.mxu0 %v630
  %1121 = vmatprep.subr.mxu0 0.0
  %1122 = vmatpush2.xpose.msra.mxu0 %v627
  %1123 = vmatprep.subr.mxu0 0.0
  %1124 = vmatpush2.xpose.msra.mxu0 %v624
  %1125 = vmatprep.subr.mxu0 0.0
  %1126 = vmatpush2.xpose.msra.mxu0 %v621
  %1127 = vmatprep.subr.mxu0 0.0
  %1128 = vmatpush2.xpose.msra.mxu0 %v618
  %1129 = vmatprep.subr.mxu0 0.0
  %1130 = vmatpush2.xpose.msra.mxu0 %v615
  %1131 = vmatprep.mubr.f32.mxu0 0.0
  %1132 = vmatmul.mubr.f32.gmra.mxu0 %v276
  %v1133 = vpop.f32.mrf.mxu0
  %v1134 = vadd.f32 %v241, %v1133
  %v1135 = vpop.f32.mrf.mxu0
  %v1136 = vadd.f32 %v245, %v1135
  %1137 = vdwg.mxu0
  %1138 = vmatprep.subr.mxu0 0.0
  %1139 = vmatpush1.xpose.msra.mxu0 %v708
  %1140 = vmatprep.subr.mxu0 0.0
  %1141 = vmatpush1.xpose.msra.mxu0 %v705
  %1142 = vmatprep.subr.mxu0 0.0
  %1143 = vmatpush1.xpose.msra.mxu0 %v702
  %1144 = vmatprep.subr.mxu0 0.0
  %1145 = vmatpush1.xpose.msra.mxu0 %v699
  %1146 = vmatprep.subr.mxu0 0.0
  %1147 = vmatpush1.xpose.msra.mxu0 %v696
  %1148 = vmatprep.subr.mxu0 0.0
  %1149 = vmatpush1.xpose.msra.mxu0 %v693
  %1150 = vmatprep.subr.mxu0 0.0
  %1151 = vmatpush1.xpose.msra.mxu0 %v690
  %1152 = vmatprep.subr.mxu0 0.0
  %1153 = vmatpush1.xpose.msra.mxu0 %v687
  %1154 = vmatprep.subr.mxu0 0.0
  %1155 = vmatpush1.xpose.msra.mxu0 %v684
  %1156 = vmatprep.subr.mxu0 0.0
  %1157 = vmatpush1.xpose.msra.mxu0 %v681
  %1158 = vmatprep.subr.mxu0 0.0
  %1159 = vmatpush1.xpose.msra.mxu0 %v678
  %1160 = vmatprep.subr.mxu0 0.0
  %1161 = vmatpush1.xpose.msra.mxu0 %v675
  %1162 = vmatprep.subr.mxu0 0.0
  %1163 = vmatpush1.xpose.msra.mxu0 %v672
  %1164 = vmatprep.subr.mxu0 0.0
  %1165 = vmatpush1.xpose.msra.mxu0 %v669
  %1166 = vmatprep.subr.mxu0 0.0
  %1167 = vmatpush1.xpose.msra.mxu0 %v666
  %1168 = vmatprep.subr.mxu0 0.0
  %1169 = vmatpush1.xpose.msra.mxu0 %v663
  %1170 = vmatprep.subr.mxu0 0.0
  %1171 = vmatpush2.xpose.msra.mxu0 %v756
  %1172 = vmatprep.subr.mxu0 0.0
  %1173 = vmatpush2.xpose.msra.mxu0 %v753
  %1174 = vmatprep.subr.mxu0 0.0
  %1175 = vmatpush2.xpose.msra.mxu0 %v750
  %1176 = vmatprep.subr.mxu0 0.0
  %1177 = vmatpush2.xpose.msra.mxu0 %v747
  %1178 = vmatprep.subr.mxu0 0.0
  %1179 = vmatpush2.xpose.msra.mxu0 %v744
  %1180 = vmatprep.subr.mxu0 0.0
  %1181 = vmatpush2.xpose.msra.mxu0 %v741
  %1182 = vmatprep.subr.mxu0 0.0
  %1183 = vmatpush2.xpose.msra.mxu0 %v738
  %1184 = vmatprep.subr.mxu0 0.0
  %1185 = vmatpush2.xpose.msra.mxu0 %v735
  %1186 = vmatprep.subr.mxu0 0.0
  %1187 = vmatpush2.xpose.msra.mxu0 %v732
  %1188 = vmatprep.subr.mxu0 0.0
  %1189 = vmatpush2.xpose.msra.mxu0 %v729
  %1190 = vmatprep.subr.mxu0 0.0
  %1191 = vmatpush2.xpose.msra.mxu0 %v726
  %1192 = vmatprep.subr.mxu0 0.0
  %1193 = vmatpush2.xpose.msra.mxu0 %v723
  %1194 = vmatprep.subr.mxu0 0.0
  %1195 = vmatpush2.xpose.msra.mxu0 %v720
  %1196 = vmatprep.subr.mxu0 0.0
  %1197 = vmatpush2.xpose.msra.mxu0 %v717
  %1198 = vmatprep.subr.mxu0 0.0
  %1199 = vmatpush2.xpose.msra.mxu0 %v714
  %1200 = vmatprep.subr.mxu0 0.0
  %1201 = vmatpush2.xpose.msra.mxu0 %v711
  %1202 = vmatprep.mubr.f32.mxu0 0.0
  %1203 = vmatmul.mubr.f32.gmra.mxu0 %v276
  %v1204 = vpop.f32.mrf.mxu0
  %v1205 = vadd.f32 %v249, %v1204
  %v1206 = vpop.f32.mrf.mxu0
  %v1207 = vadd.f32 %v253, %v1206
  %1208 = vdwg.mxu0
  %1209 = vmatprep.subr.mxu0 0.0
  %1210 = vmatpush1.xpose.msra.mxu0 %v804
  %1211 = vmatprep.subr.mxu0 0.0
  %1212 = vmatpush1.xpose.msra.mxu0 %v801
  %1213 = vmatprep.subr.mxu0 0.0
  %1214 = vmatpush1.xpose.msra.mxu0 %v798
  %1215 = vmatprep.subr.mxu0 0.0
  %1216 = vmatpush1.xpose.msra.mxu0 %v795
  %1217 = vmatprep.subr.mxu0 0.0
  %1218 = vmatpush1.xpose.msra.mxu0 %v792
  %1219 = vmatprep.subr.mxu0 0.0
  %1220 = vmatpush1.xpose.msra.mxu0 %v789
  %1221 = vmatprep.subr.mxu0 0.0
  %1222 = vmatpush1.xpose.msra.mxu0 %v786
  %1223 = vmatprep.subr.mxu0 0.0
  %1224 = vmatpush1.xpose.msra.mxu0 %v783
  %1225 = vmatprep.subr.mxu0 0.0
  %1226 = vmatpush1.xpose.msra.mxu0 %v780
  %1227 = vmatprep.subr.mxu0 0.0
  %1228 = vmatpush1.xpose.msra.mxu0 %v777
  %1229 = vmatprep.subr.mxu0 0.0
  %1230 = vmatpush1.xpose.msra.mxu0 %v774
  %1231 = vmatprep.subr.mxu0 0.0
  %1232 = vmatpush1.xpose.msra.mxu0 %v771
  %1233 = vmatprep.subr.mxu0 0.0
  %1234 = vmatpush1.xpose.msra.mxu0 %v768
  %1235 = vmatprep.subr.mxu0 0.0
  %1236 = vmatpush1.xpose.msra.mxu0 %v765
  %1237 = vmatprep.subr.mxu0 0.0
  %1238 = vmatpush1.xpose.msra.mxu0 %v762
  %1239 = vmatprep.subr.mxu0 0.0
  %1240 = vmatpush1.xpose.msra.mxu0 %v759
  %1241 = vmatprep.subr.mxu0 0.0
  %1242 = vmatpush2.xpose.msra.mxu0 %v852
  %1243 = vmatprep.subr.mxu0 0.0
  %1244 = vmatpush2.xpose.msra.mxu0 %v849
  %1245 = vmatprep.subr.mxu0 0.0
  %1246 = vmatpush2.xpose.msra.mxu0 %v846
  %1247 = vmatprep.subr.mxu0 0.0
  %1248 = vmatpush2.xpose.msra.mxu0 %v843
  %1249 = vmatprep.subr.mxu0 0.0
  %1250 = vmatpush2.xpose.msra.mxu0 %v840
  %1251 = vmatprep.subr.mxu0 0.0
  %1252 = vmatpush2.xpose.msra.mxu0 %v837
  %1253 = vmatprep.subr.mxu0 0.0
  %1254 = vmatpush2.xpose.msra.mxu0 %v834
  %1255 = vmatprep.subr.mxu0 0.0
  %1256 = vmatpush2.xpose.msra.mxu0 %v831
  %1257 = vmatprep.subr.mxu0 0.0
  %1258 = vmatpush2.xpose.msra.mxu0 %v828
  %1259 = vmatprep.subr.mxu0 0.0
  %1260 = vmatpush2.xpose.msra.mxu0 %v825
  %1261 = vmatprep.subr.mxu0 0.0
  %1262 = vmatpush2.xpose.msra.mxu0 %v822
  %1263 = vmatprep.subr.mxu0 0.0
  %1264 = vmatpush2.xpose.msra.mxu0 %v819
  %1265 = vmatprep.subr.mxu0 0.0
  %1266 = vmatpush2.xpose.msra.mxu0 %v816
  %1267 = vmatprep.subr.mxu0 0.0
  %1268 = vmatpush2.xpose.msra.mxu0 %v813
  %1269 = vmatprep.subr.mxu0 0.0
  %1270 = vmatpush2.xpose.msra.mxu0 %v810
  %1271 = vmatprep.subr.mxu0 0.0
  %1272 = vmatpush2.xpose.msra.mxu0 %v807
  %1273 = vmatprep.mubr.f32.mxu0 0.0
  %1274 = vmatmul.mubr.f32.gmra.mxu0 %v276
  %v1275 = vpop.f32.mrf.mxu0
  %v1276 = vadd.f32 %v257, %v1275
  %v1277 = vpop.f32.mrf.mxu0
  %v1278 = vadd.f32 %v261, %v1277
  %1279 = vdwg.mxu0
  %v1280 = vxor.u32 %v921, 2147483648
  %v1281 = vxor.u32 %v923, 2147483648
  %v1282 = vxor.u32 %v992, 2147483648
  %v1283 = vxor.u32 %v994, 2147483648
  %v1284 = vxor.u32 %v1063, 2147483648
  %v1285 = vxor.u32 %v1065, 2147483648
  %v1286 = vxor.u32 %v1134, 2147483648
  %v1287 = vxor.u32 %v1136, 2147483648
  %v1288 = vxor.u32 %v1205, 2147483648
  %v1289 = vxor.u32 %v1207, 2147483648
  %v1290 = vxor.u32 %v1276, 2147483648
  %v1291 = vxor.u32 %v1278, 2147483648
  %v1292 = vmul.f32 %v1280, 1.442695
  %v1293 = vpow.pop %v1292
  %v1294 = vmul.f32 %v1281, 1.442695
  %v1295 = vpow.pop %v1294
  %v1296 = vmul.f32 %v1282, 1.442695
  %v1297 = vpow.pop %v1296
  %v1298 = vmul.f32 %v1283, 1.442695
  %v1299 = vpow.pop %v1298
  %v1300 = vmul.f32 %v1284, 1.442695
  %v1301 = vpow.pop %v1300
  %v1302 = vmul.f32 %v1285, 1.442695
  %v1303 = vpow.pop %v1302
  %v1304 = vmul.f32 %v1286, 1.442695
  %v1305 = vpow.pop %v1304
  %v1306 = vmul.f32 %v1287, 1.442695
  %v1307 = vpow.pop %v1306
  %v1308 = vmul.f32 %v1288, 1.442695
  %v1309 = vpow.pop %v1308
  %v1310 = vmul.f32 %v1289, 1.442695
  %v1311 = vpow.pop %v1310
  %v1312 = vmul.f32 %v1290, 1.442695
  %v1313 = vpow.pop %v1312
  %v1314 = vmul.f32 %v1291, 1.442695
  %v1315 = vpow.pop %v1314
  %v1316 = vadd.f32 %v1293, 1.0
  %v1317 = vadd.f32 %v1295, 1.0
  %v1318 = vadd.f32 %v1297, 1.0
  %v1319 = vadd.f32 %v1299, 1.0
  %v1320 = vadd.f32 %v1301, 1.0
  %v1321 = vadd.f32 %v1303, 1.0
  %v1322 = vadd.f32 %v1305, 1.0
  %v1323 = vadd.f32 %v1307, 1.0
  %v1324 = vadd.f32 %v1309, 1.0
  %v1325 = vadd.f32 %v1311, 1.0
  %v1326 = vadd.f32 %v1313, 1.0
  %v1327 = vadd.f32 %v1315, 1.0
  %v1328 = vrcp.pop %v1316
  %v1329 = vmul.f32 1.0, %v1328
  %v1330 = vrcp.pop %v1317
  %v1331 = vmul.f32 1.0, %v1330
  %v1332 = vrcp.pop %v1318
  %v1333 = vmul.f32 1.0, %v1332
  %v1334 = vrcp.pop %v1319
  %v1335 = vmul.f32 1.0, %v1334
  %v1336 = vrcp.pop %v1320
  %v1337 = vmul.f32 1.0, %v1336
  %v1338 = vrcp.pop %v1321
  %v1339 = vmul.f32 1.0, %v1338
  %v1340 = vrcp.pop %v1322
  %v1341 = vmul.f32 1.0, %v1340
  %v1342 = vrcp.pop %v1323
  %v1343 = vmul.f32 1.0, %v1342
  %v1344 = vrcp.pop %v1324
  %v1345 = vmul.f32 1.0, %v1344
  %v1346 = vrcp.pop %v1325
  %v1347 = vmul.f32 1.0, %v1346
  %v1348 = vrcp.pop %v1326
  %v1349 = vmul.f32 1.0, %v1348
  %v1350 = vrcp.pop %v1327
  %v1351 = vmul.f32 1.0, %v1350
  %v1352 = vlaneseq
  %v1353 = vshrl.u32 %v1352, 7
  %v1354 = vadd.s32 %v1353, 8
  %v1355 = vadd.s32 %v1353, 16
  %v1356 = vadd.s32 %v1353, 24
  %v1357 = vadd.s32 %v1353, 32
  %v1358 = vadd.s32 %v1353, 40
  %v1359 = vadd.s32 %v1353, 48
  %v1360 = vadd.s32 %v1353, 56
  %v1361 = vadd.s32 %v1353, 64
  %v1362 = vadd.s32 %v1353, 72
  %v1363 = vadd.s32 %v1353, 80
  %v1364 = vadd.s32 %v1353, 88
  %v1365 = vadd.s32 %v1353, 96
  %v1366 = vadd.s32 %v1353, 104
  %v1367 = vadd.s32 %v1353, 112
  %v1368 = vadd.s32 %v1353, 120
  %v1369 = vlaneseq
  %v1370 = vand.u32 %v1369, 127
  %vm1371 = vcmp.eq.s32.totalorder %v1353, %v1370
  %vm1372 = vcmp.eq.s32.totalorder %v1354, %v1370
  %vm1373 = vcmp.eq.s32.totalorder %v1355, %v1370
  %vm1374 = vcmp.eq.s32.totalorder %v1356, %v1370
  %vm1375 = vcmp.eq.s32.totalorder %v1357, %v1370
  %vm1376 = vcmp.eq.s32.totalorder %v1358, %v1370
  %vm1377 = vcmp.eq.s32.totalorder %v1359, %v1370
  %vm1378 = vcmp.eq.s32.totalorder %v1360, %v1370
  %vm1379 = vcmp.eq.s32.totalorder %v1361, %v1370
  %vm1380 = vcmp.eq.s32.totalorder %v1362, %v1370
  %vm1381 = vcmp.eq.s32.totalorder %v1363, %v1370
  %vm1382 = vcmp.eq.s32.totalorder %v1364, %v1370
  %vm1383 = vcmp.eq.s32.totalorder %v1365, %v1370
  %vm1384 = vcmp.eq.s32.totalorder %v1366, %v1370
  %vm1385 = vcmp.eq.s32.totalorder %v1367, %v1370
  %vm1386 = vcmp.eq.s32.totalorder %v1368, %v1370
  %v1387 = vsel %vm1371, 1, 0
  %v1388 = vsel %vm1372, 1, 0
  %v1389 = vsel %vm1373, 1, 0
  %v1390 = vsel %vm1374, 1, 0
  %v1391 = vsel %vm1375, 1, 0
  %v1392 = vsel %vm1376, 1, 0
  %v1393 = vsel %vm1377, 1, 0
  %v1394 = vsel %vm1378, 1, 0
  %v1395 = vsel %vm1379, 1, 0
  %v1396 = vsel %vm1380, 1, 0
  %v1397 = vsel %vm1381, 1, 0
  %v1398 = vsel %vm1382, 1, 0
  %v1399 = vsel %vm1383, 1, 0
  %v1400 = vsel %vm1384, 1, 0
  %v1401 = vsel %vm1385, 1, 0
  %v1402 = vsel %vm1386, 1, 0
  %v1403 = vcvt.s32.f32 %v1387
  %v1404 = vcvt.s32.f32 %v1388
  %v1405 = vcvt.s32.f32 %v1389
  %v1406 = vcvt.s32.f32 %v1390
  %v1407 = vcvt.s32.f32 %v1391
  %v1408 = vcvt.s32.f32 %v1392
  %v1409 = vcvt.s32.f32 %v1393
  %v1410 = vcvt.s32.f32 %v1394
  %v1411 = vcvt.s32.f32 %v1395
  %v1412 = vcvt.s32.f32 %v1396
  %v1413 = vcvt.s32.f32 %v1397
  %v1414 = vcvt.s32.f32 %v1398
  %v1415 = vcvt.s32.f32 %v1399
  %v1416 = vcvt.s32.f32 %v1400
  %v1417 = vcvt.s32.f32 %v1401
  %v1418 = vcvt.s32.f32 %v1402
  %v1419 = vlaneseq
  %v1420 = vshrl.u32 %v1419, 7
  %v1421 = vsub.s32 0, %v1420
  %v1422 = vrot.slane %v1329, %v1421
  %v1423 = vmul.f32 %v1403, %v1422
  %v1424 = vmul.f32 %v1404, %v1422
  %v1425 = vmul.f32 %v1405, %v1422
  %v1426 = vmul.f32 %v1406, %v1422
  %v1427 = vmul.f32 %v1407, %v1422
  %v1428 = vmul.f32 %v1408, %v1422
  %v1429 = vmul.f32 %v1409, %v1422
  %v1430 = vmul.f32 %v1410, %v1422
  %v1431 = vmul.f32 %v1411, %v1422
  %v1432 = vmul.f32 %v1412, %v1422
  %v1433 = vmul.f32 %v1413, %v1422
  %v1434 = vmul.f32 %v1414, %v1422
  %v1435 = vmul.f32 %v1415, %v1422
  %v1436 = vmul.f32 %v1416, %v1422
  %v1437 = vmul.f32 %v1417, %v1422
  %v1438 = vmul.f32 %v1418, %v1422
  %1439 = vadd.xlane.f32.xlu0 %v1423
  %v1440 = vpop.xlane.xlu0 %1439
  %1441 = vadd.xlane.f32.xlu0 %v1424
  %v1442 = vpop.xlane.xlu0 %1441
  %1443 = vadd.xlane.f32.xlu0 %v1425
  %v1444 = vpop.xlane.xlu0 %1443
  %1445 = vadd.xlane.f32.xlu0 %v1426
  %v1446 = vpop.xlane.xlu0 %1445
  %1447 = vadd.xlane.f32.xlu0 %v1427
  %v1448 = vpop.xlane.xlu0 %1447
  %1449 = vadd.xlane.f32.xlu0 %v1428
  %v1450 = vpop.xlane.xlu0 %1449
  %1451 = vadd.xlane.f32.xlu0 %v1429
  %v1452 = vpop.xlane.xlu0 %1451
  %1453 = vadd.xlane.f32.xlu0 %v1430
  %v1454 = vpop.xlane.xlu0 %1453
  %1455 = vadd.xlane.f32.xlu0 %v1431
  %v1456 = vpop.xlane.xlu0 %1455
  %1457 = vadd.xlane.f32.xlu0 %v1432
  %v1458 = vpop.xlane.xlu0 %1457
  %1459 = vadd.xlane.f32.xlu0 %v1433
  %v1460 = vpop.xlane.xlu0 %1459
  %1461 = vadd.xlane.f32.xlu0 %v1434
  %v1462 = vpop.xlane.xlu0 %1461
  %1463 = vadd.xlane.f32.xlu0 %v1435
  %v1464 = vpop.xlane.xlu0 %1463
  %1465 = vadd.xlane.f32.xlu0 %v1436
  %v1466 = vpop.xlane.xlu0 %1465
  %1467 = vadd.xlane.f32.xlu0 %v1437
  %v1468 = vpop.xlane.xlu0 %1467
  %1469 = vadd.xlane.f32.xlu0 %v1438
  %v1470 = vpop.xlane.xlu0 %1469
  %vm1471 = vcmask 7168
  %1472 = vst.msk [vmem:[#allocation2] sm:$0xff] %vm1471, %v1440
  %1473 = vst.msk [vmem:[#allocation2 + $0x8] sm:$0xff] %vm1471, %v1442
  %1474 = vst.msk [vmem:[#allocation2 + $0x10] sm:$0xff] %vm1471, %v1444
  %1475 = vst.msk [vmem:[#allocation2 + $0x18] sm:$0xff] %vm1471, %v1446
  %1476 = vst.msk [vmem:[#allocation2 + $0x20] sm:$0xff] %vm1471, %v1448
  %1477 = vst.msk [vmem:[#allocation2 + $0x28] sm:$0xff] %vm1471, %v1450
  %1478 = vst.msk [vmem:[#allocation2 + $0x30] sm:$0xff] %vm1471, %v1452
  %1479 = vst.msk [vmem:[#allocation2 + $0x38] sm:$0xff] %vm1471, %v1454
  %1480 = vst.msk [vmem:[#allocation2 + $0x40] sm:$0xff] %vm1471, %v1456
  %1481 = vst.msk [vmem:[#allocation2 + $0x48] sm:$0xff] %vm1471, %v1458
  %1482 = vst.msk [vmem:[#allocation2 + $0x50] sm:$0xff] %vm1471, %v1460
  %1483 = vst.msk [vmem:[#allocation2 + $0x58] sm:$0xff] %vm1471, %v1462
  %1484 = vst.msk [vmem:[#allocation2 + $0x60] sm:$0xff] %vm1471, %v1464
  %1485 = vst.msk [vmem:[#allocation2 + $0x68] sm:$0xff] %vm1471, %v1466
  %1486 = vst.msk [vmem:[#allocation2 + $0x70] sm:$0xff] %vm1471, %v1468
  %1487 = vst.msk [vmem:[#allocation2 + $0x78] sm:$0xff] %vm1471, %v1470
  %v1488 = vlaneseq
  %v1489 = vshrl.u32 %v1488, 7
  %v1490 = vsub.s32 0, %v1489
  %v1491 = vrot.slane %v1331, %v1490
  %v1492 = vmul.f32 %v1403, %v1491
  %v1493 = vmul.f32 %v1404, %v1491
  %v1494 = vmul.f32 %v1405, %v1491
  %v1495 = vmul.f32 %v1406, %v1491
  %v1496 = vmul.f32 %v1407, %v1491
  %v1497 = vmul.f32 %v1408, %v1491
  %v1498 = vmul.f32 %v1409, %v1491
  %v1499 = vmul.f32 %v1410, %v1491
  %v1500 = vmul.f32 %v1411, %v1491
  %v1501 = vmul.f32 %v1412, %v1491
  %v1502 = vmul.f32 %v1413, %v1491
  %v1503 = vmul.f32 %v1414, %v1491
  %v1504 = vmul.f32 %v1415, %v1491
  %v1505 = vmul.f32 %v1416, %v1491
  %v1506 = vmul.f32 %v1417, %v1491
  %v1507 = vmul.f32 %v1418, %v1491
  %1508 = vadd.xlane.f32.xlu0 %v1492
  %v1509 = vpop.xlane.xlu0 %1508
  %1510 = vadd.xlane.f32.xlu0 %v1493
  %v1511 = vpop.xlane.xlu0 %1510
  %1512 = vadd.xlane.f32.xlu0 %v1494
  %v1513 = vpop.xlane.xlu0 %1512
  %1514 = vadd.xlane.f32.xlu0 %v1495
  %v1515 = vpop.xlane.xlu0 %1514
  %1516 = vadd.xlane.f32.xlu0 %v1496
  %v1517 = vpop.xlane.xlu0 %1516
  %1518 = vadd.xlane.f32.xlu0 %v1497
  %v1519 = vpop.xlane.xlu0 %1518
  %1520 = vadd.xlane.f32.xlu0 %v1498
  %v1521 = vpop.xlane.xlu0 %1520
  %1522 = vadd.xlane.f32.xlu0 %v1499
  %v1523 = vpop.xlane.xlu0 %1522
  %1524 = vadd.xlane.f32.xlu0 %v1500
  %v1525 = vpop.xlane.xlu0 %1524
  %1526 = vadd.xlane.f32.xlu0 %v1501
  %v1527 = vpop.xlane.xlu0 %1526
  %1528 = vadd.xlane.f32.xlu0 %v1502
  %v1529 = vpop.xlane.xlu0 %1528
  %1530 = vadd.xlane.f32.xlu0 %v1503
  %v1531 = vpop.xlane.xlu0 %1530
  %1532 = vadd.xlane.f32.xlu0 %v1504
  %v1533 = vpop.xlane.xlu0 %1532
  %1534 = vadd.xlane.f32.xlu0 %v1505
  %v1535 = vpop.xlane.xlu0 %1534
  %1536 = vadd.xlane.f32.xlu0 %v1506
  %v1537 = vpop.xlane.xlu0 %1536
  %1538 = vadd.xlane.f32.xlu0 %v1507
  %v1539 = vpop.xlane.xlu0 %1538
  %1540 = vst.msk [vmem:[#allocation2 + $0x80] sm:$0xff] %vm1471, %v1509
  %1541 = vst.msk [vmem:[#allocation2 + $0x88] sm:$0xff] %vm1471, %v1511
  %1542 = vst.msk [vmem:[#allocation2 + $0x90] sm:$0xff] %vm1471, %v1513
  %1543 = vst.msk [vmem:[#allocation2 + $0x98] sm:$0xff] %vm1471, %v1515
  %1544 = vst.msk [vmem:[#allocation2 + $0xa0] sm:$0xff] %vm1471, %v1517
  %1545 = vst.msk [vmem:[#allocation2 + $0xa8] sm:$0xff] %vm1471, %v1519
  %1546 = vst.msk [vmem:[#allocation2 + $0xb0] sm:$0xff] %vm1471, %v1521
  %1547 = vst.msk [vmem:[#allocation2 + $0xb8] sm:$0xff] %vm1471, %v1523
  %1548 = vst.msk [vmem:[#allocation2 + $0xc0] sm:$0xff] %vm1471, %v1525
  %1549 = vst.msk [vmem:[#allocation2 + $0xc8] sm:$0xff] %vm1471, %v1527
  %1550 = vst.msk [vmem:[#allocation2 + $0xd0] sm:$0xff] %vm1471, %v1529
  %1551 = vst.msk [vmem:[#allocation2 + $0xd8] sm:$0xff] %vm1471, %v1531
  %1552 = vst.msk [vmem:[#allocation2 + $0xe0] sm:$0xff] %vm1471, %v1533
  %1553 = vst.msk [vmem:[#allocation2 + $0xe8] sm:$0xff] %vm1471, %v1535
  %1554 = vst.msk [vmem:[#allocation2 + $0xf0] sm:$0xff] %vm1471, %v1537
  %1555 = vst.msk [vmem:[#allocation2 + $0xf8] sm:$0xff] %vm1471, %v1539
  %v1556 = vlaneseq
  %v1557 = vshrl.u32 %v1556, 7
  %v1558 = vsub.s32 0, %v1557
  %v1559 = vrot.slane %v1333, %v1558
  %v1560 = vmul.f32 %v1403, %v1559
  %v1561 = vmul.f32 %v1404, %v1559
  %v1562 = vmul.f32 %v1405, %v1559
  %v1563 = vmul.f32 %v1406, %v1559
  %v1564 = vmul.f32 %v1407, %v1559
  %v1565 = vmul.f32 %v1408, %v1559
  %v1566 = vmul.f32 %v1409, %v1559
  %v1567 = vmul.f32 %v1410, %v1559
  %v1568 = vmul.f32 %v1411, %v1559
  %v1569 = vmul.f32 %v1412, %v1559
  %v1570 = vmul.f32 %v1413, %v1559
  %v1571 = vmul.f32 %v1414, %v1559
  %v1572 = vmul.f32 %v1415, %v1559
  %v1573 = vmul.f32 %v1416, %v1559
  %v1574 = vmul.f32 %v1417, %v1559
  %v1575 = vmul.f32 %v1418, %v1559
  %1576 = vadd.xlane.f32.xlu0 %v1560
  %v1577 = vpop.xlane.xlu0 %1576
  %1578 = vadd.xlane.f32.xlu0 %v1561
  %v1579 = vpop.xlane.xlu0 %1578
  %1580 = vadd.xlane.f32.xlu0 %v1562
  %v1581 = vpop.xlane.xlu0 %1580
  %1582 = vadd.xlane.f32.xlu0 %v1563
  %v1583 = vpop.xlane.xlu0 %1582
  %1584 = vadd.xlane.f32.xlu0 %v1564
  %v1585 = vpop.xlane.xlu0 %1584
  %1586 = vadd.xlane.f32.xlu0 %v1565
  %v1587 = vpop.xlane.xlu0 %1586
  %1588 = vadd.xlane.f32.xlu0 %v1566
  %v1589 = vpop.xlane.xlu0 %1588
  %1590 = vadd.xlane.f32.xlu0 %v1567
  %v1591 = vpop.xlane.xlu0 %1590
  %1592 = vadd.xlane.f32.xlu0 %v1568
  %v1593 = vpop.xlane.xlu0 %1592
  %1594 = vadd.xlane.f32.xlu0 %v1569
  %v1595 = vpop.xlane.xlu0 %1594
  %1596 = vadd.xlane.f32.xlu0 %v1570
  %v1597 = vpop.xlane.xlu0 %1596
  %1598 = vadd.xlane.f32.xlu0 %v1571
  %v1599 = vpop.xlane.xlu0 %1598
  %1600 = vadd.xlane.f32.xlu0 %v1572
  %v1601 = vpop.xlane.xlu0 %1600
  %1602 = vadd.xlane.f32.xlu0 %v1573
  %v1603 = vpop.xlane.xlu0 %1602
  %1604 = vadd.xlane.f32.xlu0 %v1574
  %v1605 = vpop.xlane.xlu0 %1604
  %1606 = vadd.xlane.f32.xlu0 %v1575
  %v1607 = vpop.xlane.xlu0 %1606
  %1608 = vst.msk [vmem:[#allocation2 + $0x100] sm:$0xff] %vm1471, %v1577
  %1609 = vst.msk [vmem:[#allocation2 + $0x108] sm:$0xff] %vm1471, %v1579
  %1610 = vst.msk [vmem:[#allocation2 + $0x110] sm:$0xff] %vm1471, %v1581
  %1611 = vst.msk [vmem:[#allocation2 + $0x118] sm:$0xff] %vm1471, %v1583
  %1612 = vst.msk [vmem:[#allocation2 + $0x120] sm:$0xff] %vm1471, %v1585
  %1613 = vst.msk [vmem:[#allocation2 + $0x128] sm:$0xff] %vm1471, %v1587
  %1614 = vst.msk [vmem:[#allocation2 + $0x130] sm:$0xff] %vm1471, %v1589
  %1615 = vst.msk [vmem:[#allocation2 + $0x138] sm:$0xff] %vm1471, %v1591
  %1616 = vst.msk [vmem:[#allocation2 + $0x140] sm:$0xff] %vm1471, %v1593
  %1617 = vst.msk [vmem:[#allocation2 + $0x148] sm:$0xff] %vm1471, %v1595
  %1618 = vst.msk [vmem:[#allocation2 + $0x150] sm:$0xff] %vm1471, %v1597
  %1619 = vst.msk [vmem:[#allocation2 + $0x158] sm:$0xff] %vm1471, %v1599
  %1620 = vst.msk [vmem:[#allocation2 + $0x160] sm:$0xff] %vm1471, %v1601
  %1621 = vst.msk [vmem:[#allocation2 + $0x168] sm:$0xff] %vm1471, %v1603
  %1622 = vst.msk [vmem:[#allocation2 + $0x170] sm:$0xff] %vm1471, %v1605
  %1623 = vst.msk [vmem:[#allocation2 + $0x178] sm:$0xff] %vm1471, %v1607
  %v1624 = vlaneseq
  %v1625 = vshrl.u32 %v1624, 7
  %v1626 = vsub.s32 0, %v1625
  %v1627 = vrot.slane %v1335, %v1626
  %v1628 = vmul.f32 %v1403, %v1627
  %v1629 = vmul.f32 %v1404, %v1627
  %v1630 = vmul.f32 %v1405, %v1627
  %v1631 = vmul.f32 %v1406, %v1627
  %v1632 = vmul.f32 %v1407, %v1627
  %v1633 = vmul.f32 %v1408, %v1627
  %v1634 = vmul.f32 %v1409, %v1627
  %v1635 = vmul.f32 %v1410, %v1627
  %v1636 = vmul.f32 %v1411, %v1627
  %v1637 = vmul.f32 %v1412, %v1627
  %v1638 = vmul.f32 %v1413, %v1627
  %v1639 = vmul.f32 %v1414, %v1627
  %v1640 = vmul.f32 %v1415, %v1627
  %v1641 = vmul.f32 %v1416, %v1627
  %v1642 = vmul.f32 %v1417, %v1627
  %v1643 = vmul.f32 %v1418, %v1627
  %1644 = vadd.xlane.f32.xlu0 %v1628
  %v1645 = vpop.xlane.xlu0 %1644
  %1646 = vadd.xlane.f32.xlu0 %v1629
  %v1647 = vpop.xlane.xlu0 %1646
  %1648 = vadd.xlane.f32.xlu0 %v1630
  %v1649 = vpop.xlane.xlu0 %1648
  %1650 = vadd.xlane.f32.xlu0 %v1631
  %v1651 = vpop.xlane.xlu0 %1650
  %1652 = vadd.xlane.f32.xlu0 %v1632
  %v1653 = vpop.xlane.xlu0 %1652
  %1654 = vadd.xlane.f32.xlu0 %v1633
  %v1655 = vpop.xlane.xlu0 %1654
  %1656 = vadd.xlane.f32.xlu0 %v1634
  %v1657 = vpop.xlane.xlu0 %1656
  %1658 = vadd.xlane.f32.xlu0 %v1635
  %v1659 = vpop.xlane.xlu0 %1658
  %1660 = vadd.xlane.f32.xlu0 %v1636
  %v1661 = vpop.xlane.xlu0 %1660
  %1662 = vadd.xlane.f32.xlu0 %v1637
  %v1663 = vpop.xlane.xlu0 %1662
  %1664 = vadd.xlane.f32.xlu0 %v1638
  %v1665 = vpop.xlane.xlu0 %1664
  %1666 = vadd.xlane.f32.xlu0 %v1639
  %v1667 = vpop.xlane.xlu0 %1666
  %1668 = vadd.xlane.f32.xlu0 %v1640
  %v1669 = vpop.xlane.xlu0 %1668
  %1670 = vadd.xlane.f32.xlu0 %v1641
  %v1671 = vpop.xlane.xlu0 %1670
  %1672 = vadd.xlane.f32.xlu0 %v1642
  %v1673 = vpop.xlane.xlu0 %1672
  %1674 = vadd.xlane.f32.xlu0 %v1643
  %v1675 = vpop.xlane.xlu0 %1674
  %1676 = vst.msk [vmem:[#allocation2 + $0x180] sm:$0xff] %vm1471, %v1645
  %1677 = vst.msk [vmem:[#allocation2 + $0x188] sm:$0xff] %vm1471, %v1647
  %1678 = vst.msk [vmem:[#allocation2 + $0x190] sm:$0xff] %vm1471, %v1649
  %1679 = vst.msk [vmem:[#allocation2 + $0x198] sm:$0xff] %vm1471, %v1651
  %1680 = vst.msk [vmem:[#allocation2 + $0x1a0] sm:$0xff] %vm1471, %v1653
  %1681 = vst.msk [vmem:[#allocation2 + $0x1a8] sm:$0xff] %vm1471, %v1655
  %1682 = vst.msk [vmem:[#allocation2 + $0x1b0] sm:$0xff] %vm1471, %v1657
  %1683 = vst.msk [vmem:[#allocation2 + $0x1b8] sm:$0xff] %vm1471, %v1659
  %1684 = vst.msk [vmem:[#allocation2 + $0x1c0] sm:$0xff] %vm1471, %v1661
  %1685 = vst.msk [vmem:[#allocation2 + $0x1c8] sm:$0xff] %vm1471, %v1663
  %1686 = vst.msk [vmem:[#allocation2 + $0x1d0] sm:$0xff] %vm1471, %v1665
  %1687 = vst.msk [vmem:[#allocation2 + $0x1d8] sm:$0xff] %vm1471, %v1667
  %1688 = vst.msk [vmem:[#allocation2 + $0x1e0] sm:$0xff] %vm1471, %v1669
  %1689 = vst.msk [vmem:[#allocation2 + $0x1e8] sm:$0xff] %vm1471, %v1671
  %1690 = vst.msk [vmem:[#allocation2 + $0x1f0] sm:$0xff] %vm1471, %v1673
  %1691 = vst.msk [vmem:[#allocation2 + $0x1f8] sm:$0xff] %vm1471, %v1675
  %v1692 = vlaneseq
  %v1693 = vshrl.u32 %v1692, 7
  %v1694 = vsub.s32 0, %v1693
  %v1695 = vrot.slane %v1337, %v1694
  %v1696 = vmul.f32 %v1403, %v1695
  %v1697 = vmul.f32 %v1404, %v1695
  %v1698 = vmul.f32 %v1405, %v1695
  %v1699 = vmul.f32 %v1406, %v1695
  %v1700 = vmul.f32 %v1407, %v1695
  %v1701 = vmul.f32 %v1408, %v1695
  %v1702 = vmul.f32 %v1409, %v1695
  %v1703 = vmul.f32 %v1410, %v1695
  %v1704 = vmul.f32 %v1411, %v1695
  %v1705 = vmul.f32 %v1412, %v1695
  %v1706 = vmul.f32 %v1413, %v1695
  %v1707 = vmul.f32 %v1414, %v1695
  %v1708 = vmul.f32 %v1415, %v1695
  %v1709 = vmul.f32 %v1416, %v1695
  %v1710 = vmul.f32 %v1417, %v1695
  %v1711 = vmul.f32 %v1418, %v1695
  %1712 = vadd.xlane.f32.xlu0 %v1696
  %v1713 = vpop.xlane.xlu0 %1712
  %1714 = vadd.xlane.f32.xlu0 %v1697
  %v1715 = vpop.xlane.xlu0 %1714
  %1716 = vadd.xlane.f32.xlu0 %v1698
  %v1717 = vpop.xlane.xlu0 %1716
  %1718 = vadd.xlane.f32.xlu0 %v1699
  %v1719 = vpop.xlane.xlu0 %1718
  %1720 = vadd.xlane.f32.xlu0 %v1700
  %v1721 = vpop.xlane.xlu0 %1720
  %1722 = vadd.xlane.f32.xlu0 %v1701
  %v1723 = vpop.xlane.xlu0 %1722
  %1724 = vadd.xlane.f32.xlu0 %v1702
  %v1725 = vpop.xlane.xlu0 %1724
  %1726 = vadd.xlane.f32.xlu0 %v1703
  %v1727 = vpop.xlane.xlu0 %1726
  %1728 = vadd.xlane.f32.xlu0 %v1704
  %v1729 = vpop.xlane.xlu0 %1728
  %1730 = vadd.xlane.f32.xlu0 %v1705
  %v1731 = vpop.xlane.xlu0 %1730
  %1732 = vadd.xlane.f32.xlu0 %v1706
  %v1733 = vpop.xlane.xlu0 %1732
  %1734 = vadd.xlane.f32.xlu0 %v1707
  %v1735 = vpop.xlane.xlu0 %1734
  %1736 = vadd.xlane.f32.xlu0 %v1708
  %v1737 = vpop.xlane.xlu0 %1736
  %1738 = vadd.xlane.f32.xlu0 %v1709
  %v1739 = vpop.xlane.xlu0 %1738
  %1740 = vadd.xlane.f32.xlu0 %v1710
  %v1741 = vpop.xlane.xlu0 %1740
  %1742 = vadd.xlane.f32.xlu0 %v1711
  %v1743 = vpop.xlane.xlu0 %1742
  %1744 = vst.msk [vmem:[#allocation2 + $0x200] sm:$0xff] %vm1471, %v1713
  %1745 = vst.msk [vmem:[#allocation2 + $0x208] sm:$0xff] %vm1471, %v1715
  %1746 = vst.msk [vmem:[#allocation2 + $0x210] sm:$0xff] %vm1471, %v1717
  %1747 = vst.msk [vmem:[#allocation2 + $0x218] sm:$0xff] %vm1471, %v1719
  %1748 = vst.msk [vmem:[#allocation2 + $0x220] sm:$0xff] %vm1471, %v1721
  %1749 = vst.msk [vmem:[#allocation2 + $0x228] sm:$0xff] %vm1471, %v1723
  %1750 = vst.msk [vmem:[#allocation2 + $0x230] sm:$0xff] %vm1471, %v1725
  %1751 = vst.msk [vmem:[#allocation2 + $0x238] sm:$0xff] %vm1471, %v1727
  %1752 = vst.msk [vmem:[#allocation2 + $0x240] sm:$0xff] %vm1471, %v1729
  %1753 = vst.msk [vmem:[#allocation2 + $0x248] sm:$0xff] %vm1471, %v1731
  %1754 = vst.msk [vmem:[#allocation2 + $0x250] sm:$0xff] %vm1471, %v1733
  %1755 = vst.msk [vmem:[#allocation2 + $0x258] sm:$0xff] %vm1471, %v1735
  %1756 = vst.msk [vmem:[#allocation2 + $0x260] sm:$0xff] %vm1471, %v1737
  %1757 = vst.msk [vmem:[#allocation2 + $0x268] sm:$0xff] %vm1471, %v1739
  %1758 = vst.msk [vmem:[#allocation2 + $0x270] sm:$0xff] %vm1471, %v1741
  %1759 = vst.msk [vmem:[#allocation2 + $0x278] sm:$0xff] %vm1471, %v1743
  %v1760 = vlaneseq
  %v1761 = vshrl.u32 %v1760, 7
  %v1762 = vsub.s32 0, %v1761
  %v1763 = vrot.slane %v1339, %v1762
  %v1764 = vmul.f32 %v1403, %v1763
  %v1765 = vmul.f32 %v1404, %v1763
  %v1766 = vmul.f32 %v1405, %v1763
  %v1767 = vmul.f32 %v1406, %v1763
  %v1768 = vmul.f32 %v1407, %v1763
  %v1769 = vmul.f32 %v1408, %v1763
  %v1770 = vmul.f32 %v1409, %v1763
  %v1771 = vmul.f32 %v1410, %v1763
  %v1772 = vmul.f32 %v1411, %v1763
  %v1773 = vmul.f32 %v1412, %v1763
  %v1774 = vmul.f32 %v1413, %v1763
  %v1775 = vmul.f32 %v1414, %v1763
  %v1776 = vmul.f32 %v1415, %v1763
  %v1777 = vmul.f32 %v1416, %v1763
  %v1778 = vmul.f32 %v1417, %v1763
  %v1779 = vmul.f32 %v1418, %v1763
  %1780 = vadd.xlane.f32.xlu0 %v1764
  %v1781 = vpop.xlane.xlu0 %1780
  %1782 = vadd.xlane.f32.xlu0 %v1765
  %v1783 = vpop.xlane.xlu0 %1782
  %1784 = vadd.xlane.f32.xlu0 %v1766
  %v1785 = vpop.xlane.xlu0 %1784
  %1786 = vadd.xlane.f32.xlu0 %v1767
  %v1787 = vpop.xlane.xlu0 %1786
  %1788 = vadd.xlane.f32.xlu0 %v1768
  %v1789 = vpop.xlane.xlu0 %1788
  %1790 = vadd.xlane.f32.xlu0 %v1769
  %v1791 = vpop.xlane.xlu0 %1790
  %1792 = vadd.xlane.f32.xlu0 %v1770
  %v1793 = vpop.xlane.xlu0 %1792
  %1794 = vadd.xlane.f32.xlu0 %v1771
  %v1795 = vpop.xlane.xlu0 %1794
  %1796 = vadd.xlane.f32.xlu0 %v1772
  %v1797 = vpop.xlane.xlu0 %1796
  %1798 = vadd.xlane.f32.xlu0 %v1773
  %v1799 = vpop.xlane.xlu0 %1798
  %1800 = vadd.xlane.f32.xlu0 %v1774
  %v1801 = vpop.xlane.xlu0 %1800
  %1802 = vadd.xlane.f32.xlu0 %v1775
  %v1803 = vpop.xlane.xlu0 %1802
  %1804 = vadd.xlane.f32.xlu0 %v1776
  %v1805 = vpop.xlane.xlu0 %1804
  %1806 = vadd.xlane.f32.xlu0 %v1777
  %v1807 = vpop.xlane.xlu0 %1806
  %1808 = vadd.xlane.f32.xlu0 %v1778
  %v1809 = vpop.xlane.xlu0 %1808
  %1810 = vadd.xlane.f32.xlu0 %v1779
  %v1811 = vpop.xlane.xlu0 %1810
  %1812 = vst.msk [vmem:[#allocation2 + $0x280] sm:$0xff] %vm1471, %v1781
  %1813 = vst.msk [vmem:[#allocation2 + $0x288] sm:$0xff] %vm1471, %v1783
  %1814 = vst.msk [vmem:[#allocation2 + $0x290] sm:$0xff] %vm1471, %v1785
  %1815 = vst.msk [vmem:[#allocation2 + $0x298] sm:$0xff] %vm1471, %v1787
  %1816 = vst.msk [vmem:[#allocation2 + $0x2a0] sm:$0xff] %vm1471, %v1789
  %1817 = vst.msk [vmem:[#allocation2 + $0x2a8] sm:$0xff] %vm1471, %v1791
  %1818 = vst.msk [vmem:[#allocation2 + $0x2b0] sm:$0xff] %vm1471, %v1793
  %1819 = vst.msk [vmem:[#allocation2 + $0x2b8] sm:$0xff] %vm1471, %v1795
  %1820 = vst.msk [vmem:[#allocation2 + $0x2c0] sm:$0xff] %vm1471, %v1797
  %1821 = vst.msk [vmem:[#allocation2 + $0x2c8] sm:$0xff] %vm1471, %v1799
  %1822 = vst.msk [vmem:[#allocation2 + $0x2d0] sm:$0xff] %vm1471, %v1801
  %1823 = vst.msk [vmem:[#allocation2 + $0x2d8] sm:$0xff] %vm1471, %v1803
  %1824 = vst.msk [vmem:[#allocation2 + $0x2e0] sm:$0xff] %vm1471, %v1805
  %1825 = vst.msk [vmem:[#allocation2 + $0x2e8] sm:$0xff] %vm1471, %v1807
  %1826 = vst.msk [vmem:[#allocation2 + $0x2f0] sm:$0xff] %vm1471, %v1809
  %1827 = vst.msk [vmem:[#allocation2 + $0x2f8] sm:$0xff] %vm1471, %v1811
  %v1828 = vlaneseq
  %v1829 = vshrl.u32 %v1828, 7
  %v1830 = vsub.s32 0, %v1829
  %v1831 = vrot.slane %v1341, %v1830
  %v1832 = vmul.f32 %v1403, %v1831
  %v1833 = vmul.f32 %v1404, %v1831
  %v1834 = vmul.f32 %v1405, %v1831
  %v1835 = vmul.f32 %v1406, %v1831
  %v1836 = vmul.f32 %v1407, %v1831
  %v1837 = vmul.f32 %v1408, %v1831
  %v1838 = vmul.f32 %v1409, %v1831
  %v1839 = vmul.f32 %v1410, %v1831
  %v1840 = vmul.f32 %v1411, %v1831
  %v1841 = vmul.f32 %v1412, %v1831
  %v1842 = vmul.f32 %v1413, %v1831
  %v1843 = vmul.f32 %v1414, %v1831
  %v1844 = vmul.f32 %v1415, %v1831
  %v1845 = vmul.f32 %v1416, %v1831
  %v1846 = vmul.f32 %v1417, %v1831
  %v1847 = vmul.f32 %v1418, %v1831
  %1848 = vadd.xlane.f32.xlu0 %v1832
  %v1849 = vpop.xlane.xlu0 %1848
  %1850 = vadd.xlane.f32.xlu0 %v1833
  %v1851 = vpop.xlane.xlu0 %1850
  %1852 = vadd.xlane.f32.xlu0 %v1834
  %v1853 = vpop.xlane.xlu0 %1852
  %1854 = vadd.xlane.f32.xlu0 %v1835
  %v1855 = vpop.xlane.xlu0 %1854
  %1856 = vadd.xlane.f32.xlu0 %v1836
  %v1857 = vpop.xlane.xlu0 %1856
  %1858 = vadd.xlane.f32.xlu0 %v1837
  %v1859 = vpop.xlane.xlu0 %1858
  %1860 = vadd.xlane.f32.xlu0 %v1838
  %v1861 = vpop.xlane.xlu0 %1860
  %1862 = vadd.xlane.f32.xlu0 %v1839
  %v1863 = vpop.xlane.xlu0 %1862
  %1864 = vadd.xlane.f32.xlu0 %v1840
  %v1865 = vpop.xlane.xlu0 %1864
  %1866 = vadd.xlane.f32.xlu0 %v1841
  %v1867 = vpop.xlane.xlu0 %1866
  %1868 = vadd.xlane.f32.xlu0 %v1842
  %v1869 = vpop.xlane.xlu0 %1868
  %1870 = vadd.xlane.f32.xlu0 %v1843
  %v1871 = vpop.xlane.xlu0 %1870
  %1872 = vadd.xlane.f32.xlu0 %v1844
  %v1873 = vpop.xlane.xlu0 %1872
  %1874 = vadd.xlane.f32.xlu0 %v1845
  %v1875 = vpop.xlane.xlu0 %1874
  %1876 = vadd.xlane.f32.xlu0 %v1846
  %v1877 = vpop.xlane.xlu0 %1876
  %1878 = vadd.xlane.f32.xlu0 %v1847
  %v1879 = vpop.xlane.xlu0 %1878
  %1880 = vst.msk [vmem:[#allocation2 + $0x300] sm:$0xff] %vm1471, %v1849
  %1881 = vst.msk [vmem:[#allocation2 + $0x308] sm:$0xff] %vm1471, %v1851
  %1882 = vst.msk [vmem:[#allocation2 + $0x310] sm:$0xff] %vm1471, %v1853
  %1883 = vst.msk [vmem:[#allocation2 + $0x318] sm:$0xff] %vm1471, %v1855
  %1884 = vst.msk [vmem:[#allocation2 + $0x320] sm:$0xff] %vm1471, %v1857
  %1885 = vst.msk [vmem:[#allocation2 + $0x328] sm:$0xff] %vm1471, %v1859
  %1886 = vst.msk [vmem:[#allocation2 + $0x330] sm:$0xff] %vm1471, %v1861
  %1887 = vst.msk [vmem:[#allocation2 + $0x338] sm:$0xff] %vm1471, %v1863
  %1888 = vst.msk [vmem:[#allocation2 + $0x340] sm:$0xff] %vm1471, %v1865
  %1889 = vst.msk [vmem:[#allocation2 + $0x348] sm:$0xff] %vm1471, %v1867
  %1890 = vst.msk [vmem:[#allocation2 + $0x350] sm:$0xff] %vm1471, %v1869
  %1891 = vst.msk [vmem:[#allocation2 + $0x358] sm:$0xff] %vm1471, %v1871
  %1892 = vst.msk [vmem:[#allocation2 + $0x360] sm:$0xff] %vm1471, %v1873
  %1893 = vst.msk [vmem:[#allocation2 + $0x368] sm:$0xff] %vm1471, %v1875
  %1894 = vst.msk [vmem:[#allocation2 + $0x370] sm:$0xff] %vm1471, %v1877
  %1895 = vst.msk [vmem:[#allocation2 + $0x378] sm:$0xff] %vm1471, %v1879
  %v1896 = vlaneseq
  %v1897 = vshrl.u32 %v1896, 7
  %v1898 = vsub.s32 0, %v1897
  %v1899 = vrot.slane %v1343, %v1898
  %v1900 = vmul.f32 %v1403, %v1899
  %v1901 = vmul.f32 %v1404, %v1899
  %v1902 = vmul.f32 %v1405, %v1899
  %v1903 = vmul.f32 %v1406, %v1899
  %v1904 = vmul.f32 %v1407, %v1899
  %v1905 = vmul.f32 %v1408, %v1899
  %v1906 = vmul.f32 %v1409, %v1899
  %v1907 = vmul.f32 %v1410, %v1899
  %v1908 = vmul.f32 %v1411, %v1899
  %v1909 = vmul.f32 %v1412, %v1899
  %v1910 = vmul.f32 %v1413, %v1899
  %v1911 = vmul.f32 %v1414, %v1899
  %v1912 = vmul.f32 %v1415, %v1899
  %v1913 = vmul.f32 %v1416, %v1899
  %v1914 = vmul.f32 %v1417, %v1899
  %v1915 = vmul.f32 %v1418, %v1899
  %1916 = vadd.xlane.f32.xlu0 %v1900
  %v1917 = vpop.xlane.xlu0 %1916
  %1918 = vadd.xlane.f32.xlu0 %v1901
  %v1919 = vpop.xlane.xlu0 %1918
  %1920 = vadd.xlane.f32.xlu0 %v1902
  %v1921 = vpop.xlane.xlu0 %1920
  %1922 = vadd.xlane.f32.xlu0 %v1903
  %v1923 = vpop.xlane.xlu0 %1922
  %1924 = vadd.xlane.f32.xlu0 %v1904
  %v1925 = vpop.xlane.xlu0 %1924
  %1926 = vadd.xlane.f32.xlu0 %v1905
  %v1927 = vpop.xlane.xlu0 %1926
  %1928 = vadd.xlane.f32.xlu0 %v1906
  %v1929 = vpop.xlane.xlu0 %1928
  %1930 = vadd.xlane.f32.xlu0 %v1907
  %v1931 = vpop.xlane.xlu0 %1930
  %1932 = vadd.xlane.f32.xlu0 %v1908
  %v1933 = vpop.xlane.xlu0 %1932
  %1934 = vadd.xlane.f32.xlu0 %v1909
  %v1935 = vpop.xlane.xlu0 %1934
  %1936 = vadd.xlane.f32.xlu0 %v1910
  %v1937 = vpop.xlane.xlu0 %1936
  %1938 = vadd.xlane.f32.xlu0 %v1911
  %v1939 = vpop.xlane.xlu0 %1938
  %1940 = vadd.xlane.f32.xlu0 %v1912
  %v1941 = vpop.xlane.xlu0 %1940
  %1942 = vadd.xlane.f32.xlu0 %v1913
  %v1943 = vpop.xlane.xlu0 %1942
  %1944 = vadd.xlane.f32.xlu0 %v1914
  %v1945 = vpop.xlane.xlu0 %1944
  %1946 = vadd.xlane.f32.xlu0 %v1915
  %v1947 = vpop.xlane.xlu0 %1946
  %1948 = vst.msk [vmem:[#allocation2 + $0x380] sm:$0xff] %vm1471, %v1917
  %1949 = vst.msk [vmem:[#allocation2 + $0x388] sm:$0xff] %vm1471, %v1919
  %1950 = vst.msk [vmem:[#allocation2 + $0x390] sm:$0xff] %vm1471, %v1921
  %1951 = vst.msk [vmem:[#allocation2 + $0x398] sm:$0xff] %vm1471, %v1923
  %1952 = vst.msk [vmem:[#allocation2 + $0x3a0] sm:$0xff] %vm1471, %v1925
  %1953 = vst.msk [vmem:[#allocation2 + $0x3a8] sm:$0xff] %vm1471, %v1927
  %1954 = vst.msk [vmem:[#allocation2 + $0x3b0] sm:$0xff] %vm1471, %v1929
  %1955 = vst.msk [vmem:[#allocation2 + $0x3b8] sm:$0xff] %vm1471, %v1931
  %1956 = vst.msk [vmem:[#allocation2 + $0x3c0] sm:$0xff] %vm1471, %v1933
  %1957 = vst.msk [vmem:[#allocation2 + $0x3c8] sm:$0xff] %vm1471, %v1935
  %1958 = vst.msk [vmem:[#allocation2 + $0x3d0] sm:$0xff] %vm1471, %v1937
  %1959 = vst.msk [vmem:[#allocation2 + $0x3d8] sm:$0xff] %vm1471, %v1939
  %1960 = vst.msk [vmem:[#allocation2 + $0x3e0] sm:$0xff] %vm1471, %v1941
  %1961 = vst.msk [vmem:[#allocation2 + $0x3e8] sm:$0xff] %vm1471, %v1943
  %1962 = vst.msk [vmem:[#allocation2 + $0x3f0] sm:$0xff] %vm1471, %v1945
  %1963 = vst.msk [vmem:[#allocation2 + $0x3f8] sm:$0xff] %vm1471, %v1947
  %v1964 = vlaneseq
  %v1965 = vshrl.u32 %v1964, 7
  %v1966 = vsub.s32 0, %v1965
  %v1967 = vrot.slane %v1345, %v1966
  %v1968 = vmul.f32 %v1403, %v1967
  %v1969 = vmul.f32 %v1404, %v1967
  %v1970 = vmul.f32 %v1405, %v1967
  %v1971 = vmul.f32 %v1406, %v1967
  %v1972 = vmul.f32 %v1407, %v1967
  %v1973 = vmul.f32 %v1408, %v1967
  %v1974 = vmul.f32 %v1409, %v1967
  %v1975 = vmul.f32 %v1410, %v1967
  %v1976 = vmul.f32 %v1411, %v1967
  %v1977 = vmul.f32 %v1412, %v1967
  %v1978 = vmul.f32 %v1413, %v1967
  %v1979 = vmul.f32 %v1414, %v1967
  %v1980 = vmul.f32 %v1415, %v1967
  %v1981 = vmul.f32 %v1416, %v1967
  %v1982 = vmul.f32 %v1417, %v1967
  %v1983 = vmul.f32 %v1418, %v1967
  %1984 = vadd.xlane.f32.xlu0 %v1968
  %v1985 = vpop.xlane.xlu0 %1984
  %1986 = vadd.xlane.f32.xlu0 %v1969
  %v1987 = vpop.xlane.xlu0 %1986
  %1988 = vadd.xlane.f32.xlu0 %v1970
  %v1989 = vpop.xlane.xlu0 %1988
  %1990 = vadd.xlane.f32.xlu0 %v1971
  %v1991 = vpop.xlane.xlu0 %1990
  %1992 = vadd.xlane.f32.xlu0 %v1972
  %v1993 = vpop.xlane.xlu0 %1992
  %1994 = vadd.xlane.f32.xlu0 %v1973
  %v1995 = vpop.xlane.xlu0 %1994
  %1996 = vadd.xlane.f32.xlu0 %v1974
  %v1997 = vpop.xlane.xlu0 %1996
  %1998 = vadd.xlane.f32.xlu0 %v1975
  %v1999 = vpop.xlane.xlu0 %1998
  %2000 = vadd.xlane.f32.xlu0 %v1976
  %v2001 = vpop.xlane.xlu0 %2000
  %2002 = vadd.xlane.f32.xlu0 %v1977
  %v2003 = vpop.xlane.xlu0 %2002
  %2004 = vadd.xlane.f32.xlu0 %v1978
  %v2005 = vpop.xlane.xlu0 %2004
  %2006 = vadd.xlane.f32.xlu0 %v1979
  %v2007 = vpop.xlane.xlu0 %2006
  %2008 = vadd.xlane.f32.xlu0 %v1980
  %v2009 = vpop.xlane.xlu0 %2008
  %2010 = vadd.xlane.f32.xlu0 %v1981
  %v2011 = vpop.xlane.xlu0 %2010
  %2012 = vadd.xlane.f32.xlu0 %v1982
  %v2013 = vpop.xlane.xlu0 %2012
  %2014 = vadd.xlane.f32.xlu0 %v1983
  %v2015 = vpop.xlane.xlu0 %2014
  %2016 = vst.msk [vmem:[#allocation2 + $0x400] sm:$0xff] %vm1471, %v1985
  %2017 = vst.msk [vmem:[#allocation2 + $0x408] sm:$0xff] %vm1471, %v1987
  %2018 = vst.msk [vmem:[#allocation2 + $0x410] sm:$0xff] %vm1471, %v1989
  %2019 = vst.msk [vmem:[#allocation2 + $0x418] sm:$0xff] %vm1471, %v1991
  %2020 = vst.msk [vmem:[#allocation2 + $0x420] sm:$0xff] %vm1471, %v1993
  %2021 = vst.msk [vmem:[#allocation2 + $0x428] sm:$0xff] %vm1471, %v1995
  %2022 = vst.msk [vmem:[#allocation2 + $0x430] sm:$0xff] %vm1471, %v1997
  %2023 = vst.msk [vmem:[#allocation2 + $0x438] sm:$0xff] %vm1471, %v1999
  %2024 = vst.msk [vmem:[#allocation2 + $0x440] sm:$0xff] %vm1471, %v2001
  %2025 = vst.msk [vmem:[#allocation2 + $0x448] sm:$0xff] %vm1471, %v2003
  %2026 = vst.msk [vmem:[#allocation2 + $0x450] sm:$0xff] %vm1471, %v2005
  %2027 = vst.msk [vmem:[#allocation2 + $0x458] sm:$0xff] %vm1471, %v2007
  %2028 = vst.msk [vmem:[#allocation2 + $0x460] sm:$0xff] %vm1471, %v2009
  %2029 = vst.msk [vmem:[#allocation2 + $0x468] sm:$0xff] %vm1471, %v2011
  %2030 = vst.msk [vmem:[#allocation2 + $0x470] sm:$0xff] %vm1471, %v2013
  %2031 = vst.msk [vmem:[#allocation2 + $0x478] sm:$0xff] %vm1471, %v2015
  %v2032 = vlaneseq
  %v2033 = vshrl.u32 %v2032, 7
  %v2034 = vsub.s32 0, %v2033
  %v2035 = vrot.slane %v1347, %v2034
  %v2036 = vmul.f32 %v1403, %v2035
  %v2037 = vmul.f32 %v1404, %v2035
  %v2038 = vmul.f32 %v1405, %v2035
  %v2039 = vmul.f32 %v1406, %v2035
  %v2040 = vmul.f32 %v1407, %v2035
  %v2041 = vmul.f32 %v1408, %v2035
  %v2042 = vmul.f32 %v1409, %v2035
  %v2043 = vmul.f32 %v1410, %v2035
  %v2044 = vmul.f32 %v1411, %v2035
  %v2045 = vmul.f32 %v1412, %v2035
  %v2046 = vmul.f32 %v1413, %v2035
  %v2047 = vmul.f32 %v1414, %v2035
  %v2048 = vmul.f32 %v1415, %v2035
  %v2049 = vmul.f32 %v1416, %v2035
  %v2050 = vmul.f32 %v1417, %v2035
  %v2051 = vmul.f32 %v1418, %v2035
  %2052 = vadd.xlane.f32.xlu0 %v2036
  %v2053 = vpop.xlane.xlu0 %2052
  %2054 = vadd.xlane.f32.xlu0 %v2037
  %v2055 = vpop.xlane.xlu0 %2054
  %2056 = vadd.xlane.f32.xlu0 %v2038
  %v2057 = vpop.xlane.xlu0 %2056
  %2058 = vadd.xlane.f32.xlu0 %v2039
  %v2059 = vpop.xlane.xlu0 %2058
  %2060 = vadd.xlane.f32.xlu0 %v2040
  %v2061 = vpop.xlane.xlu0 %2060
  %2062 = vadd.xlane.f32.xlu0 %v2041
  %v2063 = vpop.xlane.xlu0 %2062
  %2064 = vadd.xlane.f32.xlu0 %v2042
  %v2065 = vpop.xlane.xlu0 %2064
  %2066 = vadd.xlane.f32.xlu0 %v2043
  %v2067 = vpop.xlane.xlu0 %2066
  %2068 = vadd.xlane.f32.xlu0 %v2044
  %v2069 = vpop.xlane.xlu0 %2068
  %2070 = vadd.xlane.f32.xlu0 %v2045
  %v2071 = vpop.xlane.xlu0 %2070
  %2072 = vadd.xlane.f32.xlu0 %v2046
  %v2073 = vpop.xlane.xlu0 %2072
  %2074 = vadd.xlane.f32.xlu0 %v2047
  %v2075 = vpop.xlane.xlu0 %2074
  %2076 = vadd.xlane.f32.xlu0 %v2048
  %v2077 = vpop.xlane.xlu0 %2076
  %2078 = vadd.xlane.f32.xlu0 %v2049
  %v2079 = vpop.xlane.xlu0 %2078
  %2080 = vadd.xlane.f32.xlu0 %v2050
  %v2081 = vpop.xlane.xlu0 %2080
  %2082 = vadd.xlane.f32.xlu0 %v2051
  %v2083 = vpop.xlane.xlu0 %2082
  %2084 = vst.msk [vmem:[#allocation2 + $0x480] sm:$0xff] %vm1471, %v2053
  %2085 = vst.msk [vmem:[#allocation2 + $0x488] sm:$0xff] %vm1471, %v2055
  %2086 = vst.msk [vmem:[#allocation2 + $0x490] sm:$0xff] %vm1471, %v2057
  %2087 = vst.msk [vmem:[#allocation2 + $0x498] sm:$0xff] %vm1471, %v2059
  %2088 = vst.msk [vmem:[#allocation2 + $0x4a0] sm:$0xff] %vm1471, %v2061
  %2089 = vst.msk [vmem:[#allocation2 + $0x4a8] sm:$0xff] %vm1471, %v2063
  %2090 = vst.msk [vmem:[#allocation2 + $0x4b0] sm:$0xff] %vm1471, %v2065
  %2091 = vst.msk [vmem:[#allocation2 + $0x4b8] sm:$0xff] %vm1471, %v2067
  %2092 = vst.msk [vmem:[#allocation2 + $0x4c0] sm:$0xff] %vm1471, %v2069
  %2093 = vst.msk [vmem:[#allocation2 + $0x4c8] sm:$0xff] %vm1471, %v2071
  %2094 = vst.msk [vmem:[#allocation2 + $0x4d0] sm:$0xff] %vm1471, %v2073
  %2095 = vst.msk [vmem:[#allocation2 + $0x4d8] sm:$0xff] %vm1471, %v2075
  %2096 = vst.msk [vmem:[#allocation2 + $0x4e0] sm:$0xff] %vm1471, %v2077
  %2097 = vst.msk [vmem:[#allocation2 + $0x4e8] sm:$0xff] %vm1471, %v2079
  %2098 = vst.msk [vmem:[#allocation2 + $0x4f0] sm:$0xff] %vm1471, %v2081
  %2099 = vst.msk [vmem:[#allocation2 + $0x4f8] sm:$0xff] %vm1471, %v2083
  %v2100 = vlaneseq
  %v2101 = vshrl.u32 %v2100, 7
  %v2102 = vsub.s32 0, %v2101
  %v2103 = vrot.slane %v1349, %v2102
  %v2104 = vmul.f32 %v1403, %v2103
  %v2105 = vmul.f32 %v1404, %v2103
  %v2106 = vmul.f32 %v1405, %v2103
  %v2107 = vmul.f32 %v1406, %v2103
  %v2108 = vmul.f32 %v1407, %v2103
  %v2109 = vmul.f32 %v1408, %v2103
  %v2110 = vmul.f32 %v1409, %v2103
  %v2111 = vmul.f32 %v1410, %v2103
  %v2112 = vmul.f32 %v1411, %v2103
  %v2113 = vmul.f32 %v1412, %v2103
  %v2114 = vmul.f32 %v1413, %v2103
  %v2115 = vmul.f32 %v1414, %v2103
  %v2116 = vmul.f32 %v1415, %v2103
  %v2117 = vmul.f32 %v1416, %v2103
  %v2118 = vmul.f32 %v1417, %v2103
  %v2119 = vmul.f32 %v1418, %v2103
  %2120 = vadd.xlane.f32.xlu0 %v2104
  %v2121 = vpop.xlane.xlu0 %2120
  %2122 = vadd.xlane.f32.xlu0 %v2105
  %v2123 = vpop.xlane.xlu0 %2122
  %2124 = vadd.xlane.f32.xlu0 %v2106
  %v2125 = vpop.xlane.xlu0 %2124
  %2126 = vadd.xlane.f32.xlu0 %v2107
  %v2127 = vpop.xlane.xlu0 %2126
  %2128 = vadd.xlane.f32.xlu0 %v2108
  %v2129 = vpop.xlane.xlu0 %2128
  %2130 = vadd.xlane.f32.xlu0 %v2109
  %v2131 = vpop.xlane.xlu0 %2130
  %2132 = vadd.xlane.f32.xlu0 %v2110
  %v2133 = vpop.xlane.xlu0 %2132
  %2134 = vadd.xlane.f32.xlu0 %v2111
  %v2135 = vpop.xlane.xlu0 %2134
  %2136 = vadd.xlane.f32.xlu0 %v2112
  %v2137 = vpop.xlane.xlu0 %2136
  %2138 = vadd.xlane.f32.xlu0 %v2113
  %v2139 = vpop.xlane.xlu0 %2138
  %2140 = vadd.xlane.f32.xlu0 %v2114
  %v2141 = vpop.xlane.xlu0 %2140
  %2142 = vadd.xlane.f32.xlu0 %v2115
  %v2143 = vpop.xlane.xlu0 %2142
  %2144 = vadd.xlane.f32.xlu0 %v2116
  %v2145 = vpop.xlane.xlu0 %2144
  %2146 = vadd.xlane.f32.xlu0 %v2117
  %v2147 = vpop.xlane.xlu0 %2146
  %2148 = vadd.xlane.f32.xlu0 %v2118
  %v2149 = vpop.xlane.xlu0 %2148
  %2150 = vadd.xlane.f32.xlu0 %v2119
  %v2151 = vpop.xlane.xlu0 %2150
  %2152 = vst.msk [vmem:[#allocation2 + $0x500] sm:$0xff] %vm1471, %v2121
  %2153 = vst.msk [vmem:[#allocation2 + $0x508] sm:$0xff] %vm1471, %v2123
  %2154 = vst.msk [vmem:[#allocation2 + $0x510] sm:$0xff] %vm1471, %v2125
  %2155 = vst.msk [vmem:[#allocation2 + $0x518] sm:$0xff] %vm1471, %v2127
  %2156 = vst.msk [vmem:[#allocation2 + $0x520] sm:$0xff] %vm1471, %v2129
  %2157 = vst.msk [vmem:[#allocation2 + $0x528] sm:$0xff] %vm1471, %v2131
  %2158 = vst.msk [vmem:[#allocation2 + $0x530] sm:$0xff] %vm1471, %v2133
  %2159 = vst.msk [vmem:[#allocation2 + $0x538] sm:$0xff] %vm1471, %v2135
  %2160 = vst.msk [vmem:[#allocation2 + $0x540] sm:$0xff] %vm1471, %v2137
  %2161 = vst.msk [vmem:[#allocation2 + $0x548] sm:$0xff] %vm1471, %v2139
  %2162 = vst.msk [vmem:[#allocation2 + $0x550] sm:$0xff] %vm1471, %v2141
  %2163 = vst.msk [vmem:[#allocation2 + $0x558] sm:$0xff] %vm1471, %v2143
  %2164 = vst.msk [vmem:[#allocation2 + $0x560] sm:$0xff] %vm1471, %v2145
  %2165 = vst.msk [vmem:[#allocation2 + $0x568] sm:$0xff] %vm1471, %v2147
  %2166 = vst.msk [vmem:[#allocation2 + $0x570] sm:$0xff] %vm1471, %v2149
  %2167 = vst.msk [vmem:[#allocation2 + $0x578] sm:$0xff] %vm1471, %v2151
  %v2168 = vlaneseq
  %v2169 = vshrl.u32 %v2168, 7
  %v2170 = vsub.s32 0, %v2169
  %v2171 = vrot.slane %v1351, %v2170
  %v2172 = vmul.f32 %v1403, %v2171
  %v2173 = vmul.f32 %v1404, %v2171
  %v2174 = vmul.f32 %v1405, %v2171
  %v2175 = vmul.f32 %v1406, %v2171
  %v2176 = vmul.f32 %v1407, %v2171
  %v2177 = vmul.f32 %v1408, %v2171
  %v2178 = vmul.f32 %v1409, %v2171
  %v2179 = vmul.f32 %v1410, %v2171
  %v2180 = vmul.f32 %v1411, %v2171
  %v2181 = vmul.f32 %v1412, %v2171
  %v2182 = vmul.f32 %v1413, %v2171
  %v2183 = vmul.f32 %v1414, %v2171
  %v2184 = vmul.f32 %v1415, %v2171
  %v2185 = vmul.f32 %v1416, %v2171
  %v2186 = vmul.f32 %v1417, %v2171
  %v2187 = vmul.f32 %v1418, %v2171
  %2188 = vadd.xlane.f32.xlu0 %v2172
  %v2189 = vpop.xlane.xlu0 %2188
  %2190 = vadd.xlane.f32.xlu0 %v2173
  %v2191 = vpop.xlane.xlu0 %2190
  %2192 = vadd.xlane.f32.xlu0 %v2174
  %v2193 = vpop.xlane.xlu0 %2192
  %2194 = vadd.xlane.f32.xlu0 %v2175
  %v2195 = vpop.xlane.xlu0 %2194
  %2196 = vadd.xlane.f32.xlu0 %v2176
  %v2197 = vpop.xlane.xlu0 %2196
  %2198 = vadd.xlane.f32.xlu0 %v2177
  %v2199 = vpop.xlane.xlu0 %2198
  %2200 = vadd.xlane.f32.xlu0 %v2178
  %v2201 = vpop.xlane.xlu0 %2200
  %2202 = vadd.xlane.f32.xlu0 %v2179
  %v2203 = vpop.xlane.xlu0 %2202
  %2204 = vadd.xlane.f32.xlu0 %v2180
  %v2205 = vpop.xlane.xlu0 %2204
  %2206 = vadd.xlane.f32.xlu0 %v2181
  %v2207 = vpop.xlane.xlu0 %2206
  %2208 = vadd.xlane.f32.xlu0 %v2182
  %v2209 = vpop.xlane.xlu0 %2208
  %2210 = vadd.xlane.f32.xlu0 %v2183
  %v2211 = vpop.xlane.xlu0 %2210
  %2212 = vadd.xlane.f32.xlu0 %v2184
  %v2213 = vpop.xlane.xlu0 %2212
  %2214 = vadd.xlane.f32.xlu0 %v2185
  %v2215 = vpop.xlane.xlu0 %2214
  %2216 = vadd.xlane.f32.xlu0 %v2186
  %v2217 = vpop.xlane.xlu0 %2216
  %2218 = vadd.xlane.f32.xlu0 %v2187
  %v2219 = vpop.xlane.xlu0 %2218
  %2220 = vst.msk [vmem:[#allocation2 + $0x580] sm:$0xff] %vm1471, %v2189
  %2221 = vst.msk [vmem:[#allocation2 + $0x588] sm:$0xff] %vm1471, %v2191
  %2222 = vst.msk [vmem:[#allocation2 + $0x590] sm:$0xff] %vm1471, %v2193
  %2223 = vst.msk [vmem:[#allocation2 + $0x598] sm:$0xff] %vm1471, %v2195
  %2224 = vst.msk [vmem:[#allocation2 + $0x5a0] sm:$0xff] %vm1471, %v2197
  %2225 = vst.msk [vmem:[#allocation2 + $0x5a8] sm:$0xff] %vm1471, %v2199
  %2226 = vst.msk [vmem:[#allocation2 + $0x5b0] sm:$0xff] %vm1471, %v2201
  %2227 = vst.msk [vmem:[#allocation2 + $0x5b8] sm:$0xff] %vm1471, %v2203
  %2228 = vst.msk [vmem:[#allocation2 + $0x5c0] sm:$0xff] %vm1471, %v2205
  %2229 = vst.msk [vmem:[#allocation2 + $0x5c8] sm:$0xff] %vm1471, %v2207
  %2230 = vst.msk [vmem:[#allocation2 + $0x5d0] sm:$0xff] %vm1471, %v2209
  %2231 = vst.msk [vmem:[#allocation2 + $0x5d8] sm:$0xff] %vm1471, %v2211
  %2232 = vst.msk [vmem:[#allocation2 + $0x5e0] sm:$0xff] %vm1471, %v2213
  %2233 = vst.msk [vmem:[#allocation2 + $0x5e8] sm:$0xff] %vm1471, %v2215
  %2234 = vst.msk [vmem:[#allocation2 + $0x5f0] sm:$0xff] %vm1471, %v2217
  %2235 = vst.msk [vmem:[#allocation2 + $0x5f8] sm:$0xff] %vm1471, %v2219
  %v2236 = vld [vmem:[%s3] sm:$0xff]
  %v2237 = vld [vmem:[%s3 + $0x8] sm:$0xff]
  %v2238 = vld [vmem:[%s3 + $0x10] sm:$0xff]
  %v2239 = vld [vmem:[%s3 + $0x18] sm:$0xff]
  %v2240 = vld [vmem:[%s3 + $0x20] sm:$0xff]
  %v2241 = vld [vmem:[%s3 + $0x28] sm:$0xff]
  %v2242 = vld [vmem:[%s3 + $0x30] sm:$0xff]
  %v2243 = vld [vmem:[%s3 + $0x38] sm:$0xff]
  %v2244 = vld [vmem:[%s3 + $0x40] sm:$0xff]
  %v2245 = vld [vmem:[%s3 + $0x48] sm:$0xff]
  %v2246 = vld [vmem:[%s3 + $0x50] sm:$0xff]
  %v2247 = vld [vmem:[%s3 + $0x58] sm:$0xff]
  %v2248 = vld [vmem:[%s3 + $0x60] sm:$0xff]
  %v2249 = vld [vmem:[%s3 + $0x68] sm:$0xff]
  %v2250 = vld [vmem:[%s3 + $0x70] sm:$0xff]
  %v2251 = vld [vmem:[%s3 + $0x78] sm:$0xff]
  %v2252 = vld [vmem:[%s3 + $0x80] sm:$0xff]
  %v2253 = vld [vmem:[%s3 + $0x88] sm:$0xff]
  %v2254 = vld [vmem:[%s3 + $0x90] sm:$0xff]
  %v2255 = vld [vmem:[%s3 + $0x98] sm:$0xff]
  %v2256 = vld [vmem:[%s3 + $0xa0] sm:$0xff]
  %v2257 = vld [vmem:[%s3 + $0xa8] sm:$0xff]
  %v2258 = vld [vmem:[%s3 + $0xb0] sm:$0xff]
  %v2259 = vld [vmem:[%s3 + $0xb8] sm:$0xff]
  %v2260 = vld [vmem:[%s3 + $0xc0] sm:$0xff]
  %v2261 = vld [vmem:[%s3 + $0xc8] sm:$0xff]
  %v2262 = vld [vmem:[%s3 + $0xd0] sm:$0xff]
  %v2263 = vld [vmem:[%s3 + $0xd8] sm:$0xff]
  %v2264 = vld [vmem:[%s3 + $0xe0] sm:$0xff]
  %v2265 = vld [vmem:[%s3 + $0xe8] sm:$0xff]
  %v2266 = vld [vmem:[%s3 + $0xf0] sm:$0xff]
  %v2267 = vld [vmem:[%s3 + $0xf8] sm:$0xff]
  %v2268 = vld [vmem:[%s3 + $0x100] sm:$0xff]
  %v2269 = vld [vmem:[%s3 + $0x108] sm:$0xff]
  %v2270 = vld [vmem:[%s3 + $0x110] sm:$0xff]
  %v2271 = vld [vmem:[%s3 + $0x118] sm:$0xff]
  %v2272 = vld [vmem:[%s3 + $0x120] sm:$0xff]
  %v2273 = vld [vmem:[%s3 + $0x128] sm:$0xff]
  %v2274 = vld [vmem:[%s3 + $0x130] sm:$0xff]
  %v2275 = vld [vmem:[%s3 + $0x138] sm:$0xff]
  %v2276 = vld [vmem:[%s3 + $0x140] sm:$0xff]
  %v2277 = vld [vmem:[%s3 + $0x148] sm:$0xff]
  %v2278 = vld [vmem:[%s3 + $0x150] sm:$0xff]
  %v2279 = vld [vmem:[%s3 + $0x158] sm:$0xff]
  %v2280 = vld [vmem:[%s3 + $0x160] sm:$0xff]
  %v2281 = vld [vmem:[%s3 + $0x168] sm:$0xff]
  %v2282 = vld [vmem:[%s3 + $0x170] sm:$0xff]
  %v2283 = vld [vmem:[%s3 + $0x178] sm:$0xff]
  %v2284 = vld [vmem:[%s3 + $0x180] sm:$0xff]
  %v2285 = vld [vmem:[%s3 + $0x188] sm:$0xff]
  %v2286 = vld [vmem:[%s3 + $0x190] sm:$0xff]
  %v2287 = vld [vmem:[%s3 + $0x198] sm:$0xff]
  %v2288 = vld [vmem:[%s3 + $0x1a0] sm:$0xff]
  %v2289 = vld [vmem:[%s3 + $0x1a8] sm:$0xff]
  %v2290 = vld [vmem:[%s3 + $0x1b0] sm:$0xff]
  %v2291 = vld [vmem:[%s3 + $0x1b8] sm:$0xff]
  %v2292 = vld [vmem:[%s3 + $0x1c0] sm:$0xff]
  %v2293 = vld [vmem:[%s3 + $0x1c8] sm:$0xff]
  %v2294 = vld [vmem:[%s3 + $0x1d0] sm:$0xff]
  %v2295 = vld [vmem:[%s3 + $0x1d8] sm:$0xff]
  %v2296 = vld [vmem:[%s3 + $0x1e0] sm:$0xff]
  %v2297 = vld [vmem:[%s3 + $0x1e8] sm:$0xff]
  %v2298 = vld [vmem:[%s3 + $0x1f0] sm:$0xff]
  %v2299 = vld [vmem:[%s3 + $0x1f8] sm:$0xff]
  %v2300 = vld [vmem:[%s3 + $0x200] sm:$0xff]
  %v2301 = vld [vmem:[%s3 + $0x208] sm:$0xff]
  %v2302 = vld [vmem:[%s3 + $0x210] sm:$0xff]
  %v2303 = vld [vmem:[%s3 + $0x218] sm:$0xff]
  %v2304 = vld [vmem:[%s3 + $0x220] sm:$0xff]
  %v2305 = vld [vmem:[%s3 + $0x228] sm:$0xff]
  %v2306 = vld [vmem:[%s3 + $0x230] sm:$0xff]
  %v2307 = vld [vmem:[%s3 + $0x238] sm:$0xff]
  %v2308 = vld [vmem:[%s3 + $0x240] sm:$0xff]
  %v2309 = vld [vmem:[%s3 + $0x248] sm:$0xff]
  %v2310 = vld [vmem:[%s3 + $0x250] sm:$0xff]
  %v2311 = vld [vmem:[%s3 + $0x258] sm:$0xff]
  %v2312 = vld [vmem:[%s3 + $0x260] sm:$0xff]
  %v2313 = vld [vmem:[%s3 + $0x268] sm:$0xff]
  %v2314 = vld [vmem:[%s3 + $0x270] sm:$0xff]
  %v2315 = vld [vmem:[%s3 + $0x278] sm:$0xff]
  %v2316 = vld [vmem:[%s3 + $0x280] sm:$0xff]
  %v2317 = vld [vmem:[%s3 + $0x288] sm:$0xff]
  %v2318 = vld [vmem:[%s3 + $0x290] sm:$0xff]
  %v2319 = vld [vmem:[%s3 + $0x298] sm:$0xff]
  %v2320 = vld [vmem:[%s3 + $0x2a0] sm:$0xff]
  %v2321 = vld [vmem:[%s3 + $0x2a8] sm:$0xff]
  %v2322 = vld [vmem:[%s3 + $0x2b0] sm:$0xff]
  %v2323 = vld [vmem:[%s3 + $0x2b8] sm:$0xff]
  %v2324 = vld [vmem:[%s3 + $0x2c0] sm:$0xff]
  %v2325 = vld [vmem:[%s3 + $0x2c8] sm:$0xff]
  %v2326 = vld [vmem:[%s3 + $0x2d0] sm:$0xff]
  %v2327 = vld [vmem:[%s3 + $0x2d8] sm:$0xff]
  %v2328 = vld [vmem:[%s3 + $0x2e0] sm:$0xff]
  %v2329 = vld [vmem:[%s3 + $0x2e8] sm:$0xff]
  %v2330 = vld [vmem:[%s3 + $0x2f0] sm:$0xff]
  %v2331 = vld [vmem:[%s3 + $0x2f8] sm:$0xff]
  %v2332 = vld [vmem:[%s3 + $0x300] sm:$0xff]
  %v2333 = vld [vmem:[%s3 + $0x308] sm:$0xff]
  %v2334 = vld [vmem:[%s3 + $0x310] sm:$0xff]
  %v2335 = vld [vmem:[%s3 + $0x318] sm:$0xff]
  %v2336 = vld [vmem:[%s3 + $0x320] sm:$0xff]
  %v2337 = vld [vmem:[%s3 + $0x328] sm:$0xff]
  %v2338 = vld [vmem:[%s3 + $0x330] sm:$0xff]
  %v2339 = vld [vmem:[%s3 + $0x338] sm:$0xff]
  %v2340 = vld [vmem:[%s3 + $0x340] sm:$0xff]
  %v2341 = vld [vmem:[%s3 + $0x348] sm:$0xff]
  %v2342 = vld [vmem:[%s3 + $0x350] sm:$0xff]
  %v2343 = vld [vmem:[%s3 + $0x358] sm:$0xff]
  %v2344 = vld [vmem:[%s3 + $0x360] sm:$0xff]
  %v2345 = vld [vmem:[%s3 + $0x368] sm:$0xff]
  %v2346 = vld [vmem:[%s3 + $0x370] sm:$0xff]
  %v2347 = vld [vmem:[%s3 + $0x378] sm:$0xff]
  %v2348 = vld [vmem:[%s3 + $0x380] sm:$0xff]
  %v2349 = vld [vmem:[%s3 + $0x388] sm:$0xff]
  %v2350 = vld [vmem:[%s3 + $0x390] sm:$0xff]
  %v2351 = vld [vmem:[%s3 + $0x398] sm:$0xff]
  %v2352 = vld [vmem:[%s3 + $0x3a0] sm:$0xff]
  %v2353 = vld [vmem:[%s3 + $0x3a8] sm:$0xff]
  %v2354 = vld [vmem:[%s3 + $0x3b0] sm:$0xff]
  %v2355 = vld [vmem:[%s3 + $0x3b8] sm:$0xff]
  %v2356 = vld [vmem:[%s3 + $0x3c0] sm:$0xff]
  %v2357 = vld [vmem:[%s3 + $0x3c8] sm:$0xff]
  %v2358 = vld [vmem:[%s3 + $0x3d0] sm:$0xff]
  %v2359 = vld [vmem:[%s3 + $0x3d8] sm:$0xff]
  %v2360 = vld [vmem:[%s3 + $0x3e0] sm:$0xff]
  %v2361 = vld [vmem:[%s3 + $0x3e8] sm:$0xff]
  %v2362 = vld [vmem:[%s3 + $0x3f0] sm:$0xff]
  %v2363 = vld [vmem:[%s3 + $0x3f8] sm:$0xff]
  %v2364 = vld [vmem:[%s3 + $0x400] sm:$0xff]
  %v2365 = vld [vmem:[%s3 + $0x408] sm:$0xff]
  %v2366 = vld [vmem:[%s3 + $0x410] sm:$0xff]
  %v2367 = vld [vmem:[%s3 + $0x418] sm:$0xff]
  %v2368 = vld [vmem:[%s3 + $0x420] sm:$0xff]
  %v2369 = vld [vmem:[%s3 + $0x428] sm:$0xff]
  %v2370 = vld [vmem:[%s3 + $0x430] sm:$0xff]
  %v2371 = vld [vmem:[%s3 + $0x438] sm:$0xff]
  %v2372 = vld [vmem:[%s3 + $0x440] sm:$0xff]
  %v2373 = vld [vmem:[%s3 + $0x448] sm:$0xff]
  %v2374 = vld [vmem:[%s3 + $0x450] sm:$0xff]
  %v2375 = vld [vmem:[%s3 + $0x458] sm:$0xff]
  %v2376 = vld [vmem:[%s3 + $0x460] sm:$0xff]
  %v2377 = vld [vmem:[%s3 + $0x468] sm:$0xff]
  %v2378 = vld [vmem:[%s3 + $0x470] sm:$0xff]
  %v2379 = vld [vmem:[%s3 + $0x478] sm:$0xff]
  %v2380 = vld [vmem:[%s3 + $0x480] sm:$0xff]
  %v2381 = vld [vmem:[%s3 + $0x488] sm:$0xff]
  %v2382 = vld [vmem:[%s3 + $0x490] sm:$0xff]
  %v2383 = vld [vmem:[%s3 + $0x498] sm:$0xff]
  %v2384 = vld [vmem:[%s3 + $0x4a0] sm:$0xff]
  %v2385 = vld [vmem:[%s3 + $0x4a8] sm:$0xff]
  %v2386 = vld [vmem:[%s3 + $0x4b0] sm:$0xff]
  %v2387 = vld [vmem:[%s3 + $0x4b8] sm:$0xff]
  %v2388 = vld [vmem:[%s3 + $0x4c0] sm:$0xff]
  %v2389 = vld [vmem:[%s3 + $0x4c8] sm:$0xff]
  %v2390 = vld [vmem:[%s3 + $0x4d0] sm:$0xff]
  %v2391 = vld [vmem:[%s3 + $0x4d8] sm:$0xff]
  %v2392 = vld [vmem:[%s3 + $0x4e0] sm:$0xff]
  %v2393 = vld [vmem:[%s3 + $0x4e8] sm:$0xff]
  %v2394 = vld [vmem:[%s3 + $0x4f0] sm:$0xff]
  %v2395 = vld [vmem:[%s3 + $0x4f8] sm:$0xff]
  %v2396 = vld [vmem:[%s3 + $0x500] sm:$0xff]
  %v2397 = vld [vmem:[%s3 + $0x508] sm:$0xff]
  %v2398 = vld [vmem:[%s3 + $0x510] sm:$0xff]
  %v2399 = vld [vmem:[%s3 + $0x518] sm:$0xff]
  %v2400 = vld [vmem:[%s3 + $0x520] sm:$0xff]
  %v2401 = vld [vmem:[%s3 + $0x528] sm:$0xff]
  %v2402 = vld [vmem:[%s3 + $0x530] sm:$0xff]
  %v2403 = vld [vmem:[%s3 + $0x538] sm:$0xff]
  %v2404 = vld [vmem:[%s3 + $0x540] sm:$0xff]
  %v2405 = vld [vmem:[%s3 + $0x548] sm:$0xff]
  %v2406 = vld [vmem:[%s3 + $0x550] sm:$0xff]
  %v2407 = vld [vmem:[%s3 + $0x558] sm:$0xff]
  %v2408 = vld [vmem:[%s3 + $0x560] sm:$0xff]
  %v2409 = vld [vmem:[%s3 + $0x568] sm:$0xff]
  %v2410 = vld [vmem:[%s3 + $0x570] sm:$0xff]
  %v2411 = vld [vmem:[%s3 + $0x578] sm:$0xff]
  %v2412 = vld [vmem:[%s3 + $0x580] sm:$0xff]
  %v2413 = vld [vmem:[%s3 + $0x588] sm:$0xff]
  %v2414 = vld [vmem:[%s3 + $0x590] sm:$0xff]
  %v2415 = vld [vmem:[%s3 + $0x598] sm:$0xff]
  %v2416 = vld [vmem:[%s3 + $0x5a0] sm:$0xff]
  %v2417 = vld [vmem:[%s3 + $0x5a8] sm:$0xff]
  %v2418 = vld [vmem:[%s3 + $0x5b0] sm:$0xff]
  %v2419 = vld [vmem:[%s3 + $0x5b8] sm:$0xff]
  %v2420 = vld [vmem:[%s3 + $0x5c0] sm:$0xff]
  %v2421 = vld [vmem:[%s3 + $0x5c8] sm:$0xff]
  %v2422 = vld [vmem:[%s3 + $0x5d0] sm:$0xff]
  %v2423 = vld [vmem:[%s3 + $0x5d8] sm:$0xff]
  %v2424 = vld [vmem:[%s3 + $0x5e0] sm:$0xff]
  %v2425 = vld [vmem:[%s3 + $0x5e8] sm:$0xff]
  %v2426 = vld [vmem:[%s3 + $0x5f0] sm:$0xff]
  %v2427 = vld [vmem:[%s3 + $0x5f8] sm:$0xff]
  %v2428 = vld [vmem:[#allocation2] sm:$0xff]
  %v2429 = vld [vmem:[#allocation2 + $0x8] sm:$0xff]
  %v2430 = vld [vmem:[#allocation2 + $0x10] sm:$0xff]
  %v2431 = vld [vmem:[#allocation2 + $0x18] sm:$0xff]
  %v2432 = vld [vmem:[#allocation2 + $0x20] sm:$0xff]
  %v2433 = vld [vmem:[#allocation2 + $0x28] sm:$0xff]
  %v2434 = vld [vmem:[#allocation2 + $0x30] sm:$0xff]
  %v2435 = vld [vmem:[#allocation2 + $0x38] sm:$0xff]
  %v2436 = vld [vmem:[#allocation2 + $0x40] sm:$0xff]
  %v2437 = vld [vmem:[#allocation2 + $0x48] sm:$0xff]
  %v2438 = vld [vmem:[#allocation2 + $0x50] sm:$0xff]
  %v2439 = vld [vmem:[#allocation2 + $0x58] sm:$0xff]
  %v2440 = vld [vmem:[#allocation2 + $0x60] sm:$0xff]
  %v2441 = vld [vmem:[#allocation2 + $0x68] sm:$0xff]
  %v2442 = vld [vmem:[#allocation2 + $0x70] sm:$0xff]
  %v2443 = vld [vmem:[#allocation2 + $0x78] sm:$0xff]
  %v2444 = vld [vmem:[#allocation2 + $0x80] sm:$0xff]
  %v2445 = vld [vmem:[#allocation2 + $0x88] sm:$0xff]
  %v2446 = vld [vmem:[#allocation2 + $0x90] sm:$0xff]
  %v2447 = vld [vmem:[#allocation2 + $0x98] sm:$0xff]
  %v2448 = vld [vmem:[#allocation2 + $0xa0] sm:$0xff]
  %v2449 = vld [vmem:[#allocation2 + $0xa8] sm:$0xff]
  %v2450 = vld [vmem:[#allocation2 + $0xb0] sm:$0xff]
  %v2451 = vld [vmem:[#allocation2 + $0xb8] sm:$0xff]
  %v2452 = vld [vmem:[#allocation2 + $0xc0] sm:$0xff]
  %v2453 = vld [vmem:[#allocation2 + $0xc8] sm:$0xff]
  %v2454 = vld [vmem:[#allocation2 + $0xd0] sm:$0xff]
  %v2455 = vld [vmem:[#allocation2 + $0xd8] sm:$0xff]
  %v2456 = vld [vmem:[#allocation2 + $0xe0] sm:$0xff]
  %v2457 = vld [vmem:[#allocation2 + $0xe8] sm:$0xff]
  %v2458 = vld [vmem:[#allocation2 + $0xf0] sm:$0xff]
  %v2459 = vld [vmem:[#allocation2 + $0xf8] sm:$0xff]
  %v2460 = vld [vmem:[#allocation2 + $0x100] sm:$0xff]
  %v2461 = vld [vmem:[#allocation2 + $0x108] sm:$0xff]
  %v2462 = vld [vmem:[#allocation2 + $0x110] sm:$0xff]
  %v2463 = vld [vmem:[#allocation2 + $0x118] sm:$0xff]
  %v2464 = vld [vmem:[#allocation2 + $0x120] sm:$0xff]
  %v2465 = vld [vmem:[#allocation2 + $0x128] sm:$0xff]
  %v2466 = vld [vmem:[#allocation2 + $0x130] sm:$0xff]
  %v2467 = vld [vmem:[#allocation2 + $0x138] sm:$0xff]
  %v2468 = vld [vmem:[#allocation2 + $0x140] sm:$0xff]
  %v2469 = vld [vmem:[#allocation2 + $0x148] sm:$0xff]
  %v2470 = vld [vmem:[#allocation2 + $0x150] sm:$0xff]
  %v2471 = vld [vmem:[#allocation2 + $0x158] sm:$0xff]
  %v2472 = vld [vmem:[#allocation2 + $0x160] sm:$0xff]
  %v2473 = vld [vmem:[#allocation2 + $0x168] sm:$0xff]
  %v2474 = vld [vmem:[#allocation2 + $0x170] sm:$0xff]
  %v2475 = vld [vmem:[#allocation2 + $0x178] sm:$0xff]
  %v2476 = vld [vmem:[#allocation2 + $0x180] sm:$0xff]
  %v2477 = vld [vmem:[#allocation2 + $0x188] sm:$0xff]
  %v2478 = vld [vmem:[#allocation2 + $0x190] sm:$0xff]
  %v2479 = vld [vmem:[#allocation2 + $0x198] sm:$0xff]
  %v2480 = vld [vmem:[#allocation2 + $0x1a0] sm:$0xff]
  %v2481 = vld [vmem:[#allocation2 + $0x1a8] sm:$0xff]
  %v2482 = vld [vmem:[#allocation2 + $0x1b0] sm:$0xff]
  %v2483 = vld [vmem:[#allocation2 + $0x1b8] sm:$0xff]
  %v2484 = vld [vmem:[#allocation2 + $0x1c0] sm:$0xff]
  %v2485 = vld [vmem:[#allocation2 + $0x1c8] sm:$0xff]
  %v2486 = vld [vmem:[#allocation2 + $0x1d0] sm:$0xff]
  %v2487 = vld [vmem:[#allocation2 + $0x1d8] sm:$0xff]
  %v2488 = vld [vmem:[#allocation2 + $0x1e0] sm:$0xff]
  %v2489 = vld [vmem:[#allocation2 + $0x1e8] sm:$0xff]
  %v2490 = vld [vmem:[#allocation2 + $0x1f0] sm:$0xff]
  %v2491 = vld [vmem:[#allocation2 + $0x1f8] sm:$0xff]
  %v2492 = vld [vmem:[#allocation2 + $0x200] sm:$0xff]
  %v2493 = vld [vmem:[#allocation2 + $0x208] sm:$0xff]
  %v2494 = vld [vmem:[#allocation2 + $0x210] sm:$0xff]
  %v2495 = vld [vmem:[#allocation2 + $0x218] sm:$0xff]
  %v2496 = vld [vmem:[#allocation2 + $0x220] sm:$0xff]
  %v2497 = vld [vmem:[#allocation2 + $0x228] sm:$0xff]
  %v2498 = vld [vmem:[#allocation2 + $0x230] sm:$0xff]
  %v2499 = vld [vmem:[#allocation2 + $0x238] sm:$0xff]
  %v2500 = vld [vmem:[#allocation2 + $0x240] sm:$0xff]
  %v2501 = vld [vmem:[#allocation2 + $0x248] sm:$0xff]
  %v2502 = vld [vmem:[#allocation2 + $0x250] sm:$0xff]
  %v2503 = vld [vmem:[#allocation2 + $0x258] sm:$0xff]
  %v2504 = vld [vmem:[#allocation2 + $0x260] sm:$0xff]
  %v2505 = vld [vmem:[#allocation2 + $0x268] sm:$0xff]
  %v2506 = vld [vmem:[#allocation2 + $0x270] sm:$0xff]
  %v2507 = vld [vmem:[#allocation2 + $0x278] sm:$0xff]
  %v2508 = vld [vmem:[#allocation2 + $0x280] sm:$0xff]
  %v2509 = vld [vmem:[#allocation2 + $0x288] sm:$0xff]
  %v2510 = vld [vmem:[#allocation2 + $0x290] sm:$0xff]
  %v2511 = vld [vmem:[#allocation2 + $0x298] sm:$0xff]
  %v2512 = vld [vmem:[#allocation2 + $0x2a0] sm:$0xff]
  %v2513 = vld [vmem:[#allocation2 + $0x2a8] sm:$0xff]
  %v2514 = vld [vmem:[#allocation2 + $0x2b0] sm:$0xff]
  %v2515 = vld [vmem:[#allocation2 + $0x2b8] sm:$0xff]
  %v2516 = vld [vmem:[#allocation2 + $0x2c0] sm:$0xff]
  %v2517 = vld [vmem:[#allocation2 + $0x2c8] sm:$0xff]
  %v2518 = vld [vmem:[#allocation2 + $0x2d0] sm:$0xff]
  %v2519 = vld [vmem:[#allocation2 + $0x2d8] sm:$0xff]
  %v2520 = vld [vmem:[#allocation2 + $0x2e0] sm:$0xff]
  %v2521 = vld [vmem:[#allocation2 + $0x2e8] sm:$0xff]
  %v2522 = vld [vmem:[#allocation2 + $0x2f0] sm:$0xff]
  %v2523 = vld [vmem:[#allocation2 + $0x2f8] sm:$0xff]
  %v2524 = vld [vmem:[#allocation2 + $0x300] sm:$0xff]
  %v2525 = vld [vmem:[#allocation2 + $0x308] sm:$0xff]
  %v2526 = vld [vmem:[#allocation2 + $0x310] sm:$0xff]
  %v2527 = vld [vmem:[#allocation2 + $0x318] sm:$0xff]
  %v2528 = vld [vmem:[#allocation2 + $0x320] sm:$0xff]
  %v2529 = vld [vmem:[#allocation2 + $0x328] sm:$0xff]
  %v2530 = vld [vmem:[#allocation2 + $0x330] sm:$0xff]
  %v2531 = vld [vmem:[#allocation2 + $0x338] sm:$0xff]
  %v2532 = vld [vmem:[#allocation2 + $0x340] sm:$0xff]
  %v2533 = vld [vmem:[#allocation2 + $0x348] sm:$0xff]
  %v2534 = vld [vmem:[#allocation2 + $0x350] sm:$0xff]
  %v2535 = vld [vmem:[#allocation2 + $0x358] sm:$0xff]
  %v2536 = vld [vmem:[#allocation2 + $0x360] sm:$0xff]
  %v2537 = vld [vmem:[#allocation2 + $0x368] sm:$0xff]
  %v2538 = vld [vmem:[#allocation2 + $0x370] sm:$0xff]
  %v2539 = vld [vmem:[#allocation2 + $0x378] sm:$0xff]
  %v2540 = vld [vmem:[#allocation2 + $0x380] sm:$0xff]
  %v2541 = vld [vmem:[#allocation2 + $0x388] sm:$0xff]
  %v2542 = vld [vmem:[#allocation2 + $0x390] sm:$0xff]
  %v2543 = vld [vmem:[#allocation2 + $0x398] sm:$0xff]
  %v2544 = vld [vmem:[#allocation2 + $0x3a0] sm:$0xff]
  %v2545 = vld [vmem:[#allocation2 + $0x3a8] sm:$0xff]
  %v2546 = vld [vmem:[#allocation2 + $0x3b0] sm:$0xff]
  %v2547 = vld [vmem:[#allocation2 + $0x3b8] sm:$0xff]
  %v2548 = vld [vmem:[#allocation2 + $0x3c0] sm:$0xff]
  %v2549 = vld [vmem:[#allocation2 + $0x3c8] sm:$0xff]
  %v2550 = vld [vmem:[#allocation2 + $0x3d0] sm:$0xff]
  %v2551 = vld [vmem:[#allocation2 + $0x3d8] sm:$0xff]
  %v2552 = vld [vmem:[#allocation2 + $0x3e0] sm:$0xff]
  %v2553 = vld [vmem:[#allocation2 + $0x3e8] sm:$0xff]
  %v2554 = vld [vmem:[#allocation2 + $0x3f0] sm:$0xff]
  %v2555 = vld [vmem:[#allocation2 + $0x3f8] sm:$0xff]
  %v2556 = vld [vmem:[#allocation2 + $0x400] sm:$0xff]
  %v2557 = vld [vmem:[#allocation2 + $0x408] sm:$0xff]
  %v2558 = vld [vmem:[#allocation2 + $0x410] sm:$0xff]
  %v2559 = vld [vmem:[#allocation2 + $0x418] sm:$0xff]
  %v2560 = vld [vmem:[#allocation2 + $0x420] sm:$0xff]
  %v2561 = vld [vmem:[#allocation2 + $0x428] sm:$0xff]
  %v2562 = vld [vmem:[#allocation2 + $0x430] sm:$0xff]
  %v2563 = vld [vmem:[#allocation2 + $0x438] sm:$0xff]
  %v2564 = vld [vmem:[#allocation2 + $0x440] sm:$0xff]
  %v2565 = vld [vmem:[#allocation2 + $0x448] sm:$0xff]
  %v2566 = vld [vmem:[#allocation2 + $0x450] sm:$0xff]
  %v2567 = vld [vmem:[#allocation2 + $0x458] sm:$0xff]
  %v2568 = vld [vmem:[#allocation2 + $0x460] sm:$0xff]
  %v2569 = vld [vmem:[#allocation2 + $0x468] sm:$0xff]
  %v2570 = vld [vmem:[#allocation2 + $0x470] sm:$0xff]
  %v2571 = vld [vmem:[#allocation2 + $0x478] sm:$0xff]
  %v2572 = vld [vmem:[#allocation2 + $0x480] sm:$0xff]
  %v2573 = vld [vmem:[#allocation2 + $0x488] sm:$0xff]
  %v2574 = vld [vmem:[#allocation2 + $0x490] sm:$0xff]
  %v2575 = vld [vmem:[#allocation2 + $0x498] sm:$0xff]
  %v2576 = vld [vmem:[#allocation2 + $0x4a0] sm:$0xff]
  %v2577 = vld [vmem:[#allocation2 + $0x4a8] sm:$0xff]
  %v2578 = vld [vmem:[#allocation2 + $0x4b0] sm:$0xff]
  %v2579 = vld [vmem:[#allocation2 + $0x4b8] sm:$0xff]
  %v2580 = vld [vmem:[#allocation2 + $0x4c0] sm:$0xff]
  %v2581 = vld [vmem:[#allocation2 + $0x4c8] sm:$0xff]
  %v2582 = vld [vmem:[#allocation2 + $0x4d0] sm:$0xff]
  %v2583 = vld [vmem:[#allocation2 + $0x4d8] sm:$0xff]
  %v2584 = vld [vmem:[#allocation2 + $0x4e0] sm:$0xff]
  %v2585 = vld [vmem:[#allocation2 + $0x4e8] sm:$0xff]
  %v2586 = vld [vmem:[#allocation2 + $0x4f0] sm:$0xff]
  %v2587 = vld [vmem:[#allocation2 + $0x4f8] sm:$0xff]
  %v2588 = vld [vmem:[#allocation2 + $0x500] sm:$0xff]
  %v2589 = vld [vmem:[#allocation2 + $0x508] sm:$0xff]
  %v2590 = vld [vmem:[#allocation2 + $0x510] sm:$0xff]
  %v2591 = vld [vmem:[#allocation2 + $0x518] sm:$0xff]
  %v2592 = vld [vmem:[#allocation2 + $0x520] sm:$0xff]
  %v2593 = vld [vmem:[#allocation2 + $0x528] sm:$0xff]
  %v2594 = vld [vmem:[#allocation2 + $0x530] sm:$0xff]
  %v2595 = vld [vmem:[#allocation2 + $0x538] sm:$0xff]
  %v2596 = vld [vmem:[#allocation2 + $0x540] sm:$0xff]
  %v2597 = vld [vmem:[#allocation2 + $0x548] sm:$0xff]
  %v2598 = vld [vmem:[#allocation2 + $0x550] sm:$0xff]
  %v2599 = vld [vmem:[#allocation2 + $0x558] sm:$0xff]
  %v2600 = vld [vmem:[#allocation2 + $0x560] sm:$0xff]
  %v2601 = vld [vmem:[#allocation2 + $0x568] sm:$0xff]
  %v2602 = vld [vmem:[#allocation2 + $0x570] sm:$0xff]
  %v2603 = vld [vmem:[#allocation2 + $0x578] sm:$0xff]
  %v2604 = vld [vmem:[#allocation2 + $0x580] sm:$0xff]
  %v2605 = vld [vmem:[#allocation2 + $0x588] sm:$0xff]
  %v2606 = vld [vmem:[#allocation2 + $0x590] sm:$0xff]
  %v2607 = vld [vmem:[#allocation2 + $0x598] sm:$0xff]
  %v2608 = vld [vmem:[#allocation2 + $0x5a0] sm:$0xff]
  %v2609 = vld [vmem:[#allocation2 + $0x5a8] sm:$0xff]
  %v2610 = vld [vmem:[#allocation2 + $0x5b0] sm:$0xff]
  %v2611 = vld [vmem:[#allocation2 + $0x5b8] sm:$0xff]
  %v2612 = vld [vmem:[#allocation2 + $0x5c0] sm:$0xff]
  %v2613 = vld [vmem:[#allocation2 + $0x5c8] sm:$0xff]
  %v2614 = vld [vmem:[#allocation2 + $0x5d0] sm:$0xff]
  %v2615 = vld [vmem:[#allocation2 + $0x5d8] sm:$0xff]
  %v2616 = vld [vmem:[#allocation2 + $0x5e0] sm:$0xff]
  %v2617 = vld [vmem:[#allocation2 + $0x5e8] sm:$0xff]
  %v2618 = vld [vmem:[#allocation2 + $0x5f0] sm:$0xff]
  %v2619 = vld [vmem:[#allocation2 + $0x5f8] sm:$0xff]
  %2621 = vset.pattern.permute.xlu0 0
  %2622 = vperm.xlu0 %2621, %v2428
  %v2623 = vpop.permute.xlu0 %2622
  %2626 = vset.pattern.permute.xlu0 0
  %2627 = vperm.xlu0 %2626, %v2429
  %v2628 = vpop.permute.xlu0 %2627
  %2631 = vset.pattern.permute.xlu0 0
  %2632 = vperm.xlu0 %2631, %v2430
  %v2633 = vpop.permute.xlu0 %2632
  %2636 = vset.pattern.permute.xlu0 0
  %2637 = vperm.xlu0 %2636, %v2431
  %v2638 = vpop.permute.xlu0 %2637
  %2641 = vset.pattern.permute.xlu0 0
  %2642 = vperm.xlu0 %2641, %v2432
  %v2643 = vpop.permute.xlu0 %2642
  %2646 = vset.pattern.permute.xlu0 0
  %2647 = vperm.xlu0 %2646, %v2433
  %v2648 = vpop.permute.xlu0 %2647
  %2651 = vset.pattern.permute.xlu0 0
  %2652 = vperm.xlu0 %2651, %v2434
  %v2653 = vpop.permute.xlu0 %2652
  %2656 = vset.pattern.permute.xlu0 0
  %2657 = vperm.xlu0 %2656, %v2435
  %v2658 = vpop.permute.xlu0 %2657
  %2661 = vset.pattern.permute.xlu0 0
  %2662 = vperm.xlu0 %2661, %v2436
  %v2663 = vpop.permute.xlu0 %2662
  %2666 = vset.pattern.permute.xlu0 0
  %2667 = vperm.xlu0 %2666, %v2437
  %v2668 = vpop.permute.xlu0 %2667
  %2671 = vset.pattern.permute.xlu0 0
  %2672 = vperm.xlu0 %2671, %v2438
  %v2673 = vpop.permute.xlu0 %2672
  %2676 = vset.pattern.permute.xlu0 0
  %2677 = vperm.xlu0 %2676, %v2439
  %v2678 = vpop.permute.xlu0 %2677
  %2681 = vset.pattern.permute.xlu0 0
  %2682 = vperm.xlu0 %2681, %v2440
  %v2683 = vpop.permute.xlu0 %2682
  %2686 = vset.pattern.permute.xlu0 0
  %2687 = vperm.xlu0 %2686, %v2441
  %v2688 = vpop.permute.xlu0 %2687
  %2691 = vset.pattern.permute.xlu0 0
  %2692 = vperm.xlu0 %2691, %v2442
  %v2693 = vpop.permute.xlu0 %2692
  %2696 = vset.pattern.permute.xlu0 0
  %2697 = vperm.xlu0 %2696, %v2443
  %v2698 = vpop.permute.xlu0 %2697
  %2701 = vset.pattern.permute.xlu0 0
  %2702 = vperm.xlu0 %2701, %v2444
  %v2703 = vpop.permute.xlu0 %2702
  %2706 = vset.pattern.permute.xlu0 0
  %2707 = vperm.xlu0 %2706, %v2445
  %v2708 = vpop.permute.xlu0 %2707
  %2711 = vset.pattern.permute.xlu0 0
  %2712 = vperm.xlu0 %2711, %v2446
  %v2713 = vpop.permute.xlu0 %2712
  %2716 = vset.pattern.permute.xlu0 0
  %2717 = vperm.xlu0 %2716, %v2447
  %v2718 = vpop.permute.xlu0 %2717
  %2721 = vset.pattern.permute.xlu0 0
  %2722 = vperm.xlu0 %2721, %v2448
  %v2723 = vpop.permute.xlu0 %2722
  %2726 = vset.pattern.permute.xlu0 0
  %2727 = vperm.xlu0 %2726, %v2449
  %v2728 = vpop.permute.xlu0 %2727
  %2731 = vset.pattern.permute.xlu0 0
  %2732 = vperm.xlu0 %2731, %v2450
  %v2733 = vpop.permute.xlu0 %2732
  %2736 = vset.pattern.permute.xlu0 0
  %2737 = vperm.xlu0 %2736, %v2451
  %v2738 = vpop.permute.xlu0 %2737
  %2741 = vset.pattern.permute.xlu0 0
  %2742 = vperm.xlu0 %2741, %v2452
  %v2743 = vpop.permute.xlu0 %2742
  %2746 = vset.pattern.permute.xlu0 0
  %2747 = vperm.xlu0 %2746, %v2453
  %v2748 = vpop.permute.xlu0 %2747
  %2751 = vset.pattern.permute.xlu0 0
  %2752 = vperm.xlu0 %2751, %v2454
  %v2753 = vpop.permute.xlu0 %2752
  %2756 = vset.pattern.permute.xlu0 0
  %2757 = vperm.xlu0 %2756, %v2455
  %v2758 = vpop.permute.xlu0 %2757
  %2761 = vset.pattern.permute.xlu0 0
  %2762 = vperm.xlu0 %2761, %v2456
  %v2763 = vpop.permute.xlu0 %2762
  %2766 = vset.pattern.permute.xlu0 0
  %2767 = vperm.xlu0 %2766, %v2457
  %v2768 = vpop.permute.xlu0 %2767
  %2771 = vset.pattern.permute.xlu0 0
  %2772 = vperm.xlu0 %2771, %v2458
  %v2773 = vpop.permute.xlu0 %2772
  %2776 = vset.pattern.permute.xlu0 0
  %2777 = vperm.xlu0 %2776, %v2459
  %v2778 = vpop.permute.xlu0 %2777
  %2781 = vset.pattern.permute.xlu0 0
  %2782 = vperm.xlu0 %2781, %v2460
  %v2783 = vpop.permute.xlu0 %2782
  %2786 = vset.pattern.permute.xlu0 0
  %2787 = vperm.xlu0 %2786, %v2461
  %v2788 = vpop.permute.xlu0 %2787
  %2791 = vset.pattern.permute.xlu0 0
  %2792 = vperm.xlu0 %2791, %v2462
  %v2793 = vpop.permute.xlu0 %2792
  %2796 = vset.pattern.permute.xlu0 0
  %2797 = vperm.xlu0 %2796, %v2463
  %v2798 = vpop.permute.xlu0 %2797
  %2801 = vset.pattern.permute.xlu0 0
  %2802 = vperm.xlu0 %2801, %v2464
  %v2803 = vpop.permute.xlu0 %2802
  %2806 = vset.pattern.permute.xlu0 0
  %2807 = vperm.xlu0 %2806, %v2465
  %v2808 = vpop.permute.xlu0 %2807
  %2811 = vset.pattern.permute.xlu0 0
  %2812 = vperm.xlu0 %2811, %v2466
  %v2813 = vpop.permute.xlu0 %2812
  %2816 = vset.pattern.permute.xlu0 0
  %2817 = vperm.xlu0 %2816, %v2467
  %v2818 = vpop.permute.xlu0 %2817
  %2821 = vset.pattern.permute.xlu0 0
  %2822 = vperm.xlu0 %2821, %v2468
  %v2823 = vpop.permute.xlu0 %2822
  %2826 = vset.pattern.permute.xlu0 0
  %2827 = vperm.xlu0 %2826, %v2469
  %v2828 = vpop.permute.xlu0 %2827
  %2831 = vset.pattern.permute.xlu0 0
  %2832 = vperm.xlu0 %2831, %v2470
  %v2833 = vpop.permute.xlu0 %2832
  %2836 = vset.pattern.permute.xlu0 0
  %2837 = vperm.xlu0 %2836, %v2471
  %v2838 = vpop.permute.xlu0 %2837
  %2841 = vset.pattern.permute.xlu0 0
  %2842 = vperm.xlu0 %2841, %v2472
  %v2843 = vpop.permute.xlu0 %2842
  %2846 = vset.pattern.permute.xlu0 0
  %2847 = vperm.xlu0 %2846, %v2473
  %v2848 = vpop.permute.xlu0 %2847
  %2851 = vset.pattern.permute.xlu0 0
  %2852 = vperm.xlu0 %2851, %v2474
  %v2853 = vpop.permute.xlu0 %2852
  %2856 = vset.pattern.permute.xlu0 0
  %2857 = vperm.xlu0 %2856, %v2475
  %v2858 = vpop.permute.xlu0 %2857
  %2861 = vset.pattern.permute.xlu0 0
  %2862 = vperm.xlu0 %2861, %v2476
  %v2863 = vpop.permute.xlu0 %2862
  %2866 = vset.pattern.permute.xlu0 0
  %2867 = vperm.xlu0 %2866, %v2477
  %v2868 = vpop.permute.xlu0 %2867
  %2871 = vset.pattern.permute.xlu0 0
  %2872 = vperm.xlu0 %2871, %v2478
  %v2873 = vpop.permute.xlu0 %2872
  %2876 = vset.pattern.permute.xlu0 0
  %2877 = vperm.xlu0 %2876, %v2479
  %v2878 = vpop.permute.xlu0 %2877
  %2881 = vset.pattern.permute.xlu0 0
  %2882 = vperm.xlu0 %2881, %v2480
  %v2883 = vpop.permute.xlu0 %2882
  %2886 = vset.pattern.permute.xlu0 0
  %2887 = vperm.xlu0 %2886, %v2481
  %v2888 = vpop.permute.xlu0 %2887
  %2891 = vset.pattern.permute.xlu0 0
  %2892 = vperm.xlu0 %2891, %v2482
  %v2893 = vpop.permute.xlu0 %2892
  %2896 = vset.pattern.permute.xlu0 0
  %2897 = vperm.xlu0 %2896, %v2483
  %v2898 = vpop.permute.xlu0 %2897
  %2901 = vset.pattern.permute.xlu0 0
  %2902 = vperm.xlu0 %2901, %v2484
  %v2903 = vpop.permute.xlu0 %2902
  %2906 = vset.pattern.permute.xlu0 0
  %2907 = vperm.xlu0 %2906, %v2485
  %v2908 = vpop.permute.xlu0 %2907
  %2911 = vset.pattern.permute.xlu0 0
  %2912 = vperm.xlu0 %2911, %v2486
  %v2913 = vpop.permute.xlu0 %2912
  %2916 = vset.pattern.permute.xlu0 0
  %2917 = vperm.xlu0 %2916, %v2487
  %v2918 = vpop.permute.xlu0 %2917
  %2921 = vset.pattern.permute.xlu0 0
  %2922 = vperm.xlu0 %2921, %v2488
  %v2923 = vpop.permute.xlu0 %2922
  %2926 = vset.pattern.permute.xlu0 0
  %2927 = vperm.xlu0 %2926, %v2489
  %v2928 = vpop.permute.xlu0 %2927
  %2931 = vset.pattern.permute.xlu0 0
  %2932 = vperm.xlu0 %2931, %v2490
  %v2933 = vpop.permute.xlu0 %2932
  %2936 = vset.pattern.permute.xlu0 0
  %2937 = vperm.xlu0 %2936, %v2491
  %v2938 = vpop.permute.xlu0 %2937
  %2941 = vset.pattern.permute.xlu0 0
  %2942 = vperm.xlu0 %2941, %v2492
  %v2943 = vpop.permute.xlu0 %2942
  %2946 = vset.pattern.permute.xlu0 0
  %2947 = vperm.xlu0 %2946, %v2493
  %v2948 = vpop.permute.xlu0 %2947
  %2951 = vset.pattern.permute.xlu0 0
  %2952 = vperm.xlu0 %2951, %v2494
  %v2953 = vpop.permute.xlu0 %2952
  %2956 = vset.pattern.permute.xlu0 0
  %2957 = vperm.xlu0 %2956, %v2495
  %v2958 = vpop.permute.xlu0 %2957
  %2961 = vset.pattern.permute.xlu0 0
  %2962 = vperm.xlu0 %2961, %v2496
  %v2963 = vpop.permute.xlu0 %2962
  %2966 = vset.pattern.permute.xlu0 0
  %2967 = vperm.xlu0 %2966, %v2497
  %v2968 = vpop.permute.xlu0 %2967
  %2971 = vset.pattern.permute.xlu0 0
  %2972 = vperm.xlu0 %2971, %v2498
  %v2973 = vpop.permute.xlu0 %2972
  %2976 = vset.pattern.permute.xlu0 0
  %2977 = vperm.xlu0 %2976, %v2499
  %v2978 = vpop.permute.xlu0 %2977
  %2981 = vset.pattern.permute.xlu0 0
  %2982 = vperm.xlu0 %2981, %v2500
  %v2983 = vpop.permute.xlu0 %2982
  %2986 = vset.pattern.permute.xlu0 0
  %2987 = vperm.xlu0 %2986, %v2501
  %v2988 = vpop.permute.xlu0 %2987
  %2991 = vset.pattern.permute.xlu0 0
  %2992 = vperm.xlu0 %2991, %v2502
  %v2993 = vpop.permute.xlu0 %2992
  %2996 = vset.pattern.permute.xlu0 0
  %2997 = vperm.xlu0 %2996, %v2503
  %v2998 = vpop.permute.xlu0 %2997
  %3001 = vset.pattern.permute.xlu0 0
  %3002 = vperm.xlu0 %3001, %v2504
  %v3003 = vpop.permute.xlu0 %3002
  %3006 = vset.pattern.permute.xlu0 0
  %3007 = vperm.xlu0 %3006, %v2505
  %v3008 = vpop.permute.xlu0 %3007
  %3011 = vset.pattern.permute.xlu0 0
  %3012 = vperm.xlu0 %3011, %v2506
  %v3013 = vpop.permute.xlu0 %3012
  %3016 = vset.pattern.permute.xlu0 0
  %3017 = vperm.xlu0 %3016, %v2507
  %v3018 = vpop.permute.xlu0 %3017
  %3021 = vset.pattern.permute.xlu0 0
  %3022 = vperm.xlu0 %3021, %v2508
  %v3023 = vpop.permute.xlu0 %3022
  %3026 = vset.pattern.permute.xlu0 0
  %3027 = vperm.xlu0 %3026, %v2509
  %v3028 = vpop.permute.xlu0 %3027
  %3031 = vset.pattern.permute.xlu0 0
  %3032 = vperm.xlu0 %3031, %v2510
  %v3033 = vpop.permute.xlu0 %3032
  %3036 = vset.pattern.permute.xlu0 0
  %3037 = vperm.xlu0 %3036, %v2511
  %v3038 = vpop.permute.xlu0 %3037
  %3041 = vset.pattern.permute.xlu0 0
  %3042 = vperm.xlu0 %3041, %v2512
  %v3043 = vpop.permute.xlu0 %3042
  %3046 = vset.pattern.permute.xlu0 0
  %3047 = vperm.xlu0 %3046, %v2513
  %v3048 = vpop.permute.xlu0 %3047
  %3051 = vset.pattern.permute.xlu0 0
  %3052 = vperm.xlu0 %3051, %v2514
  %v3053 = vpop.permute.xlu0 %3052
  %3056 = vset.pattern.permute.xlu0 0
  %3057 = vperm.xlu0 %3056, %v2515
  %v3058 = vpop.permute.xlu0 %3057
  %3061 = vset.pattern.permute.xlu0 0
  %3062 = vperm.xlu0 %3061, %v2516
  %v3063 = vpop.permute.xlu0 %3062
  %3066 = vset.pattern.permute.xlu0 0
  %3067 = vperm.xlu0 %3066, %v2517
  %v3068 = vpop.permute.xlu0 %3067
  %3071 = vset.pattern.permute.xlu0 0
  %3072 = vperm.xlu0 %3071, %v2518
  %v3073 = vpop.permute.xlu0 %3072
  %3076 = vset.pattern.permute.xlu0 0
  %3077 = vperm.xlu0 %3076, %v2519
  %v3078 = vpop.permute.xlu0 %3077
  %3081 = vset.pattern.permute.xlu0 0
  %3082 = vperm.xlu0 %3081, %v2520
  %v3083 = vpop.permute.xlu0 %3082
  %3086 = vset.pattern.permute.xlu0 0
  %3087 = vperm.xlu0 %3086, %v2521
  %v3088 = vpop.permute.xlu0 %3087
  %3091 = vset.pattern.permute.xlu0 0
  %3092 = vperm.xlu0 %3091, %v2522
  %v3093 = vpop.permute.xlu0 %3092
  %3096 = vset.pattern.permute.xlu0 0
  %3097 = vperm.xlu0 %3096, %v2523
  %v3098 = vpop.permute.xlu0 %3097
  %3101 = vset.pattern.permute.xlu0 0
  %3102 = vperm.xlu0 %3101, %v2524
  %v3103 = vpop.permute.xlu0 %3102
  %3106 = vset.pattern.permute.xlu0 0
  %3107 = vperm.xlu0 %3106, %v2525
  %v3108 = vpop.permute.xlu0 %3107
  %3111 = vset.pattern.permute.xlu0 0
  %3112 = vperm.xlu0 %3111, %v2526
  %v3113 = vpop.permute.xlu0 %3112
  %3116 = vset.pattern.permute.xlu0 0
  %3117 = vperm.xlu0 %3116, %v2527
  %v3118 = vpop.permute.xlu0 %3117
  %3121 = vset.pattern.permute.xlu0 0
  %3122 = vperm.xlu0 %3121, %v2528
  %v3123 = vpop.permute.xlu0 %3122
  %3126 = vset.pattern.permute.xlu0 0
  %3127 = vperm.xlu0 %3126, %v2529
  %v3128 = vpop.permute.xlu0 %3127
  %3131 = vset.pattern.permute.xlu0 0
  %3132 = vperm.xlu0 %3131, %v2530
  %v3133 = vpop.permute.xlu0 %3132
  %3136 = vset.pattern.permute.xlu0 0
  %3137 = vperm.xlu0 %3136, %v2531
  %v3138 = vpop.permute.xlu0 %3137
  %3141 = vset.pattern.permute.xlu0 0
  %3142 = vperm.xlu0 %3141, %v2532
  %v3143 = vpop.permute.xlu0 %3142
  %3146 = vset.pattern.permute.xlu0 0
  %3147 = vperm.xlu0 %3146, %v2533
  %v3148 = vpop.permute.xlu0 %3147
  %3151 = vset.pattern.permute.xlu0 0
  %3152 = vperm.xlu0 %3151, %v2534
  %v3153 = vpop.permute.xlu0 %3152
  %3156 = vset.pattern.permute.xlu0 0
  %3157 = vperm.xlu0 %3156, %v2535
  %v3158 = vpop.permute.xlu0 %3157
  %3161 = vset.pattern.permute.xlu0 0
  %3162 = vperm.xlu0 %3161, %v2536
  %v3163 = vpop.permute.xlu0 %3162
  %3166 = vset.pattern.permute.xlu0 0
  %3167 = vperm.xlu0 %3166, %v2537
  %v3168 = vpop.permute.xlu0 %3167
  %3171 = vset.pattern.permute.xlu0 0
  %3172 = vperm.xlu0 %3171, %v2538
  %v3173 = vpop.permute.xlu0 %3172
  %3176 = vset.pattern.permute.xlu0 0
  %3177 = vperm.xlu0 %3176, %v2539
  %v3178 = vpop.permute.xlu0 %3177
  %3181 = vset.pattern.permute.xlu0 0
  %3182 = vperm.xlu0 %3181, %v2540
  %v3183 = vpop.permute.xlu0 %3182
  %3186 = vset.pattern.permute.xlu0 0
  %3187 = vperm.xlu0 %3186, %v2541
  %v3188 = vpop.permute.xlu0 %3187
  %3191 = vset.pattern.permute.xlu0 0
  %3192 = vperm.xlu0 %3191, %v2542
  %v3193 = vpop.permute.xlu0 %3192
  %3196 = vset.pattern.permute.xlu0 0
  %3197 = vperm.xlu0 %3196, %v2543
  %v3198 = vpop.permute.xlu0 %3197
  %3201 = vset.pattern.permute.xlu0 0
  %3202 = vperm.xlu0 %3201, %v2544
  %v3203 = vpop.permute.xlu0 %3202
  %3206 = vset.pattern.permute.xlu0 0
  %3207 = vperm.xlu0 %3206, %v2545
  %v3208 = vpop.permute.xlu0 %3207
  %3211 = vset.pattern.permute.xlu0 0
  %3212 = vperm.xlu0 %3211, %v2546
  %v3213 = vpop.permute.xlu0 %3212
  %3216 = vset.pattern.permute.xlu0 0
  %3217 = vperm.xlu0 %3216, %v2547
  %v3218 = vpop.permute.xlu0 %3217
  %3221 = vset.pattern.permute.xlu0 0
  %3222 = vperm.xlu0 %3221, %v2548
  %v3223 = vpop.permute.xlu0 %3222
  %3226 = vset.pattern.permute.xlu0 0
  %3227 = vperm.xlu0 %3226, %v2549
  %v3228 = vpop.permute.xlu0 %3227
  %3231 = vset.pattern.permute.xlu0 0
  %3232 = vperm.xlu0 %3231, %v2550
  %v3233 = vpop.permute.xlu0 %3232
  %3236 = vset.pattern.permute.xlu0 0
  %3237 = vperm.xlu0 %3236, %v2551
  %v3238 = vpop.permute.xlu0 %3237
  %3241 = vset.pattern.permute.xlu0 0
  %3242 = vperm.xlu0 %3241, %v2552
  %v3243 = vpop.permute.xlu0 %3242
  %3246 = vset.pattern.permute.xlu0 0
  %3247 = vperm.xlu0 %3246, %v2553
  %v3248 = vpop.permute.xlu0 %3247
  %3251 = vset.pattern.permute.xlu0 0
  %3252 = vperm.xlu0 %3251, %v2554
  %v3253 = vpop.permute.xlu0 %3252
  %3256 = vset.pattern.permute.xlu0 0
  %3257 = vperm.xlu0 %3256, %v2555
  %v3258 = vpop.permute.xlu0 %3257
  %3261 = vset.pattern.permute.xlu0 0
  %3262 = vperm.xlu0 %3261, %v2556
  %v3263 = vpop.permute.xlu0 %3262
  %3266 = vset.pattern.permute.xlu0 0
  %3267 = vperm.xlu0 %3266, %v2557
  %v3268 = vpop.permute.xlu0 %3267
  %3271 = vset.pattern.permute.xlu0 0
  %3272 = vperm.xlu0 %3271, %v2558
  %v3273 = vpop.permute.xlu0 %3272
  %3276 = vset.pattern.permute.xlu0 0
  %3277 = vperm.xlu0 %3276, %v2559
  %v3278 = vpop.permute.xlu0 %3277
  %3281 = vset.pattern.permute.xlu0 0
  %3282 = vperm.xlu0 %3281, %v2560
  %v3283 = vpop.permute.xlu0 %3282
  %3286 = vset.pattern.permute.xlu0 0
  %3287 = vperm.xlu0 %3286, %v2561
  %v3288 = vpop.permute.xlu0 %3287
  %3291 = vset.pattern.permute.xlu0 0
  %3292 = vperm.xlu0 %3291, %v2562
  %v3293 = vpop.permute.xlu0 %3292
  %3296 = vset.pattern.permute.xlu0 0
  %3297 = vperm.xlu0 %3296, %v2563
  %v3298 = vpop.permute.xlu0 %3297
  %3301 = vset.pattern.permute.xlu0 0
  %3302 = vperm.xlu0 %3301, %v2564
  %v3303 = vpop.permute.xlu0 %3302
  %3306 = vset.pattern.permute.xlu0 0
  %3307 = vperm.xlu0 %3306, %v2565
  %v3308 = vpop.permute.xlu0 %3307
  %3311 = vset.pattern.permute.xlu0 0
  %3312 = vperm.xlu0 %3311, %v2566
  %v3313 = vpop.permute.xlu0 %3312
  %3316 = vset.pattern.permute.xlu0 0
  %3317 = vperm.xlu0 %3316, %v2567
  %v3318 = vpop.permute.xlu0 %3317
  %3321 = vset.pattern.permute.xlu0 0
  %3322 = vperm.xlu0 %3321, %v2568
  %v3323 = vpop.permute.xlu0 %3322
  %3326 = vset.pattern.permute.xlu0 0
  %3327 = vperm.xlu0 %3326, %v2569
  %v3328 = vpop.permute.xlu0 %3327
  %3331 = vset.pattern.permute.xlu0 0
  %3332 = vperm.xlu0 %3331, %v2570
  %v3333 = vpop.permute.xlu0 %3332
  %3336 = vset.pattern.permute.xlu0 0
  %3337 = vperm.xlu0 %3336, %v2571
  %v3338 = vpop.permute.xlu0 %3337
  %3341 = vset.pattern.permute.xlu0 0
  %3342 = vperm.xlu0 %3341, %v2572
  %v3343 = vpop.permute.xlu0 %3342
  %3346 = vset.pattern.permute.xlu0 0
  %3347 = vperm.xlu0 %3346, %v2573
  %v3348 = vpop.permute.xlu0 %3347
  %3351 = vset.pattern.permute.xlu0 0
  %3352 = vperm.xlu0 %3351, %v2574
  %v3353 = vpop.permute.xlu0 %3352
  %3356 = vset.pattern.permute.xlu0 0
  %3357 = vperm.xlu0 %3356, %v2575
  %v3358 = vpop.permute.xlu0 %3357
  %3361 = vset.pattern.permute.xlu0 0
  %3362 = vperm.xlu0 %3361, %v2576
  %v3363 = vpop.permute.xlu0 %3362
  %3366 = vset.pattern.permute.xlu0 0
  %3367 = vperm.xlu0 %3366, %v2577
  %v3368 = vpop.permute.xlu0 %3367
  %3371 = vset.pattern.permute.xlu0 0
  %3372 = vperm.xlu0 %3371, %v2578
  %v3373 = vpop.permute.xlu0 %3372
  %3376 = vset.pattern.permute.xlu0 0
  %3377 = vperm.xlu0 %3376, %v2579
  %v3378 = vpop.permute.xlu0 %3377
  %3381 = vset.pattern.permute.xlu0 0
  %3382 = vperm.xlu0 %3381, %v2580
  %v3383 = vpop.permute.xlu0 %3382
  %3386 = vset.pattern.permute.xlu0 0
  %3387 = vperm.xlu0 %3386, %v2581
  %v3388 = vpop.permute.xlu0 %3387
  %3391 = vset.pattern.permute.xlu0 0
  %3392 = vperm.xlu0 %3391, %v2582
  %v3393 = vpop.permute.xlu0 %3392
  %3396 = vset.pattern.permute.xlu0 0
  %3397 = vperm.xlu0 %3396, %v2583
  %v3398 = vpop.permute.xlu0 %3397
  %3401 = vset.pattern.permute.xlu0 0
  %3402 = vperm.xlu0 %3401, %v2584
  %v3403 = vpop.permute.xlu0 %3402
  %3406 = vset.pattern.permute.xlu0 0
  %3407 = vperm.xlu0 %3406, %v2585
  %v3408 = vpop.permute.xlu0 %3407
  %3411 = vset.pattern.permute.xlu0 0
  %3412 = vperm.xlu0 %3411, %v2586
  %v3413 = vpop.permute.xlu0 %3412
  %3416 = vset.pattern.permute.xlu0 0
  %3417 = vperm.xlu0 %3416, %v2587
  %v3418 = vpop.permute.xlu0 %3417
  %3421 = vset.pattern.permute.xlu0 0
  %3422 = vperm.xlu0 %3421, %v2588
  %v3423 = vpop.permute.xlu0 %3422
  %3426 = vset.pattern.permute.xlu0 0
  %3427 = vperm.xlu0 %3426, %v2589
  %v3428 = vpop.permute.xlu0 %3427
  %3431 = vset.pattern.permute.xlu0 0
  %3432 = vperm.xlu0 %3431, %v2590
  %v3433 = vpop.permute.xlu0 %3432
  %3436 = vset.pattern.permute.xlu0 0
  %3437 = vperm.xlu0 %3436, %v2591
  %v3438 = vpop.permute.xlu0 %3437
  %3441 = vset.pattern.permute.xlu0 0
  %3442 = vperm.xlu0 %3441, %v2592
  %v3443 = vpop.permute.xlu0 %3442
  %3446 = vset.pattern.permute.xlu0 0
  %3447 = vperm.xlu0 %3446, %v2593
  %v3448 = vpop.permute.xlu0 %3447
  %3451 = vset.pattern.permute.xlu0 0
  %3452 = vperm.xlu0 %3451, %v2594
  %v3453 = vpop.permute.xlu0 %3452
  %3456 = vset.pattern.permute.xlu0 0
  %3457 = vperm.xlu0 %3456, %v2595
  %v3458 = vpop.permute.xlu0 %3457
  %3461 = vset.pattern.permute.xlu0 0
  %3462 = vperm.xlu0 %3461, %v2596
  %v3463 = vpop.permute.xlu0 %3462
  %3466 = vset.pattern.permute.xlu0 0
  %3467 = vperm.xlu0 %3466, %v2597
  %v3468 = vpop.permute.xlu0 %3467
  %3471 = vset.pattern.permute.xlu0 0
  %3472 = vperm.xlu0 %3471, %v2598
  %v3473 = vpop.permute.xlu0 %3472
  %3476 = vset.pattern.permute.xlu0 0
  %3477 = vperm.xlu0 %3476, %v2599
  %v3478 = vpop.permute.xlu0 %3477
  %3481 = vset.pattern.permute.xlu0 0
  %3482 = vperm.xlu0 %3481, %v2600
  %v3483 = vpop.permute.xlu0 %3482
  %3486 = vset.pattern.permute.xlu0 0
  %3487 = vperm.xlu0 %3486, %v2601
  %v3488 = vpop.permute.xlu0 %3487
  %3491 = vset.pattern.permute.xlu0 0
  %3492 = vperm.xlu0 %3491, %v2602
  %v3493 = vpop.permute.xlu0 %3492
  %3496 = vset.pattern.permute.xlu0 0
  %3497 = vperm.xlu0 %3496, %v2603
  %v3498 = vpop.permute.xlu0 %3497
  %3501 = vset.pattern.permute.xlu0 0
  %3502 = vperm.xlu0 %3501, %v2604
  %v3503 = vpop.permute.xlu0 %3502
  %3506 = vset.pattern.permute.xlu0 0
  %3507 = vperm.xlu0 %3506, %v2605
  %v3508 = vpop.permute.xlu0 %3507
  %3511 = vset.pattern.permute.xlu0 0
  %3512 = vperm.xlu0 %3511, %v2606
  %v3513 = vpop.permute.xlu0 %3512
  %3516 = vset.pattern.permute.xlu0 0
  %3517 = vperm.xlu0 %3516, %v2607
  %v3518 = vpop.permute.xlu0 %3517
  %3521 = vset.pattern.permute.xlu0 0
  %3522 = vperm.xlu0 %3521, %v2608
  %v3523 = vpop.permute.xlu0 %3522
  %3526 = vset.pattern.permute.xlu0 0
  %3527 = vperm.xlu0 %3526, %v2609
  %v3528 = vpop.permute.xlu0 %3527
  %3531 = vset.pattern.permute.xlu0 0
  %3532 = vperm.xlu0 %3531, %v2610
  %v3533 = vpop.permute.xlu0 %3532
  %3536 = vset.pattern.permute.xlu0 0
  %3537 = vperm.xlu0 %3536, %v2611
  %v3538 = vpop.permute.xlu0 %3537
  %3541 = vset.pattern.permute.xlu0 0
  %3542 = vperm.xlu0 %3541, %v2612
  %v3543 = vpop.permute.xlu0 %3542
  %3546 = vset.pattern.permute.xlu0 0
  %3547 = vperm.xlu0 %3546, %v2613
  %v3548 = vpop.permute.xlu0 %3547
  %3551 = vset.pattern.permute.xlu0 0
  %3552 = vperm.xlu0 %3551, %v2614
  %v3553 = vpop.permute.xlu0 %3552
  %3556 = vset.pattern.permute.xlu0 0
  %3557 = vperm.xlu0 %3556, %v2615
  %v3558 = vpop.permute.xlu0 %3557
  %3561 = vset.pattern.permute.xlu0 0
  %3562 = vperm.xlu0 %3561, %v2616
  %v3563 = vpop.permute.xlu0 %3562
  %3566 = vset.pattern.permute.xlu0 0
  %3567 = vperm.xlu0 %3566, %v2617
  %v3568 = vpop.permute.xlu0 %3567
  %3571 = vset.pattern.permute.xlu0 0
  %3572 = vperm.xlu0 %3571, %v2618
  %v3573 = vpop.permute.xlu0 %3572
  %3576 = vset.pattern.permute.xlu0 0
  %3577 = vperm.xlu0 %3576, %v2619
  %v3578 = vpop.permute.xlu0 %3577
  %v3580 = vmul.f32 %v2236, %v2623
  %v3581 = vmul.f32 %v2237, %v2628
  %v3582 = vmul.f32 %v2238, %v2633
  %v3583 = vmul.f32 %v2239, %v2638
  %v3584 = vmul.f32 %v2240, %v2643
  %v3585 = vmul.f32 %v2241, %v2648
  %v3586 = vmul.f32 %v2242, %v2653
  %v3587 = vmul.f32 %v2243, %v2658
  %v3588 = vmul.f32 %v2244, %v2663
  %v3589 = vmul.f32 %v2245, %v2668
  %v3590 = vmul.f32 %v2246, %v2673
  %v3591 = vmul.f32 %v2247, %v2678
  %v3592 = vmul.f32 %v2248, %v2683
  %v3593 = vmul.f32 %v2249, %v2688
  %v3594 = vmul.f32 %v2250, %v2693
  %v3595 = vmul.f32 %v2251, %v2698
  %v3596 = vmul.f32 %v2252, %v2703
  %v3597 = vmul.f32 %v2253, %v2708
  %v3598 = vmul.f32 %v2254, %v2713
  %v3599 = vmul.f32 %v2255, %v2718
  %v3600 = vmul.f32 %v2256, %v2723
  %v3601 = vmul.f32 %v2257, %v2728
  %v3602 = vmul.f32 %v2258, %v2733
  %v3603 = vmul.f32 %v2259, %v2738
  %v3604 = vmul.f32 %v2260, %v2743
  %v3605 = vmul.f32 %v2261, %v2748
  %v3606 = vmul.f32 %v2262, %v2753
  %v3607 = vmul.f32 %v2263, %v2758
  %v3608 = vmul.f32 %v2264, %v2763
  %v3609 = vmul.f32 %v2265, %v2768
  %v3610 = vmul.f32 %v2266, %v2773
  %v3611 = vmul.f32 %v2267, %v2778
  %v3612 = vmul.f32 %v2268, %v2783
  %v3613 = vmul.f32 %v2269, %v2788
  %v3614 = vmul.f32 %v2270, %v2793
  %v3615 = vmul.f32 %v2271, %v2798
  %v3616 = vmul.f32 %v2272, %v2803
  %v3617 = vmul.f32 %v2273, %v2808
  %v3618 = vmul.f32 %v2274, %v2813
  %v3619 = vmul.f32 %v2275, %v2818
  %v3620 = vmul.f32 %v2276, %v2823
  %v3621 = vmul.f32 %v2277, %v2828
  %v3622 = vmul.f32 %v2278, %v2833
  %v3623 = vmul.f32 %v2279, %v2838
  %v3624 = vmul.f32 %v2280, %v2843
  %v3625 = vmul.f32 %v2281, %v2848
  %v3626 = vmul.f32 %v2282, %v2853
  %v3627 = vmul.f32 %v2283, %v2858
  %v3628 = vmul.f32 %v2284, %v2863
  %v3629 = vmul.f32 %v2285, %v2868
  %v3630 = vmul.f32 %v2286, %v2873
  %v3631 = vmul.f32 %v2287, %v2878
  %v3632 = vmul.f32 %v2288, %v2883
  %v3633 = vmul.f32 %v2289, %v2888
  %v3634 = vmul.f32 %v2290, %v2893
  %v3635 = vmul.f32 %v2291, %v2898
  %v3636 = vmul.f32 %v2292, %v2903
  %v3637 = vmul.f32 %v2293, %v2908
  %v3638 = vmul.f32 %v2294, %v2913
  %v3639 = vmul.f32 %v2295, %v2918
  %v3640 = vmul.f32 %v2296, %v2923
  %v3641 = vmul.f32 %v2297, %v2928
  %v3642 = vmul.f32 %v2298, %v2933
  %v3643 = vmul.f32 %v2299, %v2938
  %v3644 = vmul.f32 %v2300, %v2943
  %v3645 = vmul.f32 %v2301, %v2948
  %v3646 = vmul.f32 %v2302, %v2953
  %v3647 = vmul.f32 %v2303, %v2958
  %v3648 = vmul.f32 %v2304, %v2963
  %v3649 = vmul.f32 %v2305, %v2968
  %v3650 = vmul.f32 %v2306, %v2973
  %v3651 = vmul.f32 %v2307, %v2978
  %v3652 = vmul.f32 %v2308, %v2983
  %v3653 = vmul.f32 %v2309, %v2988
  %v3654 = vmul.f32 %v2310, %v2993
  %v3655 = vmul.f32 %v2311, %v2998
  %v3656 = vmul.f32 %v2312, %v3003
  %v3657 = vmul.f32 %v2313, %v3008
  %v3658 = vmul.f32 %v2314, %v3013
  %v3659 = vmul.f32 %v2315, %v3018
  %v3660 = vmul.f32 %v2316, %v3023
  %v3661 = vmul.f32 %v2317, %v3028
  %v3662 = vmul.f32 %v2318, %v3033
  %v3663 = vmul.f32 %v2319, %v3038
  %v3664 = vmul.f32 %v2320, %v3043
  %v3665 = vmul.f32 %v2321, %v3048
  %v3666 = vmul.f32 %v2322, %v3053
  %v3667 = vmul.f32 %v2323, %v3058
  %v3668 = vmul.f32 %v2324, %v3063
  %v3669 = vmul.f32 %v2325, %v3068
  %v3670 = vmul.f32 %v2326, %v3073
  %v3671 = vmul.f32 %v2327, %v3078
  %v3672 = vmul.f32 %v2328, %v3083
  %v3673 = vmul.f32 %v2329, %v3088
  %v3674 = vmul.f32 %v2330, %v3093
  %v3675 = vmul.f32 %v2331, %v3098
  %v3676 = vmul.f32 %v2332, %v3103
  %v3677 = vmul.f32 %v2333, %v3108
  %v3678 = vmul.f32 %v2334, %v3113
  %v3679 = vmul.f32 %v2335, %v3118
  %v3680 = vmul.f32 %v2336, %v3123
  %v3681 = vmul.f32 %v2337, %v3128
  %v3682 = vmul.f32 %v2338, %v3133
  %v3683 = vmul.f32 %v2339, %v3138
  %v3684 = vmul.f32 %v2340, %v3143
  %v3685 = vmul.f32 %v2341, %v3148
  %v3686 = vmul.f32 %v2342, %v3153
  %v3687 = vmul.f32 %v2343, %v3158
  %v3688 = vmul.f32 %v2344, %v3163
  %v3689 = vmul.f32 %v2345, %v3168
  %v3690 = vmul.f32 %v2346, %v3173
  %v3691 = vmul.f32 %v2347, %v3178
  %v3692 = vmul.f32 %v2348, %v3183
  %v3693 = vmul.f32 %v2349, %v3188
  %v3694 = vmul.f32 %v2350, %v3193
  %v3695 = vmul.f32 %v2351, %v3198
  %v3696 = vmul.f32 %v2352, %v3203
  %v3697 = vmul.f32 %v2353, %v3208
  %v3698 = vmul.f32 %v2354, %v3213
  %v3699 = vmul.f32 %v2355, %v3218
  %v3700 = vmul.f32 %v2356, %v3223
  %v3701 = vmul.f32 %v2357, %v3228
  %v3702 = vmul.f32 %v2358, %v3233
  %v3703 = vmul.f32 %v2359, %v3238
  %v3704 = vmul.f32 %v2360, %v3243
  %v3705 = vmul.f32 %v2361, %v3248
  %v3706 = vmul.f32 %v2362, %v3253
  %v3707 = vmul.f32 %v2363, %v3258
  %v3708 = vmul.f32 %v2364, %v3263
  %v3709 = vmul.f32 %v2365, %v3268
  %v3710 = vmul.f32 %v2366, %v3273
  %v3711 = vmul.f32 %v2367, %v3278
  %v3712 = vmul.f32 %v2368, %v3283
  %v3713 = vmul.f32 %v2369, %v3288
  %v3714 = vmul.f32 %v2370, %v3293
  %v3715 = vmul.f32 %v2371, %v3298
  %v3716 = vmul.f32 %v2372, %v3303
  %v3717 = vmul.f32 %v2373, %v3308
  %v3718 = vmul.f32 %v2374, %v3313
  %v3719 = vmul.f32 %v2375, %v3318
  %v3720 = vmul.f32 %v2376, %v3323
  %v3721 = vmul.f32 %v2377, %v3328
  %v3722 = vmul.f32 %v2378, %v3333
  %v3723 = vmul.f32 %v2379, %v3338
  %v3724 = vmul.f32 %v2380, %v3343
  %v3725 = vmul.f32 %v2381, %v3348
  %v3726 = vmul.f32 %v2382, %v3353
  %v3727 = vmul.f32 %v2383, %v3358
  %v3728 = vmul.f32 %v2384, %v3363
  %v3729 = vmul.f32 %v2385, %v3368
  %v3730 = vmul.f32 %v2386, %v3373
  %v3731 = vmul.f32 %v2387, %v3378
  %v3732 = vmul.f32 %v2388, %v3383
  %v3733 = vmul.f32 %v2389, %v3388
  %v3734 = vmul.f32 %v2390, %v3393
  %v3735 = vmul.f32 %v2391, %v3398
  %v3736 = vmul.f32 %v2392, %v3403
  %v3737 = vmul.f32 %v2393, %v3408
  %v3738 = vmul.f32 %v2394, %v3413
  %v3739 = vmul.f32 %v2395, %v3418
  %v3740 = vmul.f32 %v2396, %v3423
  %v3741 = vmul.f32 %v2397, %v3428
  %v3742 = vmul.f32 %v2398, %v3433
  %v3743 = vmul.f32 %v2399, %v3438
  %v3744 = vmul.f32 %v2400, %v3443
  %v3745 = vmul.f32 %v2401, %v3448
  %v3746 = vmul.f32 %v2402, %v3453
  %v3747 = vmul.f32 %v2403, %v3458
  %v3748 = vmul.f32 %v2404, %v3463
  %v3749 = vmul.f32 %v2405, %v3468
  %v3750 = vmul.f32 %v2406, %v3473
  %v3751 = vmul.f32 %v2407, %v3478
  %v3752 = vmul.f32 %v2408, %v3483
  %v3753 = vmul.f32 %v2409, %v3488
  %v3754 = vmul.f32 %v2410, %v3493
  %v3755 = vmul.f32 %v2411, %v3498
  %v3756 = vmul.f32 %v2412, %v3503
  %v3757 = vmul.f32 %v2413, %v3508
  %v3758 = vmul.f32 %v2414, %v3513
  %v3759 = vmul.f32 %v2415, %v3518
  %v3760 = vmul.f32 %v2416, %v3523
  %v3761 = vmul.f32 %v2417, %v3528
  %v3762 = vmul.f32 %v2418, %v3533
  %v3763 = vmul.f32 %v2419, %v3538
  %v3764 = vmul.f32 %v2420, %v3543
  %v3765 = vmul.f32 %v2421, %v3548
  %v3766 = vmul.f32 %v2422, %v3553
  %v3767 = vmul.f32 %v2423, %v3558
  %v3768 = vmul.f32 %v2424, %v3563
  %v3769 = vmul.f32 %v2425, %v3568
  %v3770 = vmul.f32 %v2426, %v3573
  %v3771 = vmul.f32 %v2427, %v3578
  %vm3772 = vcmask 400384
  %3773 = vst.msk [vmem:[%s4] sm:$0xff] %vm3772, %v3580
  %3774 = vst.msk [vmem:[%s4 + $0x8] sm:$0xff] %vm3772, %v3581
  %3775 = vst.msk [vmem:[%s4 + $0x10] sm:$0xff] %vm3772, %v3582
  %3776 = vst.msk [vmem:[%s4 + $0x18] sm:$0xff] %vm3772, %v3583
  %3777 = vst.msk [vmem:[%s4 + $0x20] sm:$0xff] %vm3772, %v3584
  %3778 = vst.msk [vmem:[%s4 + $0x28] sm:$0xff] %vm3772, %v3585
  %3779 = vst.msk [vmem:[%s4 + $0x30] sm:$0xff] %vm3772, %v3586
  %3780 = vst.msk [vmem:[%s4 + $0x38] sm:$0xff] %vm3772, %v3587
  %3781 = vst.msk [vmem:[%s4 + $0x40] sm:$0xff] %vm3772, %v3588
  %3782 = vst.msk [vmem:[%s4 + $0x48] sm:$0xff] %vm3772, %v3589
  %3783 = vst.msk [vmem:[%s4 + $0x50] sm:$0xff] %vm3772, %v3590
  %3784 = vst.msk [vmem:[%s4 + $0x58] sm:$0xff] %vm3772, %v3591
  %3785 = vst.msk [vmem:[%s4 + $0x60] sm:$0xff] %vm3772, %v3592
  %3786 = vst.msk [vmem:[%s4 + $0x68] sm:$0xff] %vm3772, %v3593
  %3787 = vst.msk [vmem:[%s4 + $0x70] sm:$0xff] %vm3772, %v3594
  %3788 = vst.msk [vmem:[%s4 + $0x78] sm:$0xff] %vm3772, %v3595
  %3789 = vst.msk [vmem:[%s4 + $0x80] sm:$0xff] %vm3772, %v3596
  %3790 = vst.msk [vmem:[%s4 + $0x88] sm:$0xff] %vm3772, %v3597
  %3791 = vst.msk [vmem:[%s4 + $0x90] sm:$0xff] %vm3772, %v3598
  %3792 = vst.msk [vmem:[%s4 + $0x98] sm:$0xff] %vm3772, %v3599
  %3793 = vst.msk [vmem:[%s4 + $0xa0] sm:$0xff] %vm3772, %v3600
  %3794 = vst.msk [vmem:[%s4 + $0xa8] sm:$0xff] %vm3772, %v3601
  %3795 = vst.msk [vmem:[%s4 + $0xb0] sm:$0xff] %vm3772, %v3602
  %3796 = vst.msk [vmem:[%s4 + $0xb8] sm:$0xff] %vm3772, %v3603
  %3797 = vst.msk [vmem:[%s4 + $0xc0] sm:$0xff] %vm3772, %v3604
  %3798 = vst.msk [vmem:[%s4 + $0xc8] sm:$0xff] %vm3772, %v3605
  %3799 = vst.msk [vmem:[%s4 + $0xd0] sm:$0xff] %vm3772, %v3606
  %3800 = vst.msk [vmem:[%s4 + $0xd8] sm:$0xff] %vm3772, %v3607
  %3801 = vst.msk [vmem:[%s4 + $0xe0] sm:$0xff] %vm3772, %v3608
  %3802 = vst.msk [vmem:[%s4 + $0xe8] sm:$0xff] %vm3772, %v3609
  %3803 = vst.msk [vmem:[%s4 + $0xf0] sm:$0xff] %vm3772, %v3610
  %3804 = vst.msk [vmem:[%s4 + $0xf8] sm:$0xff] %vm3772, %v3611
  %3805 = vst.msk [vmem:[%s4 + $0x100] sm:$0xff] %vm3772, %v3612
  %3806 = vst.msk [vmem:[%s4 + $0x108] sm:$0xff] %vm3772, %v3613
  %3807 = vst.msk [vmem:[%s4 + $0x110] sm:$0xff] %vm3772, %v3614
  %3808 = vst.msk [vmem:[%s4 + $0x118] sm:$0xff] %vm3772, %v3615
  %3809 = vst.msk [vmem:[%s4 + $0x120] sm:$0xff] %vm3772, %v3616
  %3810 = vst.msk [vmem:[%s4 + $0x128] sm:$0xff] %vm3772, %v3617
  %3811 = vst.msk [vmem:[%s4 + $0x130] sm:$0xff] %vm3772, %v3618
  %3812 = vst.msk [vmem:[%s4 + $0x138] sm:$0xff] %vm3772, %v3619
  %3813 = vst.msk [vmem:[%s4 + $0x140] sm:$0xff] %vm3772, %v3620
  %3814 = vst.msk [vmem:[%s4 + $0x148] sm:$0xff] %vm3772, %v3621
  %3815 = vst.msk [vmem:[%s4 + $0x150] sm:$0xff] %vm3772, %v3622
  %3816 = vst.msk [vmem:[%s4 + $0x158] sm:$0xff] %vm3772, %v3623
  %3817 = vst.msk [vmem:[%s4 + $0x160] sm:$0xff] %vm3772, %v3624
  %3818 = vst.msk [vmem:[%s4 + $0x168] sm:$0xff] %vm3772, %v3625
  %3819 = vst.msk [vmem:[%s4 + $0x170] sm:$0xff] %vm3772, %v3626
  %3820 = vst.msk [vmem:[%s4 + $0x178] sm:$0xff] %vm3772, %v3627
  %3821 = vst.msk [vmem:[%s4 + $0x180] sm:$0xff] %vm3772, %v3628
  %3822 = vst.msk [vmem:[%s4 + $0x188] sm:$0xff] %vm3772, %v3629
  %3823 = vst.msk [vmem:[%s4 + $0x190] sm:$0xff] %vm3772, %v3630
  %3824 = vst.msk [vmem:[%s4 + $0x198] sm:$0xff] %vm3772, %v3631
  %3825 = vst.msk [vmem:[%s4 + $0x1a0] sm:$0xff] %vm3772, %v3632
  %3826 = vst.msk [vmem:[%s4 + $0x1a8] sm:$0xff] %vm3772, %v3633
  %3827 = vst.msk [vmem:[%s4 + $0x1b0] sm:$0xff] %vm3772, %v3634
  %3828 = vst.msk [vmem:[%s4 + $0x1b8] sm:$0xff] %vm3772, %v3635
  %3829 = vst.msk [vmem:[%s4 + $0x1c0] sm:$0xff] %vm3772, %v3636
  %3830 = vst.msk [vmem:[%s4 + $0x1c8] sm:$0xff] %vm3772, %v3637
  %3831 = vst.msk [vmem:[%s4 + $0x1d0] sm:$0xff] %vm3772, %v3638
  %3832 = vst.msk [vmem:[%s4 + $0x1d8] sm:$0xff] %vm3772, %v3639
  %3833 = vst.msk [vmem:[%s4 + $0x1e0] sm:$0xff] %vm3772, %v3640
  %3834 = vst.msk [vmem:[%s4 + $0x1e8] sm:$0xff] %vm3772, %v3641
  %3835 = vst.msk [vmem:[%s4 + $0x1f0] sm:$0xff] %vm3772, %v3642
  %3836 = vst.msk [vmem:[%s4 + $0x1f8] sm:$0xff] %vm3772, %v3643
  %3837 = vst.msk [vmem:[%s4 + $0x200] sm:$0xff] %vm3772, %v3644
  %3838 = vst.msk [vmem:[%s4 + $0x208] sm:$0xff] %vm3772, %v3645
  %3839 = vst.msk [vmem:[%s4 + $0x210] sm:$0xff] %vm3772, %v3646
  %3840 = vst.msk [vmem:[%s4 + $0x218] sm:$0xff] %vm3772, %v3647
  %3841 = vst.msk [vmem:[%s4 + $0x220] sm:$0xff] %vm3772, %v3648
  %3842 = vst.msk [vmem:[%s4 + $0x228] sm:$0xff] %vm3772, %v3649
  %3843 = vst.msk [vmem:[%s4 + $0x230] sm:$0xff] %vm3772, %v3650
  %3844 = vst.msk [vmem:[%s4 + $0x238] sm:$0xff] %vm3772, %v3651
  %3845 = vst.msk [vmem:[%s4 + $0x240] sm:$0xff] %vm3772, %v3652
  %3846 = vst.msk [vmem:[%s4 + $0x248] sm:$0xff] %vm3772, %v3653
  %3847 = vst.msk [vmem:[%s4 + $0x250] sm:$0xff] %vm3772, %v3654
  %3848 = vst.msk [vmem:[%s4 + $0x258] sm:$0xff] %vm3772, %v3655
  %3849 = vst.msk [vmem:[%s4 + $0x260] sm:$0xff] %vm3772, %v3656
  %3850 = vst.msk [vmem:[%s4 + $0x268] sm:$0xff] %vm3772, %v3657
  %3851 = vst.msk [vmem:[%s4 + $0x270] sm:$0xff] %vm3772, %v3658
  %3852 = vst.msk [vmem:[%s4 + $0x278] sm:$0xff] %vm3772, %v3659
  %3853 = vst.msk [vmem:[%s4 + $0x280] sm:$0xff] %vm3772, %v3660
  %3854 = vst.msk [vmem:[%s4 + $0x288] sm:$0xff] %vm3772, %v3661
  %3855 = vst.msk [vmem:[%s4 + $0x290] sm:$0xff] %vm3772, %v3662
  %3856 = vst.msk [vmem:[%s4 + $0x298] sm:$0xff] %vm3772, %v3663
  %3857 = vst.msk [vmem:[%s4 + $0x2a0] sm:$0xff] %vm3772, %v3664
  %3858 = vst.msk [vmem:[%s4 + $0x2a8] sm:$0xff] %vm3772, %v3665
  %3859 = vst.msk [vmem:[%s4 + $0x2b0] sm:$0xff] %vm3772, %v3666
  %3860 = vst.msk [vmem:[%s4 + $0x2b8] sm:$0xff] %vm3772, %v3667
  %3861 = vst.msk [vmem:[%s4 + $0x2c0] sm:$0xff] %vm3772, %v3668
  %3862 = vst.msk [vmem:[%s4 + $0x2c8] sm:$0xff] %vm3772, %v3669
  %3863 = vst.msk [vmem:[%s4 + $0x2d0] sm:$0xff] %vm3772, %v3670
  %3864 = vst.msk [vmem:[%s4 + $0x2d8] sm:$0xff] %vm3772, %v3671
  %3865 = vst.msk [vmem:[%s4 + $0x2e0] sm:$0xff] %vm3772, %v3672
  %3866 = vst.msk [vmem:[%s4 + $0x2e8] sm:$0xff] %vm3772, %v3673
  %3867 = vst.msk [vmem:[%s4 + $0x2f0] sm:$0xff] %vm3772, %v3674
  %3868 = vst.msk [vmem:[%s4 + $0x2f8] sm:$0xff] %vm3772, %v3675
  %3869 = vst.msk [vmem:[%s4 + $0x300] sm:$0xff] %vm3772, %v3676
  %3870 = vst.msk [vmem:[%s4 + $0x308] sm:$0xff] %vm3772, %v3677
  %3871 = vst.msk [vmem:[%s4 + $0x310] sm:$0xff] %vm3772, %v3678
  %3872 = vst.msk [vmem:[%s4 + $0x318] sm:$0xff] %vm3772, %v3679
  %3873 = vst.msk [vmem:[%s4 + $0x320] sm:$0xff] %vm3772, %v3680
  %3874 = vst.msk [vmem:[%s4 + $0x328] sm:$0xff] %vm3772, %v3681
  %3875 = vst.msk [vmem:[%s4 + $0x330] sm:$0xff] %vm3772, %v3682
  %3876 = vst.msk [vmem:[%s4 + $0x338] sm:$0xff] %vm3772, %v3683
  %3877 = vst.msk [vmem:[%s4 + $0x340] sm:$0xff] %vm3772, %v3684
  %3878 = vst.msk [vmem:[%s4 + $0x348] sm:$0xff] %vm3772, %v3685
  %3879 = vst.msk [vmem:[%s4 + $0x350] sm:$0xff] %vm3772, %v3686
  %3880 = vst.msk [vmem:[%s4 + $0x358] sm:$0xff] %vm3772, %v3687
  %3881 = vst.msk [vmem:[%s4 + $0x360] sm:$0xff] %vm3772, %v3688
  %3882 = vst.msk [vmem:[%s4 + $0x368] sm:$0xff] %vm3772, %v3689
  %3883 = vst.msk [vmem:[%s4 + $0x370] sm:$0xff] %vm3772, %v3690
  %3884 = vst.msk [vmem:[%s4 + $0x378] sm:$0xff] %vm3772, %v3691
  %3885 = vst.msk [vmem:[%s4 + $0x380] sm:$0xff] %vm3772, %v3692
  %3886 = vst.msk [vmem:[%s4 + $0x388] sm:$0xff] %vm3772, %v3693
  %3887 = vst.msk [vmem:[%s4 + $0x390] sm:$0xff] %vm3772, %v3694
  %3888 = vst.msk [vmem:[%s4 + $0x398] sm:$0xff] %vm3772, %v3695
  %3889 = vst.msk [vmem:[%s4 + $0x3a0] sm:$0xff] %vm3772, %v3696
  %3890 = vst.msk [vmem:[%s4 + $0x3a8] sm:$0xff] %vm3772, %v3697
  %3891 = vst.msk [vmem:[%s4 + $0x3b0] sm:$0xff] %vm3772, %v3698
  %3892 = vst.msk [vmem:[%s4 + $0x3b8] sm:$0xff] %vm3772, %v3699
  %3893 = vst.msk [vmem:[%s4 + $0x3c0] sm:$0xff] %vm3772, %v3700
  %3894 = vst.msk [vmem:[%s4 + $0x3c8] sm:$0xff] %vm3772, %v3701
  %3895 = vst.msk [vmem:[%s4 + $0x3d0] sm:$0xff] %vm3772, %v3702
  %3896 = vst.msk [vmem:[%s4 + $0x3d8] sm:$0xff] %vm3772, %v3703
  %3897 = vst.msk [vmem:[%s4 + $0x3e0] sm:$0xff] %vm3772, %v3704
  %3898 = vst.msk [vmem:[%s4 + $0x3e8] sm:$0xff] %vm3772, %v3705
  %3899 = vst.msk [vmem:[%s4 + $0x3f0] sm:$0xff] %vm3772, %v3706
  %3900 = vst.msk [vmem:[%s4 + $0x3f8] sm:$0xff] %vm3772, %v3707
  %3901 = vst.msk [vmem:[%s4 + $0x400] sm:$0xff] %vm3772, %v3708
  %3902 = vst.msk [vmem:[%s4 + $0x408] sm:$0xff] %vm3772, %v3709
  %3903 = vst.msk [vmem:[%s4 + $0x410] sm:$0xff] %vm3772, %v3710
  %3904 = vst.msk [vmem:[%s4 + $0x418] sm:$0xff] %vm3772, %v3711
  %3905 = vst.msk [vmem:[%s4 + $0x420] sm:$0xff] %vm3772, %v3712
  %3906 = vst.msk [vmem:[%s4 + $0x428] sm:$0xff] %vm3772, %v3713
  %3907 = vst.msk [vmem:[%s4 + $0x430] sm:$0xff] %vm3772, %v3714
  %3908 = vst.msk [vmem:[%s4 + $0x438] sm:$0xff] %vm3772, %v3715
  %3909 = vst.msk [vmem:[%s4 + $0x440] sm:$0xff] %vm3772, %v3716
  %3910 = vst.msk [vmem:[%s4 + $0x448] sm:$0xff] %vm3772, %v3717
  %3911 = vst.msk [vmem:[%s4 + $0x450] sm:$0xff] %vm3772, %v3718
  %3912 = vst.msk [vmem:[%s4 + $0x458] sm:$0xff] %vm3772, %v3719
  %3913 = vst.msk [vmem:[%s4 + $0x460] sm:$0xff] %vm3772, %v3720
  %3914 = vst.msk [vmem:[%s4 + $0x468] sm:$0xff] %vm3772, %v3721
  %3915 = vst.msk [vmem:[%s4 + $0x470] sm:$0xff] %vm3772, %v3722
  %3916 = vst.msk [vmem:[%s4 + $0x478] sm:$0xff] %vm3772, %v3723
  %3917 = vst.msk [vmem:[%s4 + $0x480] sm:$0xff] %vm3772, %v3724
  %3918 = vst.msk [vmem:[%s4 + $0x488] sm:$0xff] %vm3772, %v3725
  %3919 = vst.msk [vmem:[%s4 + $0x490] sm:$0xff] %vm3772, %v3726
  %3920 = vst.msk [vmem:[%s4 + $0x498] sm:$0xff] %vm3772, %v3727
  %3921 = vst.msk [vmem:[%s4 + $0x4a0] sm:$0xff] %vm3772, %v3728
  %3922 = vst.msk [vmem:[%s4 + $0x4a8] sm:$0xff] %vm3772, %v3729
  %3923 = vst.msk [vmem:[%s4 + $0x4b0] sm:$0xff] %vm3772, %v3730
  %3924 = vst.msk [vmem:[%s4 + $0x4b8] sm:$0xff] %vm3772, %v3731
  %3925 = vst.msk [vmem:[%s4 + $0x4c0] sm:$0xff] %vm3772, %v3732
  %3926 = vst.msk [vmem:[%s4 + $0x4c8] sm:$0xff] %vm3772, %v3733
  %3927 = vst.msk [vmem:[%s4 + $0x4d0] sm:$0xff] %vm3772, %v3734
  %3928 = vst.msk [vmem:[%s4 + $0x4d8] sm:$0xff] %vm3772, %v3735
  %3929 = vst.msk [vmem:[%s4 + $0x4e0] sm:$0xff] %vm3772, %v3736
  %3930 = vst.msk [vmem:[%s4 + $0x4e8] sm:$0xff] %vm3772, %v3737
  %3931 = vst.msk [vmem:[%s4 + $0x4f0] sm:$0xff] %vm3772, %v3738
  %3932 = vst.msk [vmem:[%s4 + $0x4f8] sm:$0xff] %vm3772, %v3739
  %3933 = vst.msk [vmem:[%s4 + $0x500] sm:$0xff] %vm3772, %v3740
  %3934 = vst.msk [vmem:[%s4 + $0x508] sm:$0xff] %vm3772, %v3741
  %3935 = vst.msk [vmem:[%s4 + $0x510] sm:$0xff] %vm3772, %v3742
  %3936 = vst.msk [vmem:[%s4 + $0x518] sm:$0xff] %vm3772, %v3743
  %3937 = vst.msk [vmem:[%s4 + $0x520] sm:$0xff] %vm3772, %v3744
  %3938 = vst.msk [vmem:[%s4 + $0x528] sm:$0xff] %vm3772, %v3745
  %3939 = vst.msk [vmem:[%s4 + $0x530] sm:$0xff] %vm3772, %v3746
  %3940 = vst.msk [vmem:[%s4 + $0x538] sm:$0xff] %vm3772, %v3747
  %3941 = vst.msk [vmem:[%s4 + $0x540] sm:$0xff] %vm3772, %v3748
  %3942 = vst.msk [vmem:[%s4 + $0x548] sm:$0xff] %vm3772, %v3749
  %3943 = vst.msk [vmem:[%s4 + $0x550] sm:$0xff] %vm3772, %v3750
  %3944 = vst.msk [vmem:[%s4 + $0x558] sm:$0xff] %vm3772, %v3751
  %3945 = vst.msk [vmem:[%s4 + $0x560] sm:$0xff] %vm3772, %v3752
  %3946 = vst.msk [vmem:[%s4 + $0x568] sm:$0xff] %vm3772, %v3753
  %3947 = vst.msk [vmem:[%s4 + $0x570] sm:$0xff] %vm3772, %v3754
  %3948 = vst.msk [vmem:[%s4 + $0x578] sm:$0xff] %vm3772, %v3755
  %3949 = vst.msk [vmem:[%s4 + $0x580] sm:$0xff] %vm3772, %v3756
  %3950 = vst.msk [vmem:[%s4 + $0x588] sm:$0xff] %vm3772, %v3757
  %3951 = vst.msk [vmem:[%s4 + $0x590] sm:$0xff] %vm3772, %v3758
  %3952 = vst.msk [vmem:[%s4 + $0x598] sm:$0xff] %vm3772, %v3759
  %3953 = vst.msk [vmem:[%s4 + $0x5a0] sm:$0xff] %vm3772, %v3760
  %3954 = vst.msk [vmem:[%s4 + $0x5a8] sm:$0xff] %vm3772, %v3761
  %3955 = vst.msk [vmem:[%s4 + $0x5b0] sm:$0xff] %vm3772, %v3762
  %3956 = vst.msk [vmem:[%s4 + $0x5b8] sm:$0xff] %vm3772, %v3763
  %3957 = vst.msk [vmem:[%s4 + $0x5c0] sm:$0xff] %vm3772, %v3764
  %3958 = vst.msk [vmem:[%s4 + $0x5c8] sm:$0xff] %vm3772, %v3765
  %3959 = vst.msk [vmem:[%s4 + $0x5d0] sm:$0xff] %vm3772, %v3766
  %3960 = vst.msk [vmem:[%s4 + $0x5d8] sm:$0xff] %vm3772, %v3767
  %3961 = vst.msk [vmem:[%s4 + $0x5e0] sm:$0xff] %vm3772, %v3768
  %3962 = vst.msk [vmem:[%s4 + $0x5e8] sm:$0xff] %vm3772, %v3769
  %3963 = vst.msk [vmem:[%s4 + $0x5f0] sm:$0xff] %vm3772, %v3770
  %3964 = vst.msk [vmem:[%s4 + $0x5f8] sm:$0xff] %vm3772, %v3771
  // Predicated region
  $region18: #{tpu_custom_call.1} parent=0 // pred_check
    _
  $region19: #{tpu_custom_call.1} parent=0 // pred_check_branch
    %3966 = sbr.rel (0) target = $region21
  $region20: #{tpu_custom_call.1} parent=0 // pred_region
    _
  $region21: #{tpu_custom_call.1} parent=0 // pred_fallthru
    _
  // Predicated region
  $region22: #{tpu_custom_call.1} parent=0 // pred_check
    _
  $region23: #{tpu_custom_call.1} parent=0 // pred_check_branch
    %3968 = sbr.rel (0) target = $region25
  $region24: #{tpu_custom_call.1} parent=0 // pred_region
    _
  $region25: #{tpu_custom_call.1} parent=0 // pred_fallthru
    _

</llo_original>
